<compile_context>
chip_gen: v6e
topology: v6e:2x2x1
jax: 0.10.0
libtpu: 0.0.40
codegen_flags: <defaults>
</compile_context>

<pallas_src>
import functools

import jax
import jax.numpy as jnp
from jax import lax
from jax.experimental import pallas as pl
from jax.experimental.pallas import tpu as pltpu


EPS = 1e-5
_VMEM_LIMIT = 32 * 1024 * 1024           # explicit budget, safe on v5e/v6e/v7x


# --------------------------------- kernels -----------------------------------
def _conv3x3_im2col_kernel(x_ref, scale_ref, shift_ref, w_ref, b_ref,
                           y_ref, stats_ref, *, H, W, relu_in):
    """Per-image fused:  (optional BN-affine + ReLU of the input) ->
    3x3 / stride-1 / pad-1 conv as a single K=9*Cp matmul (bf16 x bf16 -> f32)
    -> + bias.  Also writes per-image partial BN statistics [sum, sum-of-sq]."""
    Cp = x_ref.shape[-1]
    M = H * W

    x = x_ref[0]                                     # (M, Cp) f32, lane-dense
    x = x * scale_ref[...] + shift_ref[...]          # BN affine of previous layer
    if relu_in:
        x = jnp.maximum(x, 0.0)

    # Spatially padded activation built as an in-register value: only the four
    # 1-wide border strips are zeros (no full scratch buffer, no full zeroing).
    xs = x.reshape(H, W, Cp)
    zrow = jnp.zeros((1, W, Cp), jnp.float32)
    xs = jnp.concatenate([zrow, xs, zrow], axis=0)               # (H+2, W, Cp)
    zcol = jnp.zeros((H + 2, 1, Cp), jnp.float32)
    xs = jnp.concatenate([zcol, xs, zcol], axis=1)               # (H+2, W+2, Cp)

    # im2col: 9 shifted taps concatenated along the lane axis -> K = 9*Cp,
    # then a single MXU matmul with bf16 operands and f32 accumulation.
    taps = [xs[kh:kh + H, kw:kw + W, :] for kh in range(3) for kw in range(3)]
    patches = jnp.concatenate(taps, axis=-1).reshape(M, 9 * Cp)
    y = jnp.dot(patches.astype(jnp.bfloat16), w_ref[...],
                preferred_element_type=jnp.float32)
    y = y + b_ref[...]                                            # (M, Cp) f32

    y_ref[0] = y                                                  # lane-dense store
    s = jnp.sum(y, axis=0, keepdims=True)                         # one-pass stats
    ss = jnp.sum(y * y, axis=0, keepdims=True)
    stats_ref[0] = jnp.concatenate([s, ss], axis=0)               # (2, Cp)


def _bn_residual_relu_kernel(y_ref, scale_ref, shift_ref, idn_ref, out_ref):
    """Per-image epilogue: BN2 affine + residual add + final ReLU."""
    out_ref[0] = jnp.maximum(
        y_ref[0] * scale_ref[...] + shift_ref[...] + idn_ref[0], 0.0)


# ----------------------------- pallas_call builders ---------------------------
def _make_conv_call(N, M, Cp, H, W, relu_in):
    row = pl.BlockSpec((1, Cp), lambda n: (0, 0))
    img = pl.BlockSpec((1, M, Cp), lambda n: (n, 0, 0))
    return pl.pallas_call(
        functools.partial(_conv3x3_im2col_kernel, H=H, W=W, relu_in=relu_in),
        grid=(N,),
        in_specs=[img,                                            # x / y_prev
                  row, row,                                       # scale, shift
                  pl.BlockSpec((9 * Cp, Cp), lambda n: (0, 0)),   # weights (bf16)
                  row],                                           # bias
        out_specs=(img,                                           # pre-BN output
                   pl.BlockSpec((1, 2, Cp), lambda n: (n, 0, 0))),  # partial stats
        out_shape=(jax.ShapeDtypeStruct((N, M, Cp), jnp.float32),
                   jax.ShapeDtypeStruct((N, 2, Cp), jnp.float32)),
        compiler_params=pltpu.CompilerParams(
            dimension_semantics=("parallel",),
            vmem_limit_bytes=_VMEM_LIMIT),
    )


def _make_epilogue_call(N, M, Cp):
    row = pl.BlockSpec((1, Cp), lambda n: (0, 0))
    img = pl.BlockSpec((1, M, Cp), lambda n: (n, 0, 0))
    return pl.pallas_call(
        _bn_residual_relu_kernel,
        grid=(N,),
        in_specs=[img, row, row, img],
        out_specs=img,
        out_shape=jax.ShapeDtypeStruct((N, M, Cp), jnp.float32),
        compiler_params=pltpu.CompilerParams(
            dimension_semantics=("parallel",),
            vmem_limit_bytes=_VMEM_LIMIT),
    )


# ------------------------------ per-channel glue ------------------------------
def _bn_scale_shift(stats, count, gamma_p, beta_p):
    """Reduce per-image partial [sum, sumsq] -> per-channel scale/shift (tiny)."""
    s = jnp.sum(stats[:, 0, :], axis=0)
    ss = jnp.sum(stats[:, 1, :], axis=0)
    mean = s / count
    var = ss / count - mean * mean                 # one-pass biased variance
    inv = lax.rsqrt(var + EPS)
    scale = gamma_p[0] * inv
    shift = beta_p[0] - mean * scale
    return scale.reshape(1, -1), shift.reshape(1, -1)


# --------------------------------- wrapper ------------------------------------
def block_forward(x_nchw, params):
    """Pallas forward of Block (stride=1, spatial=False, downsample=None).

    x_nchw: (N, C, H, W) float32 (PyTorch layout).  Returns (N, C, H, W)."""
    w1, b1, g1, bt1, w2, b2, g2, bt2 = params
    N, C, H, W = x_nchw.shape
    Cp = max(128, ((C + 127) // 128) * 128)        # lane-dense channel padding
    M = H * W

    # NCHW -> (N, H*W, Cp) channel-padded f32 (lane-dense layout, layout glue).
    x_nhwc = jnp.transpose(x_nchw, (0, 2, 3, 1)).astype(jnp.float32)
    x_l = jnp.pad(x_nhwc, ((0, 0), (0, 0), (0, 0), (0, Cp - C))).reshape(N, M, Cp)

    def prep_w(w):
        # PyTorch (Cout, Cin, 3, 3) -> (3, 3, Cin, Cout) -> pad to Cp -> (9*Cp, Cp) bf16.
        wk = jnp.transpose(w, (2, 3, 1, 0)).astype(jnp.float32)
        wk = jnp.pad(wk, ((0, 0), (0, 0), (0, Cp - C), (0, Cp - C)))
        return wk.reshape(9 * Cp, Cp).astype(jnp.bfloat16)

    def prep_v(v):
        return jnp.pad(v.astype(jnp.float32), (0, Cp - C)).reshape(1, Cp)

    ones = jnp.ones((1, Cp), jnp.float32)
    zeros = jnp.zeros((1, Cp), jnp.float32)

    conv1 = _make_conv_call(N, M, Cp, H, W, relu_in=False)
    conv2 = _make_conv_call(N, M, Cp, H, W, relu_in=True)
    epilogue = _make_epilogue_call(N, M, Cp)

    # conv1 (+bias) and per-image BN1 partial stats.
    y1, st1 = conv1(x_l, ones, zeros, prep_w(w1), prep_v(b1))
    sc1, sh1 = _bn_scale_shift(st1, N * M, prep_v(g1), prep_v(bt1))
    # BN1 + ReLU fused into conv2's prologue; conv2 (+bias) and BN2 partial stats.
    y2, st2 = conv2(y1, sc1, sh1, prep_w(w2), prep_v(b2))
    sc2, sh2 = _bn_scale_shift(st2, N * M, prep_v(g2), prep_v(bt2))
    # BN2 + residual add + ReLU.
    out = epilogue(y2, sc2, sh2, x_l)

    out = out.reshape(N, H, W, Cp)[..., :C]
    return jnp.transpose(out, (0, 3, 1, 2))


# -------------------- pure-JAX references (for verification) ------------------
def _conv3x3_ref(x, w, b, operand_dtype):
    xc = x.astype(operand_dtype).astype(jnp.float32)
    wc = w.astype(operand_dtype).astype(jnp.float32)
    y = lax.conv_general_dilated(
        xc, wc, window_strides=(1, 1), padding=((1, 1), (1, 1)),
        dimension_numbers=("NCHW", "OIHW", "NCHW"),
        precision=lax.Precision.HIGHEST)
    return y + b.reshape(1, -1, 1, 1)


def _bn_ref(x, g, bt):
    mean = jnp.mean(x, axis=(0, 2, 3), keepdims=True)
    var = jnp.mean((x - mean) ** 2, axis=(0, 2, 3), keepdims=True)
    return (x - mean) * lax.rsqrt(var + EPS) * g.reshape(1, -1, 1, 1) \
        + bt.reshape(1, -1, 1, 1)


def block_ref(x, params, operand_dtype=jnp.float32):
    w1, b1, g1, bt1, w2, b2, g2, bt2 = params
    identity = x
    out = _conv3x3_ref(x, w1, b1, operand_dtype)
    out = jnp.maximum(_bn_ref(out, g1, bt1), 0.0)
    out = _conv3x3_ref(out, w2, b2, operand_dtype)
    out = _bn_ref(out, g2, bt2)
    return jnp.maximum(out + identity, 0.0)


# ------------------------------------------------------------------------------
if __name__ == "__main__":
    N, C, H, W = 2, 8, 16, 16   # in_channels == out_channels (downsample=None)

    key = jax.random.PRNGKey(0)
    ks = jax.random.split(key, 5)
    x = jax.random.normal(ks[0], (N, C, H, W), dtype=jnp.float32)

    # Deterministic synthetic parameters (PyTorch shapes).
    w1 = 0.1 * jax.random.normal(ks[1], (C, C, 3, 3), dtype=jnp.float32)
    b1 = 0.05 * jax.random.normal(ks[2], (C,), dtype=jnp.float32)
    w2 = 0.1 * jax.random.normal(ks[3], (C, C, 3, 3), dtype=jnp.float32)
    b2 = 0.05 * jax.random.normal(ks[4], (C,), dtype=jnp.float32)
    g1 = jnp.linspace(0.9, 1.1, C, dtype=jnp.float32)
    bt1 = jnp.linspace(-0.1, 0.1, C, dtype=jnp.float32)
    g2 = jnp.linspace(1.05, 0.95, C, dtype=jnp.float32)
    bt2 = jnp.linspace(0.1, -0.1, C, dtype=jnp.float32)
    params = (w1, b1, g1, bt1, w2, b2, g2, bt2)

    y = jax.block_until_ready(jax.jit(block_forward)(x, params))
    assert y.shape == (N, C, H, W)

    # Exact-structure check: reference with conv operands rounded to bf16
    # (matches the kernel's bf16-operand / f32-accumulate MXU path).
    y_match = block_ref(x, params, operand_dtype=jnp.bfloat16)
    assert jnp.allclose(y, y_match, atol=5e-3, rtol=5e-3), \
        f"matched-ref max abs err {jnp.max(jnp.abs(y - y_match))}"

    # Sanity check vs. the full-f32 reference (bf16 conv operands -> looser tol).
    y_f32 = block_ref(x, params, operand_dtype=jnp.float32)
    assert jnp.allclose(y, y_f32, atol=5e-2, rtol=5e-2), \
        f"f32-ref max abs err {jnp.max(jnp.abs(y - y_f32))}"

    print("KERNEL_OK")
</pallas_src>

<mosaic_0001>
module attributes {stable_mosaic.version = 11 : i64} {
  func.func @_conv3x3_im2col_kernel(%arg0: i32, %arg1: memref<1x256x128xf32, #tpu.memory_space<vmem>>, %arg2: memref<1x128xf32, #tpu.memory_space<vmem>>, %arg3: memref<1x128xf32, #tpu.memory_space<vmem>>, %arg4: memref<1152x128xbf16, #tpu.memory_space<vmem>>, %arg5: memref<1x128xf32, #tpu.memory_space<vmem>>, %arg6: memref<1x256x128xf32, #tpu.memory_space<vmem>>, %arg7: memref<1x2x128xf32, #tpu.memory_space<vmem>>) attributes {dimension_semantics = [#tpu.dimension_semantics<parallel>], iteration_bounds = array<i64: 2>, scalar_prefetch = 0 : i64, scratch_operands = 0 : i64, tpu.core_type = #tpu.core_type<tc>, window_params = [{transform_indices = @transform_0, window_bounds = array<i64: 1, 256, 128>}, {pipeline_mode = #tpu.pipeline_mode<synchronous>, transform_indices = @transform_1, window_bounds = array<i64: 1, 128>}, {pipeline_mode = #tpu.pipeline_mode<synchronous>, transform_indices = @transform_2, window_bounds = array<i64: 1, 128>}, {pipeline_mode = #tpu.pipeline_mode<synchronous>, transform_indices = @transform_3, window_bounds = array<i64: 1152, 128>}, {pipeline_mode = #tpu.pipeline_mode<synchronous>, transform_indices = @transform_4, window_bounds = array<i64: 1, 128>}, {transform_indices = @transform_5, window_bounds = array<i64: 1, 256, 128>}, {transform_indices = @transform_6, window_bounds = array<i64: 1, 2, 128>}]} {
    %c0 = arith.constant 0 : index
    %c0_0 = arith.constant 0 : index
    %c0_1 = arith.constant 0 : index
    %0 = vector.load %arg1[%c0, %c0_0, %c0_1] : memref<1x256x128xf32, #tpu.memory_space<vmem>>, vector<1x256x128xf32>
    %1 = vector.shape_cast %0 : vector<1x256x128xf32> to vector<256x128xf32>
    %c0_2 = arith.constant 0 : index
    %c0_3 = arith.constant 0 : index
    %2 = vector.load %arg2[%c0_2, %c0_3] : memref<1x128xf32, #tpu.memory_space<vmem>>, vector<1x128xf32>
    %3 = vector.broadcast %2 : vector<1x128xf32> to vector<256x128xf32>
    %4 = arith.mulf %1, %3 : vector<256x128xf32>
    %c0_4 = arith.constant 0 : index
    %c0_5 = arith.constant 0 : index
    %5 = vector.load %arg3[%c0_4, %c0_5] : memref<1x128xf32, #tpu.memory_space<vmem>>, vector<1x128xf32>
    %6 = vector.broadcast %5 : vector<1x128xf32> to vector<256x128xf32>
    %7 = arith.addf %4, %6 : vector<256x128xf32>
    %cst = arith.constant 0.000000e+00 : f32
    %8 = vector.broadcast %cst : f32 to vector<256x128xf32>
    %9 = arith.maximumf %7, %8 : vector<256x128xf32>
    %10 = vector.shape_cast %9 : vector<256x128xf32> to vector<16x16x128xf32>
    %cst_6 = arith.constant 0.000000e+00 : f32
    %11 = vector.broadcast %cst_6 : f32 to vector<1x16x128xf32>
    %12 = tpu.concatenate %11, %10, %11 in 0 : vector<1x16x128xf32>, vector<16x16x128xf32>, vector<1x16x128xf32> -> vector<18x16x128xf32>
    %cst_7 = arith.constant 0.000000e+00 : f32
    %13 = vector.broadcast %cst_7 : f32 to vector<18x1x128xf32>
    %14 = tpu.concatenate %13, %12, %13 in 1 : vector<18x1x128xf32>, vector<18x16x128xf32>, vector<18x1x128xf32> -> vector<18x18x128xf32>
    %15 = vector.extract_strided_slice %14 {offsets = [0, 0, 0], sizes = [16, 16, 128], strides = [1, 1, 1]} : vector<18x18x128xf32> to vector<16x16x128xf32>
    %16 = vector.extract_strided_slice %14 {offsets = [0, 1, 0], sizes = [16, 16, 128], strides = [1, 1, 1]} : vector<18x18x128xf32> to vector<16x16x128xf32>
    %17 = vector.extract_strided_slice %14 {offsets = [0, 2, 0], sizes = [16, 16, 128], strides = [1, 1, 1]} : vector<18x18x128xf32> to vector<16x16x128xf32>
    %18 = vector.extract_strided_slice %14 {offsets = [1, 0, 0], sizes = [16, 16, 128], strides = [1, 1, 1]} : vector<18x18x128xf32> to vector<16x16x128xf32>
    %19 = vector.extract_strided_slice %14 {offsets = [1, 1, 0], sizes = [16, 16, 128], strides = [1, 1, 1]} : vector<18x18x128xf32> to vector<16x16x128xf32>
    %20 = vector.extract_strided_slice %14 {offsets = [1, 2, 0], sizes = [16, 16, 128], strides = [1, 1, 1]} : vector<18x18x128xf32> to vector<16x16x128xf32>
    %21 = vector.extract_strided_slice %14 {offsets = [2, 0, 0], sizes = [16, 16, 128], strides = [1, 1, 1]} : vector<18x18x128xf32> to vector<16x16x128xf32>
    %22 = vector.extract_strided_slice %14 {offsets = [2, 1, 0], sizes = [16, 16, 128], strides = [1, 1, 1]} : vector<18x18x128xf32> to vector<16x16x128xf32>
    %23 = vector.extract_strided_slice %14 {offsets = [2, 2, 0], sizes = [16, 16, 128], strides = [1, 1, 1]} : vector<18x18x128xf32> to vector<16x16x128xf32>
    %24 = tpu.concatenate %15, %16, %17, %18, %19, %20, %21, %22, %23 in 2 : vector<16x16x128xf32>, vector<16x16x128xf32>, vector<16x16x128xf32>, vector<16x16x128xf32>, vector<16x16x128xf32>, vector<16x16x128xf32>, vector<16x16x128xf32>, vector<16x16x128xf32>, vector<16x16x128xf32> -> vector<16x16x1152xf32>
    %25 = vector.shape_cast %24 : vector<16x16x1152xf32> to vector<256x1152xf32>
    %26 = arith.truncf %25 : vector<256x1152xf32> to vector<256x1152xbf16>
    %c0_8 = arith.constant 0 : index
    %c0_9 = arith.constant 0 : index
    %27 = vector.load %arg4[%c0_8, %c0_9] : memref<1152x128xbf16, #tpu.memory_space<vmem>>, vector<1152x128xbf16>
    %cst_10 = arith.constant dense<0.000000e+00> : vector<256x128xf32>
    %28 = tpu.matmul %26, %27, %cst_10 {dimension_numbers = #tpu.dot_dimension_numbers<[1], [0], [0], [1], [0, 0, 1, 1], [], []>} : vector<256x1152xbf16>, vector<1152x128xbf16>, vector<256x128xf32> -> vector<256x128xf32>
    %c0_11 = arith.constant 0 : index
    %c0_12 = arith.constant 0 : index
    %29 = vector.load %arg5[%c0_11, %c0_12] : memref<1x128xf32, #tpu.memory_space<vmem>>, vector<1x128xf32>
    %30 = vector.broadcast %29 : vector<1x128xf32> to vector<256x128xf32>
    %31 = arith.addf %28, %30 : vector<256x128xf32>
    %c0_13 = arith.constant 0 : index
    %c0_14 = arith.constant 0 : index
    %c0_15 = arith.constant 0 : index
    %32 = vector.load %arg6[%c0_13, %c0_14, %c0_15] : memref<1x256x128xf32, #tpu.memory_space<vmem>>, vector<1x256x128xf32>
    %33 = vector.shape_cast %32 : vector<1x256x128xf32> to vector<256x128xf32>
    %34 = vector.shape_cast %31 : vector<256x128xf32> to vector<1x256x128xf32>
    tpu.vector_store %arg6[%c0_13, %c0_14, %c0_15], %34 {strides = array<i32>} : memref<1x256x128xf32, #tpu.memory_space<vmem>>, vector<1x256x128xf32>,
    %cst_16 = arith.constant dense<0.000000e+00> : vector<128xf32>
    %35 = vector.multi_reduction <add>, %31, %cst_16 [0] : vector<256x128xf32> to vector<128xf32>
    %36 = vector.shape_cast %35 : vector<128xf32> to vector<1x128xf32>
    %37 = arith.mulf %31, %31 : vector<256x128xf32>
    %cst_17 = arith.constant dense<0.000000e+00> : vector<128xf32>
    %38 = vector.multi_reduction <add>, %37, %cst_17 [0] : vector<256x128xf32> to vector<128xf32>
    %39 = vector.shape_cast %38 : vector<128xf32> to vector<1x128xf32>
    %40 = tpu.concatenate %36, %39 in 0 : vector<1x128xf32>, vector<1x128xf32> -> vector<2x128xf32>
    %c0_18 = arith.constant 0 : index
    %c0_19 = arith.constant 0 : index
    %c0_20 = arith.constant 0 : index
    %41 = vector.load %arg7[%c0_18, %c0_19, %c0_20] : memref<1x2x128xf32, #tpu.memory_space<vmem>>, vector<1x2x128xf32>
    %42 = vector.shape_cast %41 : vector<1x2x128xf32> to vector<2x128xf32>
    %43 = vector.shape_cast %40 : vector<2x128xf32> to vector<1x2x128xf32>
    tpu.vector_store %arg7[%c0_18, %c0_19, %c0_20], %43 {strides = array<i32>} : memref<1x2x128xf32, #tpu.memory_space<vmem>>, vector<1x2x128xf32>,
    return
  }
  func.func @transform_0(%arg0: i32) -> (i32, i32, i32) {
    %c0_i32 = arith.constant 0 : i32
    %c0_i32_0 = arith.constant 0 : i32
    %c0_i32_1 = arith.constant 0 : i32
    return %arg0, %c0_i32, %c0_i32_0 : i32, i32, i32
  }
  func.func @transform_1(%arg0: i32) -> (i32, i32) {
    %c0_i32 = arith.constant 0 : i32
    %c0_i32_0 = arith.constant 0 : i32
    %c0_i32_1 = arith.constant 0 : i32
    return %c0_i32, %c0_i32_0 : i32, i32
  }
  func.func @transform_2(%arg0: i32) -> (i32, i32) {
    %c0_i32 = arith.constant 0 : i32
    %c0_i32_0 = arith.constant 0 : i32
    %c0_i32_1 = arith.constant 0 : i32
    return %c0_i32, %c0_i32_0 : i32, i32
  }
  func.func @transform_3(%arg0: i32) -> (i32, i32) {
    %c0_i32 = arith.constant 0 : i32
    %c0_i32_0 = arith.constant 0 : i32
    %c0_i32_1 = arith.constant 0 : i32
    return %c0_i32, %c0_i32_0 : i32, i32
  }
  func.func @transform_4(%arg0: i32) -> (i32, i32) {
    %c0_i32 = arith.constant 0 : i32
    %c0_i32_0 = arith.constant 0 : i32
    %c0_i32_1 = arith.constant 0 : i32
    return %c0_i32, %c0_i32_0 : i32, i32
  }
  func.func @transform_5(%arg0: i32) -> (i32, i32, i32) {
    %c0_i32 = arith.constant 0 : i32
    %c0_i32_0 = arith.constant 0 : i32
    %c0_i32_1 = arith.constant 0 : i32
    return %arg0, %c0_i32, %c0_i32_0 : i32, i32, i32
  }
  func.func @transform_6(%arg0: i32) -> (i32, i32, i32) {
    %c0_i32 = arith.constant 0 : i32
    %c0_i32_0 = arith.constant 0 : i32
    %c0_i32_1 = arith.constant 0 : i32
    return %arg0, %c0_i32, %c0_i32_0 : i32, i32, i32
  }
}

module attributes {stable_mosaic.version = 11 : i64} {
  func.func @_conv3x3_im2col_kernel(%arg0: i32, %arg1: memref<1x256x128xf32, #tpu.memory_space<vmem>>, %arg2: memref<1x128xf32, #tpu.memory_space<vmem>>, %arg3: memref<1x128xf32, #tpu.memory_space<vmem>>, %arg4: memref<1152x128xbf16, #tpu.memory_space<vmem>>, %arg5: memref<1x128xf32, #tpu.memory_space<vmem>>, %arg6: memref<1x256x128xf32, #tpu.memory_space<vmem>>, %arg7: memref<1x2x128xf32, #tpu.memory_space<vmem>>) attributes {dimension_semantics = [#tpu.dimension_semantics<parallel>], iteration_bounds = array<i64: 2>, scalar_prefetch = 0 : i64, scratch_operands = 0 : i64, tpu.core_type = #tpu.core_type<tc>, window_params = [{transform_indices = @transform_0, window_bounds = array<i64: 1, 256, 128>}, {pipeline_mode = #tpu.pipeline_mode<synchronous>, transform_indices = @transform_1, window_bounds = array<i64: 1, 128>}, {pipeline_mode = #tpu.pipeline_mode<synchronous>, transform_indices = @transform_2, window_bounds = array<i64: 1, 128>}, {pipeline_mode = #tpu.pipeline_mode<synchronous>, transform_indices = @transform_3, window_bounds = array<i64: 1152, 128>}, {pipeline_mode = #tpu.pipeline_mode<synchronous>, transform_indices = @transform_4, window_bounds = array<i64: 1, 128>}, {transform_indices = @transform_5, window_bounds = array<i64: 1, 256, 128>}, {transform_indices = @transform_6, window_bounds = array<i64: 1, 2, 128>}]} {
    %c0 = arith.constant 0 : index
    %c0_0 = arith.constant 0 : index
    %c0_1 = arith.constant 0 : index
    %0 = vector.load %arg1[%c0, %c0_0, %c0_1] : memref<1x256x128xf32, #tpu.memory_space<vmem>>, vector<1x256x128xf32>
    %1 = vector.shape_cast %0 : vector<1x256x128xf32> to vector<256x128xf32>
    %c0_2 = arith.constant 0 : index
    %c0_3 = arith.constant 0 : index
    %2 = vector.load %arg2[%c0_2, %c0_3] : memref<1x128xf32, #tpu.memory_space<vmem>>, vector<1x128xf32>
    %3 = vector.broadcast %2 : vector<1x128xf32> to vector<256x128xf32>
    %4 = arith.mulf %1, %3 : vector<256x128xf32>
    %c0_4 = arith.constant 0 : index
    %c0_5 = arith.constant 0 : index
    %5 = vector.load %arg3[%c0_4, %c0_5] : memref<1x128xf32, #tpu.memory_space<vmem>>, vector<1x128xf32>
    %6 = vector.broadcast %5 : vector<1x128xf32> to vector<256x128xf32>
    %7 = arith.addf %4, %6 : vector<256x128xf32>
    %8 = vector.shape_cast %7 : vector<256x128xf32> to vector<16x16x128xf32>
    %cst = arith.constant 0.000000e+00 : f32
    %9 = vector.broadcast %cst : f32 to vector<1x16x128xf32>
    %10 = tpu.concatenate %9, %8, %9 in 0 : vector<1x16x128xf32>, vector<16x16x128xf32>, vector<1x16x128xf32> -> vector<18x16x128xf32>
    %cst_6 = arith.constant 0.000000e+00 : f32
    %11 = vector.broadcast %cst_6 : f32 to vector<18x1x128xf32>
    %12 = tpu.concatenate %11, %10, %11 in 1 : vector<18x1x128xf32>, vector<18x16x128xf32>, vector<18x1x128xf32> -> vector<18x18x128xf32>
    %13 = vector.extract_strided_slice %12 {offsets = [0, 0, 0], sizes = [16, 16, 128], strides = [1, 1, 1]} : vector<18x18x128xf32> to vector<16x16x128xf32>
    %14 = vector.extract_strided_slice %12 {offsets = [0, 1, 0], sizes = [16, 16, 128], strides = [1, 1, 1]} : vector<18x18x128xf32> to vector<16x16x128xf32>
    %15 = vector.extract_strided_slice %12 {offsets = [0, 2, 0], sizes = [16, 16, 128], strides = [1, 1, 1]} : vector<18x18x128xf32> to vector<16x16x128xf32>
    %16 = vector.extract_strided_slice %12 {offsets = [1, 0, 0], sizes = [16, 16, 128], strides = [1, 1, 1]} : vector<18x18x128xf32> to vector<16x16x128xf32>
    %17 = vector.extract_strided_slice %12 {offsets = [1, 1, 0], sizes = [16, 16, 128], strides = [1, 1, 1]} : vector<18x18x128xf32> to vector<16x16x128xf32>
    %18 = vector.extract_strided_slice %12 {offsets = [1, 2, 0], sizes = [16, 16, 128], strides = [1, 1, 1]} : vector<18x18x128xf32> to vector<16x16x128xf32>
    %19 = vector.extract_strided_slice %12 {offsets = [2, 0, 0], sizes = [16, 16, 128], strides = [1, 1, 1]} : vector<18x18x128xf32> to vector<16x16x128xf32>
    %20 = vector.extract_strided_slice %12 {offsets = [2, 1, 0], sizes = [16, 16, 128], strides = [1, 1, 1]} : vector<18x18x128xf32> to vector<16x16x128xf32>
    %21 = vector.extract_strided_slice %12 {offsets = [2, 2, 0], sizes = [16, 16, 128], strides = [1, 1, 1]} : vector<18x18x128xf32> to vector<16x16x128xf32>
    %22 = tpu.concatenate %13, %14, %15, %16, %17, %18, %19, %20, %21 in 2 : vector<16x16x128xf32>, vector<16x16x128xf32>, vector<16x16x128xf32>, vector<16x16x128xf32>, vector<16x16x128xf32>, vector<16x16x128xf32>, vector<16x16x128xf32>, vector<16x16x128xf32>, vector<16x16x128xf32> -> vector<16x16x1152xf32>
    %23 = vector.shape_cast %22 : vector<16x16x1152xf32> to vector<256x1152xf32>
    %24 = arith.truncf %23 : vector<256x1152xf32> to vector<256x1152xbf16>
    %c0_7 = arith.constant 0 : index
    %c0_8 = arith.constant 0 : index
    %25 = vector.load %arg4[%c0_7, %c0_8] : memref<1152x128xbf16, #tpu.memory_space<vmem>>, vector<1152x128xbf16>
    %cst_9 = arith.constant dense<0.000000e+00> : vector<256x128xf32>
    %26 = tpu.matmul %24, %25, %cst_9 {dimension_numbers = #tpu.dot_dimension_numbers<[1], [0], [0], [1], [0, 0, 1, 1], [], []>} : vector<256x1152xbf16>, vector<1152x128xbf16>, vector<256x128xf32> -> vector<256x128xf32>
    %c0_10 = arith.constant 0 : index
    %c0_11 = arith.constant 0 : index
    %27 = vector.load %arg5[%c0_10, %c0_11] : memref<1x128xf32, #tpu.memory_space<vmem>>, vector<1x128xf32>
    %28 = vector.broadcast %27 : vector<1x128xf32> to vector<256x128xf32>
    %29 = arith.addf %26, %28 : vector<256x128xf32>
    %c0_12 = arith.constant 0 : index
    %c0_13 = arith.constant 0 : index
    %c0_14 = arith.constant 0 : index
    %30 = vector.load %arg6[%c0_12, %c0_13, %c0_14] : memref<1x256x128xf32, #tpu.memory_space<vmem>>, vector<1x256x128xf32>
    %31 = vector.shape_cast %30 : vector<1x256x128xf32> to vector<256x128xf32>
    %32 = vector.shape_cast %29 : vector<256x128xf32> to vector<1x256x128xf32>
    tpu.vector_store %arg6[%c0_12, %c0_13, %c0_14], %32 {strides = array<i32>} : memref<1x256x128xf32, #tpu.memory_space<vmem>>, vector<1x256x128xf32>,
    %cst_15 = arith.constant dense<0.000000e+00> : vector<128xf32>
    %33 = vector.multi_reduction <add>, %29, %cst_15 [0] : vector<256x128xf32> to vector<128xf32>
    %34 = vector.shape_cast %33 : vector<128xf32> to vector<1x128xf32>
    %35 = arith.mulf %29, %29 : vector<256x128xf32>
    %cst_16 = arith.constant dense<0.000000e+00> : vector<128xf32>
    %36 = vector.multi_reduction <add>, %35, %cst_16 [0] : vector<256x128xf32> to vector<128xf32>
    %37 = vector.shape_cast %36 : vector<128xf32> to vector<1x128xf32>
    %38 = tpu.concatenate %34, %37 in 0 : vector<1x128xf32>, vector<1x128xf32> -> vector<2x128xf32>
    %c0_17 = arith.constant 0 : index
    %c0_18 = arith.constant 0 : index
    %c0_19 = arith.constant 0 : index
    %39 = vector.load %arg7[%c0_17, %c0_18, %c0_19] : memref<1x2x128xf32, #tpu.memory_space<vmem>>, vector<1x2x128xf32>
    %40 = vector.shape_cast %39 : vector<1x2x128xf32> to vector<2x128xf32>
    %41 = vector.shape_cast %38 : vector<2x128xf32> to vector<1x2x128xf32>
    tpu.vector_store %arg7[%c0_17, %c0_18, %c0_19], %41 {strides = array<i32>} : memref<1x2x128xf32, #tpu.memory_space<vmem>>, vector<1x2x128xf32>,
    return
  }
  func.func @transform_0(%arg0: i32) -> (i32, i32, i32) {
    %c0_i32 = arith.constant 0 : i32
    %c0_i32_0 = arith.constant 0 : i32
    %c0_i32_1 = arith.constant 0 : i32
    return %arg0, %c0_i32, %c0_i32_0 : i32, i32, i32
  }
  func.func @transform_1(%arg0: i32) -> (i32, i32) {
    %c0_i32 = arith.constant 0 : i32
    %c0_i32_0 = arith.constant 0 : i32
    %c0_i32_1 = arith.constant 0 : i32
    return %c0_i32, %c0_i32_0 : i32, i32
  }
  func.func @transform_2(%arg0: i32) -> (i32, i32) {
    %c0_i32 = arith.constant 0 : i32
    %c0_i32_0 = arith.constant 0 : i32
    %c0_i32_1 = arith.constant 0 : i32
    return %c0_i32, %c0_i32_0 : i32, i32
  }
  func.func @transform_3(%arg0: i32) -> (i32, i32) {
    %c0_i32 = arith.constant 0 : i32
    %c0_i32_0 = arith.constant 0 : i32
    %c0_i32_1 = arith.constant 0 : i32
    return %c0_i32, %c0_i32_0 : i32, i32
  }
  func.func @transform_4(%arg0: i32) -> (i32, i32) {
    %c0_i32 = arith.constant 0 : i32
    %c0_i32_0 = arith.constant 0 : i32
    %c0_i32_1 = arith.constant 0 : i32
    return %c0_i32, %c0_i32_0 : i32, i32
  }
  func.func @transform_5(%arg0: i32) -> (i32, i32, i32) {
    %c0_i32 = arith.constant 0 : i32
    %c0_i32_0 = arith.constant 0 : i32
    %c0_i32_1 = arith.constant 0 : i32
    return %arg0, %c0_i32, %c0_i32_0 : i32, i32, i32
  }
  func.func @transform_6(%arg0: i32) -> (i32, i32, i32) {
    %c0_i32 = arith.constant 0 : i32
    %c0_i32_0 = arith.constant 0 : i32
    %c0_i32_1 = arith.constant 0 : i32
    return %arg0, %c0_i32, %c0_i32_0 : i32, i32, i32
  }
}

module attributes {stable_mosaic.version = 11 : i64} {
  func.func @_bn_residual_relu_kernel(%arg0: i32, %arg1: memref<1x256x128xf32, #tpu.memory_space<vmem>>, %arg2: memref<1x128xf32, #tpu.memory_space<vmem>>, %arg3: memref<1x128xf32, #tpu.memory_space<vmem>>, %arg4: memref<1x256x128xf32, #tpu.memory_space<vmem>>, %arg5: memref<1x256x128xf32, #tpu.memory_space<vmem>>) attributes {dimension_semantics = [#tpu.dimension_semantics<parallel>], iteration_bounds = array<i64: 2>, scalar_prefetch = 0 : i64, scratch_operands = 0 : i64, tpu.core_type = #tpu.core_type<tc>, window_params = [{transform_indices = @transform_0, window_bounds = array<i64: 1, 256, 128>}, {pipeline_mode = #tpu.pipeline_mode<synchronous>, transform_indices = @transform_1, window_bounds = array<i64: 1, 128>}, {pipeline_mode = #tpu.pipeline_mode<synchronous>, transform_indices = @transform_2, window_bounds = array<i64: 1, 128>}, {transform_indices = @transform_3, window_bounds = array<i64: 1, 256, 128>}, {transform_indices = @transform_4, window_bounds = array<i64: 1, 256, 128>}]} {
    %c0 = arith.constant 0 : index
    %c0_0 = arith.constant 0 : index
    %c0_1 = arith.constant 0 : index
    %0 = vector.load %arg1[%c0, %c0_0, %c0_1] : memref<1x256x128xf32, #tpu.memory_space<vmem>>, vector<1x256x128xf32>
    %1 = vector.shape_cast %0 : vector<1x256x128xf32> to vector<256x128xf32>
    %c0_2 = arith.constant 0 : index
    %c0_3 = arith.constant 0 : index
    %2 = vector.load %arg2[%c0_2, %c0_3] : memref<1x128xf32, #tpu.memory_space<vmem>>, vector<1x128xf32>
    %3 = vector.broadcast %2 : vector<1x128xf32> to vector<256x128xf32>
    %4 = arith.mulf %1, %3 : vector<256x128xf32>
    %c0_4 = arith.constant 0 : index
    %c0_5 = arith.constant 0 : index
    %5 = vector.load %arg3[%c0_4, %c0_5] : memref<1x128xf32, #tpu.memory_space<vmem>>, vector<1x128xf32>
    %6 = vector.broadcast %5 : vector<1x128xf32> to vector<256x128xf32>
    %7 = arith.addf %4, %6 : vector<256x128xf32>
    %c0_6 = arith.constant 0 : index
    %c0_7 = arith.constant 0 : index
    %c0_8 = arith.constant 0 : index
    %8 = vector.load %arg4[%c0_6, %c0_7, %c0_8] : memref<1x256x128xf32, #tpu.memory_space<vmem>>, vector<1x256x128xf32>
    %9 = vector.shape_cast %8 : vector<1x256x128xf32> to vector<256x128xf32>
    %10 = arith.addf %7, %9 : vector<256x128xf32>
    %cst = arith.constant 0.000000e+00 : f32
    %11 = vector.broadcast %cst : f32 to vector<256x128xf32>
    %12 = arith.maximumf %10, %11 : vector<256x128xf32>
    %c0_9 = arith.constant 0 : index
    %c0_10 = arith.constant 0 : index
    %c0_11 = arith.constant 0 : index
    %13 = vector.load %arg5[%c0_9, %c0_10, %c0_11] : memref<1x256x128xf32, #tpu.memory_space<vmem>>, vector<1x256x128xf32>
    %14 = vector.shape_cast %13 : vector<1x256x128xf32> to vector<256x128xf32>
    %15 = vector.shape_cast %12 : vector<256x128xf32> to vector<1x256x128xf32>
    tpu.vector_store %arg5[%c0_9, %c0_10, %c0_11], %15 {strides = array<i32>} : memref<1x256x128xf32, #tpu.memory_space<vmem>>, vector<1x256x128xf32>,
    return
  }
  func.func @transform_0(%arg0: i32) -> (i32, i32, i32) {
    %c0_i32 = arith.constant 0 : i32
    %c0_i32_0 = arith.constant 0 : i32
    %c0_i32_1 = arith.constant 0 : i32
    return %arg0, %c0_i32, %c0_i32_0 : i32, i32, i32
  }
  func.func @transform_1(%arg0: i32) -> (i32, i32) {
    %c0_i32 = arith.constant 0 : i32
    %c0_i32_0 = arith.constant 0 : i32
    %c0_i32_1 = arith.constant 0 : i32
    return %c0_i32, %c0_i32_0 : i32, i32
  }
  func.func @transform_2(%arg0: i32) -> (i32, i32) {
    %c0_i32 = arith.constant 0 : i32
    %c0_i32_0 = arith.constant 0 : i32
    %c0_i32_1 = arith.constant 0 : i32
    return %c0_i32, %c0_i32_0 : i32, i32
  }
  func.func @transform_3(%arg0: i32) -> (i32, i32, i32) {
    %c0_i32 = arith.constant 0 : i32
    %c0_i32_0 = arith.constant 0 : i32
    %c0_i32_1 = arith.constant 0 : i32
    return %arg0, %c0_i32, %c0_i32_0 : i32, i32, i32
  }
  func.func @transform_4(%arg0: i32) -> (i32, i32, i32) {
    %c0_i32 = arith.constant 0 : i32
    %c0_i32_0 = arith.constant 0 : i32
    %c0_i32_1 = arith.constant 0 : i32
    return %arg0, %c0_i32, %c0_i32_0 : i32, i32, i32
  }
}

</mosaic_0001>

<llo_original>
// kernel: block_forward.5
$region0: #{block_forward.5}
  #allocation0 [shape = 'u32[]', space=smem, size = 0x4, offset = 0x4, fixed_abs, tag = 'smem constant byte address 0x4 - core index']
  #allocation1 [shape = 'u32[144,128]{1,0:T(1,128)}', space=vmem, size = 0x12000, scoped, tag = 'internal scratch']
  %s0 = inlined_call_operand.vmem [shape: f32[2,256,128], index: 0, kind: input, shape index: {}]
  %s1 = inlined_call_operand.vmem [shape: f32[1,128], index: 1, kind: input, shape index: {}]
  %s2 = inlined_call_operand.vmem [shape: f32[1,128], index: 2, kind: input, shape index: {}]
  %s3 = inlined_call_operand.vmem [shape: f32[2,256,128], index: 3, kind: input, shape index: {}]
  %s4 = inlined_call_operand.vmem [shape: f32[2,256,128], index: 4, kind: output, shape index: {}]
  %s5 = sld [smem:[#allocation0]]
  $region49: #{block_forward.5} parent=0
    _
  %s7 = ssub.s32 1, %s5
  %s8 = scalar_select 0, %s7, %s5
  loop: start=0, step=1, limit=4
  $region2: #{block_forward.5} parent=0 // loop_pre_header
    _
  $region3: #{block_forward.5} parent=0 // loop_header
    %s10 = sphi 0, %s14
    %p11 = scmp.ge.s32.totalorder %s10, 4
    %s20 = sphi 0, %s22
    %s23 = sphi 0, %s20
    %s24 = sphi 0, %s23
    %s40 = sphi 0, %s24
    %s44 = sphi 0, %s44
    %s46 = sphi 0, %s44
    %s47 = sphi 0, %s46
    %s61 = sphi 0, %s47
    %s65 = sphi 0, %s65
    %s67 = sphi 0, %s65
    %s68 = sphi 0, %s67
    %s82 = sphi 0, %s68
    %s88 = sphi 0, %s90
    %s91 = sphi 0, %s88
    %s92 = sphi 0, %s91
    %s108 = sphi 0, %s92
    %s114 = sphi 0, %s116
    %s117 = sphi 0, %s114
    %s118 = sphi 0, %s117
    %s134 = sphi 0, %s118
  $region4: #{block_forward.5} parent=0 // loop_header_branch
    %13 = sbr.rel (%p11) target = $region8
  $region5: #{block_forward.5} parent=0 // loop_body
    %s15 = ssub.s32 %s10, 1
    %s16 = ssub.s32 %s10, 2
    %s17 = sadd.s32 %s10, 1
    %s18 = ssub.s32 %s10, %s17
    %p19 = scmp.eq.s32.totalorder %s18, 0
    %s21 = sadd.s32 %s20, 1
    %s22 = scalar_select %p19, %s20, %s21
    %p25 = pneg %p19
    %p26 = scmp.eq.s32.totalorder %s10, 1
    %p27 = por %p25, %p26
    %p28 = scmp.ne.s32.totalorder %s20, %s23
    %p29 = scmp.eq.s32.totalorder %s10, 0
    %p30 = por %p28, %p29
    %p31 = scmp.ne.s32.totalorder %s20, %s23
    %p32 = scmp.eq.s32.totalorder %s15, 1
    %p33 = por %p31, %p32
    %p34 = scmp.ne.s32.totalorder %s23, %s24
    %p35 = scmp.eq.s32.totalorder %s15, 0
    %p36 = por %p34, %p35
    %p37 = scmp.ne.s32.totalorder %s23, %s24
    %p38 = scmp.eq.s32.totalorder %s16, 1
    %p39 = por %p37, %p38
    %p41 = scmp.ne.s32.totalorder %s24, %s40
    %p42 = scmp.eq.s32.totalorder %s16, 0
    %p43 = por %p41, %p42
    %s45 = sadd.s32 %s44, 1
    %p48 = scmp.eq.s32.totalorder %s10, 1
    %p49 = scmp.ne.s32.totalorder %s44, %s46
    %p50 = scmp.eq.s32.totalorder %s10, 0
    %p51 = por %p49, %p50
    %p52 = scmp.ne.s32.totalorder %s44, %s46
    %p53 = scmp.eq.s32.totalorder %s15, 1
    %p54 = por %p52, %p53
    %p55 = scmp.ne.s32.totalorder %s46, %s47
    %p56 = scmp.eq.s32.totalorder %s15, 0
    %p57 = por %p55, %p56
    %p58 = scmp.ne.s32.totalorder %s46, %s47
    %p59 = scmp.eq.s32.totalorder %s16, 1
    %p60 = por %p58, %p59
    %p62 = scmp.ne.s32.totalorder %s47, %s61
    %p63 = scmp.eq.s32.totalorder %s16, 0
    %p64 = por %p62, %p63
    %s66 = sadd.s32 %s65, 1
    %p69 = scmp.eq.s32.totalorder %s10, 1
    %p70 = scmp.ne.s32.totalorder %s65, %s67
    %p71 = scmp.eq.s32.totalorder %s10, 0
    %p72 = por %p70, %p71
    %p73 = scmp.ne.s32.totalorder %s65, %s67
    %p74 = scmp.eq.s32.totalorder %s15, 1
    %p75 = por %p73, %p74
    %p76 = scmp.ne.s32.totalorder %s67, %s68
    %p77 = scmp.eq.s32.totalorder %s15, 0
    %p78 = por %p76, %p77
    %p79 = scmp.ne.s32.totalorder %s67, %s68
    %p80 = scmp.eq.s32.totalorder %s16, 1
    %p81 = por %p79, %p80
    %p83 = scmp.ne.s32.totalorder %s68, %s82
    %p84 = scmp.eq.s32.totalorder %s16, 0
    %p85 = por %p83, %p84
    %s86 = ssub.s32 %s10, %s17
    %p87 = scmp.eq.s32.totalorder %s86, 0
    %s89 = sadd.s32 %s88, 1
    %s90 = scalar_select %p87, %s88, %s89
    %p93 = pneg %p87
    %p94 = scmp.eq.s32.totalorder %s10, 1
    %p95 = por %p93, %p94
    %p96 = scmp.ne.s32.totalorder %s88, %s91
    %p97 = scmp.eq.s32.totalorder %s10, 0
    %p98 = por %p96, %p97
    %p99 = scmp.ne.s32.totalorder %s88, %s91
    %p100 = scmp.eq.s32.totalorder %s15, 1
    %p101 = por %p99, %p100
    %p102 = scmp.ne.s32.totalorder %s91, %s92
    %p103 = scmp.eq.s32.totalorder %s15, 0
    %p104 = por %p102, %p103
    %p105 = scmp.ne.s32.totalorder %s91, %s92
    %p106 = scmp.eq.s32.totalorder %s16, 1
    %p107 = por %p105, %p106
    %p109 = scmp.ne.s32.totalorder %s92, %s108
    %p110 = scmp.eq.s32.totalorder %s16, 0
    %p111 = por %p109, %p110
    %s112 = ssub.s32 %s10, %s17
    %p113 = scmp.eq.s32.totalorder %s112, 0
    %s115 = sadd.s32 %s114, 1
    %s116 = scalar_select %p113, %s114, %s115
    %p119 = pneg %p113
    %p120 = scmp.eq.s32.totalorder %s10, 1
    %p121 = por %p119, %p120
    %p122 = scmp.ne.s32.totalorder %s114, %s117
    %p123 = scmp.eq.s32.totalorder %s10, 0
    %p124 = por %p122, %p123
    %p125 = scmp.ne.s32.totalorder %s114, %s117
    %p126 = scmp.eq.s32.totalorder %s15, 1
    %p127 = por %p125, %p126
    %p128 = scmp.ne.s32.totalorder %s117, %s118
    %p129 = scmp.eq.s32.totalorder %s15, 0
    %p130 = por %p128, %p129
    %p131 = scmp.ne.s32.totalorder %s117, %s118
    %p132 = scmp.eq.s32.totalorder %s16, 1
    %p133 = por %p131, %p132
    %p135 = scmp.ne.s32.totalorder %s118, %s134
    %p136 = scmp.eq.s32.totalorder %s16, 0
    %p137 = por %p135, %p136
    %p138 = scmp.le.s32.totalorder 1, %s10
    %p139 = scmp.lt.s32.totalorder %s10, 3
    %p140 = pnand %p138, %p139
    %p141 = pneg %p140
    // Predicated region
    $region9: #{block_forward.5} parent=5 // pred_check
      _
    $region10: #{block_forward.5} parent=5 // pred_check_branch
      %143 = sbr.rel (%p140) target = $region12
    $region11: #{block_forward.5} parent=5 // pred_region
      %s144 = ssub.s32 %s10, 1
      // Predicated region
      $region13: #{block_forward.5} parent=11 // pred_check
        %p145 = pneg %p57
      $region14: #{block_forward.5} parent=11 // pred_check_branch
        %147 = sbr.rel (%p145) target = $region16
      $region15: #{block_forward.5} parent=11 // pred_region
        _
      $region16: #{block_forward.5} parent=11 // pred_fallthru
        _
      // Predicated region
      $region17: #{block_forward.5} parent=11 // pred_check
        %p148 = pneg %p78
      $region18: #{block_forward.5} parent=11 // pred_check_branch
        %150 = sbr.rel (%p148) target = $region20
      $region19: #{block_forward.5} parent=11 // pred_region
        _
      $region20: #{block_forward.5} parent=11 // pred_fallthru
        _
    $region12: #{block_forward.5} parent=5 // pred_fallthru
      _
    %p151 = scmp.lt.s32.totalorder %s10, 2
    // Predicated region
    $region21: #{block_forward.5} parent=5 // pred_check
      %p152 = pneg %p151
    $region22: #{block_forward.5} parent=5 // pred_check_branch
      %154 = sbr.rel (%p152) target = $region24
    $region23: #{block_forward.5} parent=5 // pred_region
      // Predicated region
      $region25: #{block_forward.5} parent=23 // pred_check
        %p155 = pneg %p30
      $region26: #{block_forward.5} parent=23 // pred_check_branch
        %157 = sbr.rel (%p155) target = $region28
      $region27: #{block_forward.5} parent=23 // pred_region
        %p158 = scmp.lt.s32.totalorder %s10, 1
        %s159 = scalar_select %p158, %s10, 1
        %s160 = smul.addr %s159, 32
        %s161 = smul.addr %s160, 8
        %s162 = scalar_lea.vmem %s0, %s161
      $region28: #{block_forward.5} parent=23 // pred_fallthru
        _
      // Predicated region
      $region29: #{block_forward.5} parent=23 // pred_check
        %p163 = pneg %p98
      $region30: #{block_forward.5} parent=23 // pred_check_branch
        %165 = sbr.rel (%p163) target = $region32
      $region31: #{block_forward.5} parent=23 // pred_region
        %p166 = scmp.lt.s32.totalorder %s10, 1
        %s167 = scalar_select %p166, %s10, 1
        %s168 = smul.addr %s167, 32
        %s169 = smul.addr %s168, 8
        %s170 = scalar_lea.vmem %s3, %s169
      $region32: #{block_forward.5} parent=23 // pred_fallthru
        _
    $region24: #{block_forward.5} parent=5 // pred_fallthru
      _
    %p171 = scmp.le.s32.totalorder 1, %s10
    %p172 = scmp.lt.s32.totalorder %s10, 3
    %p173 = pnand %p171, %p172
    %p174 = pneg %p173
    // Predicated region
    $region33: #{block_forward.5} parent=5 // pred_check
      _
    $region34: #{block_forward.5} parent=5 // pred_check_branch
      %176 = sbr.rel (%p173) target = $region36
    $region35: #{block_forward.5} parent=5 // pred_region
      %s177 = ssub.s32 %s10, 1
      %p178 = scmp.lt.s32.totalorder %s15, 1
      %s179 = scalar_select %p178, %s15, 1
      %s180 = smul.addr %s179, 32
      %s181 = smul.addr %s180, 8
      %s182 = scalar_lea.vmem %s0, %s181
      %p183 = pneg %p36
      %p184 = pneg %p33
      %p185 = pneg %p57
      %p186 = pneg %p54
      %p187 = pneg %p78
      %p188 = pneg %p75
      %p189 = scmp.lt.s32.totalorder %s15, 1
      %s190 = scalar_select %p189, %s15, 1
      %s191 = smul.addr %s190, 32
      %s192 = smul.addr %s191, 8
      %s193 = scalar_lea.vmem %s3, %s192
      %p194 = pneg %p104
      %p195 = pneg %p101
      %p196 = pneg %p130
      %p197 = pneg %p127
      %p198 = scmp.lt.s32.totalorder %s15, 1
      %s199 = scalar_select %p198, %s15, 1
      %s200 = smul.addr %s199, 32
      %s201 = smul.addr %s200, 8
      %s202 = scalar_lea.vmem %s4, %s201
      %p203 = scmp.lt.s32.totalorder %s15, 1
      %s204 = scalar_select %p203, %s15, 1
      %s205 = smul.addr %s204, 32
      %s206 = smul.addr %s205, 8
      %s207 = scalar_lea.vmem %s0, %s206
      %p208 = scmp.lt.s32.totalorder %s15, 1
      %s209 = scalar_select %p208, %s15, 1
      %s210 = smul.addr %s209, 32
      %s211 = smul.addr %s210, 8
      %s212 = scalar_lea.vmem %s3, %s211
      %p213 = scmp.lt.s32.totalorder %s15, 1
      %s214 = scalar_select %p213, %s15, 1
      %s215 = smul.addr %s214, 32
      %s216 = smul.addr %s215, 8
      %s217 = scalar_lea.vmem %s4, %s216
      %v218 = vld [vmem:[%s207] sm:$0xff]
      %v219 = vld [vmem:[%s207 + $0x8] sm:$0xff]
      %v220 = vld [vmem:[%s207 + $0x10] sm:$0xff]
      %v221 = vld [vmem:[%s207 + $0x18] sm:$0xff]
      %v222 = vld [vmem:[%s207 + $0x20] sm:$0xff]
      %v223 = vld [vmem:[%s207 + $0x28] sm:$0xff]
      %v224 = vld [vmem:[%s207 + $0x30] sm:$0xff]
      %v225 = vld [vmem:[%s207 + $0x38] sm:$0xff]
      %v226 = vld [vmem:[%s207 + $0x40] sm:$0xff]
      %v227 = vld [vmem:[%s207 + $0x48] sm:$0xff]
      %v228 = vld [vmem:[%s207 + $0x50] sm:$0xff]
      %v229 = vld [vmem:[%s207 + $0x58] sm:$0xff]
      %v230 = vld [vmem:[%s207 + $0x60] sm:$0xff]
      %v231 = vld [vmem:[%s207 + $0x68] sm:$0xff]
      %v232 = vld [vmem:[%s207 + $0x70] sm:$0xff]
      %v233 = vld [vmem:[%s207 + $0x78] sm:$0xff]
      %v234 = vld [vmem:[%s207 + $0x80] sm:$0xff]
      %v235 = vld [vmem:[%s207 + $0x88] sm:$0xff]
      %v236 = vld [vmem:[%s207 + $0x90] sm:$0xff]
      %v237 = vld [vmem:[%s207 + $0x98] sm:$0xff]
      %v238 = vld [vmem:[%s207 + $0xa0] sm:$0xff]
      %v239 = vld [vmem:[%s207 + $0xa8] sm:$0xff]
      %v240 = vld [vmem:[%s207 + $0xb0] sm:$0xff]
      %v241 = vld [vmem:[%s207 + $0xb8] sm:$0xff]
      %v242 = vld [vmem:[%s207 + $0xc0] sm:$0xff]
      %v243 = vld [vmem:[%s207 + $0xc8] sm:$0xff]
      %v244 = vld [vmem:[%s207 + $0xd0] sm:$0xff]
      %v245 = vld [vmem:[%s207 + $0xd8] sm:$0xff]
      %v246 = vld [vmem:[%s207 + $0xe0] sm:$0xff]
      %v247 = vld [vmem:[%s207 + $0xe8] sm:$0xff]
      %v248 = vld [vmem:[%s207 + $0xf0] sm:$0xff]
      %v249 = vld [vmem:[%s207 + $0xf8] sm:$0xff]
      %v250 = vld [vmem:[%s1] sm:$0x1]
      %v252 = vlaneseq
      %v253 = vshrl.u32 %v252, 7
      %v254 = vsub.s32 0, %v253
      %v255 = vrot.slane %v250, %v254
      %v257 = vmul.f32 %v218, %v255
      %v258 = vmul.f32 %v219, %v255
      %v259 = vmul.f32 %v220, %v255
      %v260 = vmul.f32 %v221, %v255
      %v261 = vmul.f32 %v222, %v255
      %v262 = vmul.f32 %v223, %v255
      %v263 = vmul.f32 %v224, %v255
      %v264 = vmul.f32 %v225, %v255
      %v265 = vmul.f32 %v226, %v255
      %v266 = vmul.f32 %v227, %v255
      %v267 = vmul.f32 %v228, %v255
      %v268 = vmul.f32 %v229, %v255
      %v269 = vmul.f32 %v230, %v255
      %v270 = vmul.f32 %v231, %v255
      %v271 = vmul.f32 %v232, %v255
      %v272 = vmul.f32 %v233, %v255
      %v273 = vmul.f32 %v234, %v255
      %v274 = vmul.f32 %v235, %v255
      %v275 = vmul.f32 %v236, %v255
      %v276 = vmul.f32 %v237, %v255
      %v277 = vmul.f32 %v238, %v255
      %v278 = vmul.f32 %v239, %v255
      %v279 = vmul.f32 %v240, %v255
      %v280 = vmul.f32 %v241, %v255
      %v281 = vmul.f32 %v242, %v255
      %v282 = vmul.f32 %v243, %v255
      %v283 = vmul.f32 %v244, %v255
      %v284 = vmul.f32 %v245, %v255
      %v285 = vmul.f32 %v246, %v255
      %v286 = vmul.f32 %v247, %v255
      %v287 = vmul.f32 %v248, %v255
      %v288 = vmul.f32 %v249, %v255
      %v289 = vld [vmem:[%s2] sm:$0x1]
      %v291 = vlaneseq
      %v292 = vshrl.u32 %v291, 7
      %v293 = vsub.s32 0, %v292
      %v294 = vrot.slane %v289, %v293
      %v296 = vadd.f32 %v257, %v294
      %v297 = vadd.f32 %v258, %v294
      %v298 = vadd.f32 %v259, %v294
      %v299 = vadd.f32 %v260, %v294
      %v300 = vadd.f32 %v261, %v294
      %v301 = vadd.f32 %v262, %v294
      %v302 = vadd.f32 %v263, %v294
      %v303 = vadd.f32 %v264, %v294
      %v304 = vadd.f32 %v265, %v294
      %v305 = vadd.f32 %v266, %v294
      %v306 = vadd.f32 %v267, %v294
      %v307 = vadd.f32 %v268, %v294
      %v308 = vadd.f32 %v269, %v294
      %v309 = vadd.f32 %v270, %v294
      %v310 = vadd.f32 %v271, %v294
      %v311 = vadd.f32 %v272, %v294
      %v312 = vadd.f32 %v273, %v294
      %v313 = vadd.f32 %v274, %v294
      %v314 = vadd.f32 %v275, %v294
      %v315 = vadd.f32 %v276, %v294
      %v316 = vadd.f32 %v277, %v294
      %v317 = vadd.f32 %v278, %v294
      %v318 = vadd.f32 %v279, %v294
      %v319 = vadd.f32 %v280, %v294
      %v320 = vadd.f32 %v281, %v294
      %v321 = vadd.f32 %v282, %v294
      %v322 = vadd.f32 %v283, %v294
      %v323 = vadd.f32 %v284, %v294
      %v324 = vadd.f32 %v285, %v294
      %v325 = vadd.f32 %v286, %v294
      %v326 = vadd.f32 %v287, %v294
      %v327 = vadd.f32 %v288, %v294
      %v328 = vld [vmem:[%s212] sm:$0xff]
      %v329 = vld [vmem:[%s212 + $0x8] sm:$0xff]
      %v330 = vld [vmem:[%s212 + $0x10] sm:$0xff]
      %v331 = vld [vmem:[%s212 + $0x18] sm:$0xff]
      %v332 = vld [vmem:[%s212 + $0x20] sm:$0xff]
      %v333 = vld [vmem:[%s212 + $0x28] sm:$0xff]
      %v334 = vld [vmem:[%s212 + $0x30] sm:$0xff]
      %v335 = vld [vmem:[%s212 + $0x38] sm:$0xff]
      %v336 = vld [vmem:[%s212 + $0x40] sm:$0xff]
      %v337 = vld [vmem:[%s212 + $0x48] sm:$0xff]
      %v338 = vld [vmem:[%s212 + $0x50] sm:$0xff]
      %v339 = vld [vmem:[%s212 + $0x58] sm:$0xff]
      %v340 = vld [vmem:[%s212 + $0x60] sm:$0xff]
      %v341 = vld [vmem:[%s212 + $0x68] sm:$0xff]
      %v342 = vld [vmem:[%s212 + $0x70] sm:$0xff]
      %v343 = vld [vmem:[%s212 + $0x78] sm:$0xff]
      %v344 = vld [vmem:[%s212 + $0x80] sm:$0xff]
      %v345 = vld [vmem:[%s212 + $0x88] sm:$0xff]
      %v346 = vld [vmem:[%s212 + $0x90] sm:$0xff]
      %v347 = vld [vmem:[%s212 + $0x98] sm:$0xff]
      %v348 = vld [vmem:[%s212 + $0xa0] sm:$0xff]
      %v349 = vld [vmem:[%s212 + $0xa8] sm:$0xff]
      %v350 = vld [vmem:[%s212 + $0xb0] sm:$0xff]
      %v351 = vld [vmem:[%s212 + $0xb8] sm:$0xff]
      %v352 = vld [vmem:[%s212 + $0xc0] sm:$0xff]
      %v353 = vld [vmem:[%s212 + $0xc8] sm:$0xff]
      %v354 = vld [vmem:[%s212 + $0xd0] sm:$0xff]
      %v355 = vld [vmem:[%s212 + $0xd8] sm:$0xff]
      %v356 = vld [vmem:[%s212 + $0xe0] sm:$0xff]
      %v357 = vld [vmem:[%s212 + $0xe8] sm:$0xff]
      %v358 = vld [vmem:[%s212 + $0xf0] sm:$0xff]
      %v359 = vld [vmem:[%s212 + $0xf8] sm:$0xff]
      %v360 = vadd.f32 %v296, %v328
      %v361 = vadd.f32 %v297, %v329
      %v362 = vadd.f32 %v298, %v330
      %v363 = vadd.f32 %v299, %v331
      %v364 = vadd.f32 %v300, %v332
      %v365 = vadd.f32 %v301, %v333
      %v366 = vadd.f32 %v302, %v334
      %v367 = vadd.f32 %v303, %v335
      %v368 = vadd.f32 %v304, %v336
      %v369 = vadd.f32 %v305, %v337
      %v370 = vadd.f32 %v306, %v338
      %v371 = vadd.f32 %v307, %v339
      %v372 = vadd.f32 %v308, %v340
      %v373 = vadd.f32 %v309, %v341
      %v374 = vadd.f32 %v310, %v342
      %v375 = vadd.f32 %v311, %v343
      %v376 = vadd.f32 %v312, %v344
      %v377 = vadd.f32 %v313, %v345
      %v378 = vadd.f32 %v314, %v346
      %v379 = vadd.f32 %v315, %v347
      %v380 = vadd.f32 %v316, %v348
      %v381 = vadd.f32 %v317, %v349
      %v382 = vadd.f32 %v318, %v350
      %v383 = vadd.f32 %v319, %v351
      %v384 = vadd.f32 %v320, %v352
      %v385 = vadd.f32 %v321, %v353
      %v386 = vadd.f32 %v322, %v354
      %v387 = vadd.f32 %v323, %v355
      %v388 = vadd.f32 %v324, %v356
      %v389 = vadd.f32 %v325, %v357
      %v390 = vadd.f32 %v326, %v358
      %v391 = vadd.f32 %v327, %v359
      %v392 = vmax.f32 %v360, 0.0
      %v393 = vmax.f32 %v361, 0.0
      %v394 = vmax.f32 %v362, 0.0
      %v395 = vmax.f32 %v363, 0.0
      %v396 = vmax.f32 %v364, 0.0
      %v397 = vmax.f32 %v365, 0.0
      %v398 = vmax.f32 %v366, 0.0
      %v399 = vmax.f32 %v367, 0.0
      %v400 = vmax.f32 %v368, 0.0
      %v401 = vmax.f32 %v369, 0.0
      %v402 = vmax.f32 %v370, 0.0
      %v403 = vmax.f32 %v371, 0.0
      %v404 = vmax.f32 %v372, 0.0
      %v405 = vmax.f32 %v373, 0.0
      %v406 = vmax.f32 %v374, 0.0
      %v407 = vmax.f32 %v375, 0.0
      %v408 = vmax.f32 %v376, 0.0
      %v409 = vmax.f32 %v377, 0.0
      %v410 = vmax.f32 %v378, 0.0
      %v411 = vmax.f32 %v379, 0.0
      %v412 = vmax.f32 %v380, 0.0
      %v413 = vmax.f32 %v381, 0.0
      %v414 = vmax.f32 %v382, 0.0
      %v415 = vmax.f32 %v383, 0.0
      %v416 = vmax.f32 %v384, 0.0
      %v417 = vmax.f32 %v385, 0.0
      %v418 = vmax.f32 %v386, 0.0
      %v419 = vmax.f32 %v387, 0.0
      %v420 = vmax.f32 %v388, 0.0
      %v421 = vmax.f32 %v389, 0.0
      %v422 = vmax.f32 %v390, 0.0
      %v423 = vmax.f32 %v391, 0.0
      %424 = vst [vmem:[%s217] sm:$0xff] %v392
      %425 = vst [vmem:[%s217 + $0x8] sm:$0xff] %v393
      %426 = vst [vmem:[%s217 + $0x10] sm:$0xff] %v394
      %427 = vst [vmem:[%s217 + $0x18] sm:$0xff] %v395
      %428 = vst [vmem:[%s217 + $0x20] sm:$0xff] %v396
      %429 = vst [vmem:[%s217 + $0x28] sm:$0xff] %v397
      %430 = vst [vmem:[%s217 + $0x30] sm:$0xff] %v398
      %431 = vst [vmem:[%s217 + $0x38] sm:$0xff] %v399
      %432 = vst [vmem:[%s217 + $0x40] sm:$0xff] %v400
      %433 = vst [vmem:[%s217 + $0x48] sm:$0xff] %v401
      %434 = vst [vmem:[%s217 + $0x50] sm:$0xff] %v402
      %435 = vst [vmem:[%s217 + $0x58] sm:$0xff] %v403
      %436 = vst [vmem:[%s217 + $0x60] sm:$0xff] %v404
      %437 = vst [vmem:[%s217 + $0x68] sm:$0xff] %v405
      %438 = vst [vmem:[%s217 + $0x70] sm:$0xff] %v406
      %439 = vst [vmem:[%s217 + $0x78] sm:$0xff] %v407
      %440 = vst [vmem:[%s217 + $0x80] sm:$0xff] %v408
      %441 = vst [vmem:[%s217 + $0x88] sm:$0xff] %v409
      %442 = vst [vmem:[%s217 + $0x90] sm:$0xff] %v410
      %443 = vst [vmem:[%s217 + $0x98] sm:$0xff] %v411
      %444 = vst [vmem:[%s217 + $0xa0] sm:$0xff] %v412
      %445 = vst [vmem:[%s217 + $0xa8] sm:$0xff] %v413
      %446 = vst [vmem:[%s217 + $0xb0] sm:$0xff] %v414
      %447 = vst [vmem:[%s217 + $0xb8] sm:$0xff] %v415
      %448 = vst [vmem:[%s217 + $0xc0] sm:$0xff] %v416
      %449 = vst [vmem:[%s217 + $0xc8] sm:$0xff] %v417
      %450 = vst [vmem:[%s217 + $0xd0] sm:$0xff] %v418
      %451 = vst [vmem:[%s217 + $0xd8] sm:$0xff] %v419
      %452 = vst [vmem:[%s217 + $0xe0] sm:$0xff] %v420
      %453 = vst [vmem:[%s217 + $0xe8] sm:$0xff] %v421
      %454 = vst [vmem:[%s217 + $0xf0] sm:$0xff] %v422
      %455 = vst [vmem:[%s217 + $0xf8] sm:$0xff] %v423
      %p456 = scmp.lt.s32.totalorder %s15, 1
      %s457 = scalar_select %p456, %s15, 1
      %s458 = smul.addr %s457, 32
      %s459 = smul.addr %s458, 8
      %s460 = scalar_lea.vmem %s4, %s459
      // Predicated region
      $region37: #{block_forward.5} parent=35 // pred_check
        %p461 = pneg %p127
      $region38: #{block_forward.5} parent=35 // pred_check_branch
        %463 = sbr.rel (%p461) target = $region40
      $region39: #{block_forward.5} parent=35 // pred_region
        _
      $region40: #{block_forward.5} parent=35 // pred_fallthru
        _
    $region36: #{block_forward.5} parent=5 // pred_fallthru
      _
    %p464 = scmp.le.s32.totalorder 2, %s10
    // Predicated region
    $region41: #{block_forward.5} parent=5 // pred_check
      %p465 = pneg %p464
    $region42: #{block_forward.5} parent=5 // pred_check_branch
      %467 = sbr.rel (%p465) target = $region44
    $region43: #{block_forward.5} parent=5 // pred_region
      %s468 = ssub.s32 %s10, 2
      // Predicated region
      $region45: #{block_forward.5} parent=43 // pred_check
        %p469 = pneg %p133
      $region46: #{block_forward.5} parent=43 // pred_check_branch
        %471 = sbr.rel (%p469) target = $region48
      $region47: #{block_forward.5} parent=43 // pred_region
        %p472 = scmp.lt.s32.totalorder %s16, 1
        %s473 = scalar_select %p472, %s16, 1
        %s474 = smul.addr %s473, 32
        %s475 = smul.addr %s474, 8
        %s476 = scalar_lea.vmem %s4, %s475
      $region48: #{block_forward.5} parent=43 // pred_fallthru
        _
    $region44: #{block_forward.5} parent=5 // pred_fallthru
      _
  $region6: #{block_forward.5} parent=0 // loop_footer
    %s14 = sadd.s32 1, %s10
  $region7: #{block_forward.5} parent=0 // loop_footer_branch
    %9 = sbr.rel target = $region3
  $region8: #{block_forward.5} parent=0 // loop_exit
    _

// kernel: block_forward.3
$region0: #{block_forward.3}
  #allocation0 [shape = 'u32[]', space=smem, size = 0x4, offset = 0x4, fixed_abs, tag = 'smem constant byte address 0x4 - core index']
  #allocation1 [shape = 'u32[144,128]{1,0:T(1,128)}', space=vmem, size = 0x12000, scoped, tag = 'internal scratch']
  %s0 = inlined_call_operand.vmem [shape: f32[2,256,128], index: 0, kind: input, shape index: {}]
  %s1 = inlined_call_operand.vmem [shape: f32[1,128], index: 1, kind: input, shape index: {}]
  %s2 = inlined_call_operand.vmem [shape: f32[1,128], index: 2, kind: input, shape index: {}]
  %s3 = inlined_call_operand.vmem [shape: bf16[1152,128], index: 3, kind: input, shape index: {}]
  %s4 = inlined_call_operand.vmem [shape: f32[1,128], index: 4, kind: input, shape index: {}]
  %s5 = inlined_call_operand.vmem [shape: f32[2,256,128], index: 5, kind: output, shape index: {0}]
  %s6 = inlined_call_operand.vmem [shape: f32[2,2,128], index: 6, kind: output, shape index: {1}]
  %7 = xla_tuple %s5, %s6
  %s8 = sld [smem:[#allocation0]]
  $region61: #{block_forward.3} parent=0
    _
  %s10 = ssub.s32 1, %s8
  %s11 = scalar_select 0, %s10, %s8
  loop: start=0, step=1, limit=4
  $region2: #{block_forward.3} parent=0 // loop_pre_header
    _
  $region3: #{block_forward.3} parent=0 // loop_header
    %s13 = sphi 0, %s17
    %p14 = scmp.ge.s32.totalorder %s13, 4
    %s23 = sphi 0, %s25
    %s26 = sphi 0, %s23
    %s27 = sphi 0, %s26
    %s43 = sphi 0, %s27
    %s47 = sphi 0, %s47
    %s49 = sphi 0, %s47
    %s50 = sphi 0, %s49
    %s64 = sphi 0, %s50
    %s68 = sphi 0, %s68
    %s70 = sphi 0, %s68
    %s71 = sphi 0, %s70
    %s85 = sphi 0, %s71
    %s89 = sphi 0, %s89
    %s91 = sphi 0, %s89
    %s92 = sphi 0, %s91
    %s106 = sphi 0, %s92
    %s110 = sphi 0, %s110
    %s112 = sphi 0, %s110
    %s113 = sphi 0, %s112
    %s127 = sphi 0, %s113
    %s133 = sphi 0, %s135
    %s136 = sphi 0, %s133
    %s137 = sphi 0, %s136
    %s153 = sphi 0, %s137
    %s159 = sphi 0, %s161
    %s162 = sphi 0, %s159
    %s163 = sphi 0, %s162
    %s179 = sphi 0, %s163
  $region4: #{block_forward.3} parent=0 // loop_header_branch
    %16 = sbr.rel (%p14) target = $region8
  $region5: #{block_forward.3} parent=0 // loop_body
    %s18 = ssub.s32 %s13, 1
    %s19 = ssub.s32 %s13, 2
    %s20 = sadd.s32 %s13, 1
    %s21 = ssub.s32 %s13, %s20
    %p22 = scmp.eq.s32.totalorder %s21, 0
    %s24 = sadd.s32 %s23, 1
    %s25 = scalar_select %p22, %s23, %s24
    %p28 = pneg %p22
    %p29 = scmp.eq.s32.totalorder %s13, 1
    %p30 = por %p28, %p29
    %p31 = scmp.ne.s32.totalorder %s23, %s26
    %p32 = scmp.eq.s32.totalorder %s13, 0
    %p33 = por %p31, %p32
    %p34 = scmp.ne.s32.totalorder %s23, %s26
    %p35 = scmp.eq.s32.totalorder %s18, 1
    %p36 = por %p34, %p35
    %p37 = scmp.ne.s32.totalorder %s26, %s27
    %p38 = scmp.eq.s32.totalorder %s18, 0
    %p39 = por %p37, %p38
    %p40 = scmp.ne.s32.totalorder %s26, %s27
    %p41 = scmp.eq.s32.totalorder %s19, 1
    %p42 = por %p40, %p41
    %p44 = scmp.ne.s32.totalorder %s27, %s43
    %p45 = scmp.eq.s32.totalorder %s19, 0
    %p46 = por %p44, %p45
    %s48 = sadd.s32 %s47, 1
    %p51 = scmp.eq.s32.totalorder %s13, 1
    %p52 = scmp.ne.s32.totalorder %s47, %s49
    %p53 = scmp.eq.s32.totalorder %s13, 0
    %p54 = por %p52, %p53
    %p55 = scmp.ne.s32.totalorder %s47, %s49
    %p56 = scmp.eq.s32.totalorder %s18, 1
    %p57 = por %p55, %p56
    %p58 = scmp.ne.s32.totalorder %s49, %s50
    %p59 = scmp.eq.s32.totalorder %s18, 0
    %p60 = por %p58, %p59
    %p61 = scmp.ne.s32.totalorder %s49, %s50
    %p62 = scmp.eq.s32.totalorder %s19, 1
    %p63 = por %p61, %p62
    %p65 = scmp.ne.s32.totalorder %s50, %s64
    %p66 = scmp.eq.s32.totalorder %s19, 0
    %p67 = por %p65, %p66
    %s69 = sadd.s32 %s68, 1
    %p72 = scmp.eq.s32.totalorder %s13, 1
    %p73 = scmp.ne.s32.totalorder %s68, %s70
    %p74 = scmp.eq.s32.totalorder %s13, 0
    %p75 = por %p73, %p74
    %p76 = scmp.ne.s32.totalorder %s68, %s70
    %p77 = scmp.eq.s32.totalorder %s18, 1
    %p78 = por %p76, %p77
    %p79 = scmp.ne.s32.totalorder %s70, %s71
    %p80 = scmp.eq.s32.totalorder %s18, 0
    %p81 = por %p79, %p80
    %p82 = scmp.ne.s32.totalorder %s70, %s71
    %p83 = scmp.eq.s32.totalorder %s19, 1
    %p84 = por %p82, %p83
    %p86 = scmp.ne.s32.totalorder %s71, %s85
    %p87 = scmp.eq.s32.totalorder %s19, 0
    %p88 = por %p86, %p87
    %s90 = sadd.s32 %s89, 1
    %p93 = scmp.eq.s32.totalorder %s13, 1
    %p94 = scmp.ne.s32.totalorder %s89, %s91
    %p95 = scmp.eq.s32.totalorder %s13, 0
    %p96 = por %p94, %p95
    %p97 = scmp.ne.s32.totalorder %s89, %s91
    %p98 = scmp.eq.s32.totalorder %s18, 1
    %p99 = por %p97, %p98
    %p100 = scmp.ne.s32.totalorder %s91, %s92
    %p101 = scmp.eq.s32.totalorder %s18, 0
    %p102 = por %p100, %p101
    %p103 = scmp.ne.s32.totalorder %s91, %s92
    %p104 = scmp.eq.s32.totalorder %s19, 1
    %p105 = por %p103, %p104
    %p107 = scmp.ne.s32.totalorder %s92, %s106
    %p108 = scmp.eq.s32.totalorder %s19, 0
    %p109 = por %p107, %p108
    %s111 = sadd.s32 %s110, 1
    %p114 = scmp.eq.s32.totalorder %s13, 1
    %p115 = scmp.ne.s32.totalorder %s110, %s112
    %p116 = scmp.eq.s32.totalorder %s13, 0
    %p117 = por %p115, %p116
    %p118 = scmp.ne.s32.totalorder %s110, %s112
    %p119 = scmp.eq.s32.totalorder %s18, 1
    %p120 = por %p118, %p119
    %p121 = scmp.ne.s32.totalorder %s112, %s113
    %p122 = scmp.eq.s32.totalorder %s18, 0
    %p123 = por %p121, %p122
    %p124 = scmp.ne.s32.totalorder %s112, %s113
    %p125 = scmp.eq.s32.totalorder %s19, 1
    %p126 = por %p124, %p125
    %p128 = scmp.ne.s32.totalorder %s113, %s127
    %p129 = scmp.eq.s32.totalorder %s19, 0
    %p130 = por %p128, %p129
    %s131 = ssub.s32 %s13, %s20
    %p132 = scmp.eq.s32.totalorder %s131, 0
    %s134 = sadd.s32 %s133, 1
    %s135 = scalar_select %p132, %s133, %s134
    %p138 = pneg %p132
    %p139 = scmp.eq.s32.totalorder %s13, 1
    %p140 = por %p138, %p139
    %p141 = scmp.ne.s32.totalorder %s133, %s136
    %p142 = scmp.eq.s32.totalorder %s13, 0
    %p143 = por %p141, %p142
    %p144 = scmp.ne.s32.totalorder %s133, %s136
    %p145 = scmp.eq.s32.totalorder %s18, 1
    %p146 = por %p144, %p145
    %p147 = scmp.ne.s32.totalorder %s136, %s137
    %p148 = scmp.eq.s32.totalorder %s18, 0
    %p149 = por %p147, %p148
    %p150 = scmp.ne.s32.totalorder %s136, %s137
    %p151 = scmp.eq.s32.totalorder %s19, 1
    %p152 = por %p150, %p151
    %p154 = scmp.ne.s32.totalorder %s137, %s153
    %p155 = scmp.eq.s32.totalorder %s19, 0
    %p156 = por %p154, %p155
    %s157 = ssub.s32 %s13, %s20
    %p158 = scmp.eq.s32.totalorder %s157, 0
    %s160 = sadd.s32 %s159, 1
    %s161 = scalar_select %p158, %s159, %s160
    %p164 = pneg %p158
    %p165 = scmp.eq.s32.totalorder %s13, 1
    %p166 = por %p164, %p165
    %p167 = scmp.ne.s32.totalorder %s159, %s162
    %p168 = scmp.eq.s32.totalorder %s13, 0
    %p169 = por %p167, %p168
    %p170 = scmp.ne.s32.totalorder %s159, %s162
    %p171 = scmp.eq.s32.totalorder %s18, 1
    %p172 = por %p170, %p171
    %p173 = scmp.ne.s32.totalorder %s162, %s163
    %p174 = scmp.eq.s32.totalorder %s18, 0
    %p175 = por %p173, %p174
    %p176 = scmp.ne.s32.totalorder %s162, %s163
    %p177 = scmp.eq.s32.totalorder %s19, 1
    %p178 = por %p176, %p177
    %p180 = scmp.ne.s32.totalorder %s163, %s179
    %p181 = scmp.eq.s32.totalorder %s19, 0
    %p182 = por %p180, %p181
    %p183 = scmp.le.s32.totalorder 1, %s13
    %p184 = scmp.lt.s32.totalorder %s13, 3
    %p185 = pnand %p183, %p184
    %p186 = pneg %p185
    // Predicated region
    $region9: #{block_forward.3} parent=5 // pred_check
      _
    $region10: #{block_forward.3} parent=5 // pred_check_branch
      %188 = sbr.rel (%p185) target = $region12
    $region11: #{block_forward.3} parent=5 // pred_region
      %s189 = ssub.s32 %s13, 1
      // Predicated region
      $region13: #{block_forward.3} parent=11 // pred_check
        %p190 = pneg %p60
      $region14: #{block_forward.3} parent=11 // pred_check_branch
        %192 = sbr.rel (%p190) target = $region16
      $region15: #{block_forward.3} parent=11 // pred_region
        _
      $region16: #{block_forward.3} parent=11 // pred_fallthru
        _
      // Predicated region
      $region17: #{block_forward.3} parent=11 // pred_check
        %p193 = pneg %p81
      $region18: #{block_forward.3} parent=11 // pred_check_branch
        %195 = sbr.rel (%p193) target = $region20
      $region19: #{block_forward.3} parent=11 // pred_region
        _
      $region20: #{block_forward.3} parent=11 // pred_fallthru
        _
      // Predicated region
      $region21: #{block_forward.3} parent=11 // pred_check
        %p196 = pneg %p102
      $region22: #{block_forward.3} parent=11 // pred_check_branch
        %198 = sbr.rel (%p196) target = $region24
      $region23: #{block_forward.3} parent=11 // pred_region
        _
      $region24: #{block_forward.3} parent=11 // pred_fallthru
        _
      // Predicated region
      $region25: #{block_forward.3} parent=11 // pred_check
        %p199 = pneg %p123
      $region26: #{block_forward.3} parent=11 // pred_check_branch
        %201 = sbr.rel (%p199) target = $region28
      $region27: #{block_forward.3} parent=11 // pred_region
        _
      $region28: #{block_forward.3} parent=11 // pred_fallthru
        _
    $region12: #{block_forward.3} parent=5 // pred_fallthru
      _
    %p202 = scmp.lt.s32.totalorder %s13, 2
    // Predicated region
    $region29: #{block_forward.3} parent=5 // pred_check
      %p203 = pneg %p202
    $region30: #{block_forward.3} parent=5 // pred_check_branch
      %205 = sbr.rel (%p203) target = $region32
    $region31: #{block_forward.3} parent=5 // pred_region
      // Predicated region
      $region33: #{block_forward.3} parent=31 // pred_check
        %p206 = pneg %p33
      $region34: #{block_forward.3} parent=31 // pred_check_branch
        %208 = sbr.rel (%p206) target = $region36
      $region35: #{block_forward.3} parent=31 // pred_region
        %p209 = scmp.lt.s32.totalorder %s13, 1
        %s210 = scalar_select %p209, %s13, 1
        %s211 = smul.addr %s210, 32
        %s212 = smul.addr %s211, 8
        %s213 = scalar_lea.vmem %s0, %s212
      $region36: #{block_forward.3} parent=31 // pred_fallthru
        _
    $region32: #{block_forward.3} parent=5 // pred_fallthru
      _
    %p214 = scmp.le.s32.totalorder 1, %s13
    %p215 = scmp.lt.s32.totalorder %s13, 3
    %p216 = pnand %p214, %p215
    %p217 = pneg %p216
    // Predicated region
    $region37: #{block_forward.3} parent=5 // pred_check
      _
    $region38: #{block_forward.3} parent=5 // pred_check_branch
      %219 = sbr.rel (%p216) target = $region40
    $region39: #{block_forward.3} parent=5 // pred_region
      %s220 = ssub.s32 %s13, 1
      %p221 = scmp.lt.s32.totalorder %s18, 1
      %s222 = scalar_select %p221, %s18, 1
      %s223 = smul.addr %s222, 32
      %s224 = smul.addr %s223, 8
      %s225 = scalar_lea.vmem %s0, %s224
      %p226 = pneg %p39
      %p227 = pneg %p36
      %p228 = pneg %p60
      %p229 = pneg %p57
      %p230 = pneg %p81
      %p231 = pneg %p78
      %p232 = pneg %p102
      %p233 = pneg %p99
      %p234 = pneg %p123
      %p235 = pneg %p120
      %p236 = pneg %p149
      %p237 = pneg %p146
      %p238 = scmp.lt.s32.totalorder %s18, 1
      %s239 = scalar_select %p238, %s18, 1
      %s240 = smul.addr %s239, 32
      %s241 = smul.addr %s240, 8
      %s242 = scalar_lea.vmem %s5, %s241
      %p243 = pneg %p175
      %p244 = pneg %p172
      %p245 = scmp.lt.s32.totalorder %s18, 1
      %s246 = scalar_select %p245, %s18, 1
      %s247 = smul.addr %s246, 2
      %s248 = scalar_lea.vmem %s6, %s247
      %p249 = scmp.lt.s32.totalorder %s18, 1
      %s250 = scalar_select %p249, %s18, 1
      %s251 = smul.addr %s250, 32
      %s252 = smul.addr %s251, 8
      %s253 = scalar_lea.vmem %s0, %s252
      %p254 = scmp.lt.s32.totalorder %s18, 1
      %s255 = scalar_select %p254, %s18, 1
      %s256 = smul.addr %s255, 32
      %s257 = smul.addr %s256, 8
      %s258 = scalar_lea.vmem %s5, %s257
      %p259 = scmp.lt.s32.totalorder %s18, 1
      %s260 = scalar_select %p259, %s18, 1
      %s261 = smul.addr %s260, 2
      %s262 = scalar_lea.vmem %s6, %s261
      %v264 = vld [vmem:[%s253] sm:$0xff]
      %v265 = vld [vmem:[%s253 + $0x8] sm:$0xff]
      %v266 = vld [vmem:[%s253 + $0x10] sm:$0xff]
      %v267 = vld [vmem:[%s253 + $0x18] sm:$0xff]
      %v268 = vld [vmem:[%s253 + $0x20] sm:$0xff]
      %v269 = vld [vmem:[%s253 + $0x28] sm:$0xff]
      %v270 = vld [vmem:[%s253 + $0x30] sm:$0xff]
      %v271 = vld [vmem:[%s253 + $0x38] sm:$0xff]
      %v272 = vld [vmem:[%s253 + $0x40] sm:$0xff]
      %v273 = vld [vmem:[%s253 + $0x48] sm:$0xff]
      %v274 = vld [vmem:[%s253 + $0x50] sm:$0xff]
      %v275 = vld [vmem:[%s253 + $0x58] sm:$0xff]
      %v276 = vld [vmem:[%s253 + $0x60] sm:$0xff]
      %v277 = vld [vmem:[%s253 + $0x68] sm:$0xff]
      %v278 = vld [vmem:[%s253 + $0x70] sm:$0xff]
      %v279 = vld [vmem:[%s253 + $0x78] sm:$0xff]
      %v280 = vld [vmem:[%s253 + $0x80] sm:$0xff]
      %v281 = vld [vmem:[%s253 + $0x88] sm:$0xff]
      %v282 = vld [vmem:[%s253 + $0x90] sm:$0xff]
      %v283 = vld [vmem:[%s253 + $0x98] sm:$0xff]
      %v284 = vld [vmem:[%s253 + $0xa0] sm:$0xff]
      %v285 = vld [vmem:[%s253 + $0xa8] sm:$0xff]
      %v286 = vld [vmem:[%s253 + $0xb0] sm:$0xff]
      %v287 = vld [vmem:[%s253 + $0xb8] sm:$0xff]
      %v288 = vld [vmem:[%s253 + $0xc0] sm:$0xff]
      %v289 = vld [vmem:[%s253 + $0xc8] sm:$0xff]
      %v290 = vld [vmem:[%s253 + $0xd0] sm:$0xff]
      %v291 = vld [vmem:[%s253 + $0xd8] sm:$0xff]
      %v292 = vld [vmem:[%s253 + $0xe0] sm:$0xff]
      %v293 = vld [vmem:[%s253 + $0xe8] sm:$0xff]
      %v294 = vld [vmem:[%s253 + $0xf0] sm:$0xff]
      %v295 = vld [vmem:[%s253 + $0xf8] sm:$0xff]
      %v296 = vld [vmem:[%s1] sm:$0x1]
      %v298 = vlaneseq
      %v299 = vshrl.u32 %v298, 7
      %v300 = vsub.s32 0, %v299
      %v301 = vrot.slane %v296, %v300
      %v303 = vmul.f32 %v264, %v301
      %v304 = vmul.f32 %v265, %v301
      %v305 = vmul.f32 %v266, %v301
      %v306 = vmul.f32 %v267, %v301
      %v307 = vmul.f32 %v268, %v301
      %v308 = vmul.f32 %v269, %v301
      %v309 = vmul.f32 %v270, %v301
      %v310 = vmul.f32 %v271, %v301
      %v311 = vmul.f32 %v272, %v301
      %v312 = vmul.f32 %v273, %v301
      %v313 = vmul.f32 %v274, %v301
      %v314 = vmul.f32 %v275, %v301
      %v315 = vmul.f32 %v276, %v301
      %v316 = vmul.f32 %v277, %v301
      %v317 = vmul.f32 %v278, %v301
      %v318 = vmul.f32 %v279, %v301
      %v319 = vmul.f32 %v280, %v301
      %v320 = vmul.f32 %v281, %v301
      %v321 = vmul.f32 %v282, %v301
      %v322 = vmul.f32 %v283, %v301
      %v323 = vmul.f32 %v284, %v301
      %v324 = vmul.f32 %v285, %v301
      %v325 = vmul.f32 %v286, %v301
      %v326 = vmul.f32 %v287, %v301
      %v327 = vmul.f32 %v288, %v301
      %v328 = vmul.f32 %v289, %v301
      %v329 = vmul.f32 %v290, %v301
      %v330 = vmul.f32 %v291, %v301
      %v331 = vmul.f32 %v292, %v301
      %v332 = vmul.f32 %v293, %v301
      %v333 = vmul.f32 %v294, %v301
      %v334 = vmul.f32 %v295, %v301
      %v335 = vld [vmem:[%s2] sm:$0x1]
      %v337 = vlaneseq
      %v338 = vshrl.u32 %v337, 7
      %v339 = vsub.s32 0, %v338
      %v340 = vrot.slane %v335, %v339
      %v342 = vadd.f32 %v303, %v340
      %v343 = vadd.f32 %v304, %v340
      %v344 = vadd.f32 %v305, %v340
      %v345 = vadd.f32 %v306, %v340
      %v346 = vadd.f32 %v307, %v340
      %v347 = vadd.f32 %v308, %v340
      %v348 = vadd.f32 %v309, %v340
      %v349 = vadd.f32 %v310, %v340
      %v350 = vadd.f32 %v311, %v340
      %v351 = vadd.f32 %v312, %v340
      %v352 = vadd.f32 %v313, %v340
      %v353 = vadd.f32 %v314, %v340
      %v354 = vadd.f32 %v315, %v340
      %v355 = vadd.f32 %v316, %v340
      %v356 = vadd.f32 %v317, %v340
      %v357 = vadd.f32 %v318, %v340
      %v358 = vadd.f32 %v319, %v340
      %v359 = vadd.f32 %v320, %v340
      %v360 = vadd.f32 %v321, %v340
      %v361 = vadd.f32 %v322, %v340
      %v362 = vadd.f32 %v323, %v340
      %v363 = vadd.f32 %v324, %v340
      %v364 = vadd.f32 %v325, %v340
      %v365 = vadd.f32 %v326, %v340
      %v366 = vadd.f32 %v327, %v340
      %v367 = vadd.f32 %v328, %v340
      %v368 = vadd.f32 %v329, %v340
      %v369 = vadd.f32 %v330, %v340
      %v370 = vadd.f32 %v331, %v340
      %v371 = vadd.f32 %v332, %v340
      %v372 = vadd.f32 %v333, %v340
      %v373 = vadd.f32 %v334, %v340
      %vm407 = vcmask 1040384
      %v408 = vrot.slane 0.0, 7
      %v409 = vsel %vm407, %v408, %v408
      %v410 = vrot.slane %v342, 7
      %v411 = vrot.slane %v343, 7
      %v412 = vsel %vm407, %v410, %v411
      %v413 = vrot.slane %v344, 7
      %v414 = vrot.slane %v345, 7
      %v415 = vsel %vm407, %v413, %v414
      %v416 = vrot.slane %v346, 7
      %v417 = vrot.slane %v347, 7
      %v418 = vsel %vm407, %v416, %v417
      %v419 = vrot.slane %v348, 7
      %v420 = vrot.slane %v349, 7
      %v421 = vsel %vm407, %v419, %v420
      %v422 = vrot.slane %v350, 7
      %v423 = vrot.slane %v351, 7
      %v424 = vsel %vm407, %v422, %v423
      %v425 = vrot.slane %v352, 7
      %v426 = vrot.slane %v353, 7
      %v427 = vsel %vm407, %v425, %v426
      %v428 = vrot.slane %v354, 7
      %v429 = vrot.slane %v355, 7
      %v430 = vsel %vm407, %v428, %v429
      %v431 = vrot.slane %v356, 7
      %v432 = vrot.slane %v357, 7
      %v433 = vsel %vm407, %v431, %v432
      %v434 = vrot.slane %v358, 7
      %v435 = vrot.slane %v359, 7
      %v436 = vsel %vm407, %v434, %v435
      %v437 = vrot.slane %v360, 7
      %v438 = vrot.slane %v361, 7
      %v439 = vsel %vm407, %v437, %v438
      %v440 = vrot.slane %v362, 7
      %v441 = vrot.slane %v363, 7
      %v442 = vsel %vm407, %v440, %v441
      %v443 = vrot.slane %v364, 7
      %v444 = vrot.slane %v365, 7
      %v445 = vsel %vm407, %v443, %v444
      %v446 = vrot.slane %v366, 7
      %v447 = vrot.slane %v367, 7
      %v448 = vsel %vm407, %v446, %v447
      %v449 = vrot.slane %v368, 7
      %v450 = vrot.slane %v369, 7
      %v451 = vsel %vm407, %v449, %v450
      %v452 = vrot.slane %v370, 7
      %v453 = vrot.slane %v371, 7
      %v454 = vsel %vm407, %v452, %v453
      %v455 = vrot.slane %v372, 7
      %v456 = vrot.slane %v373, 7
      %v457 = vsel %vm407, %v455, %v456
      %v508 = vsel %vm407, 0.0, %v408
      %v509 = vsel %vm407, 0.0, %v410
      %v510 = vsel %vm407, 0.0, %v413
      %v511 = vsel %vm407, 0.0, %v416
      %v512 = vsel %vm407, 0.0, %v419
      %v513 = vsel %vm407, 0.0, %v422
      %v514 = vsel %vm407, 0.0, %v425
      %v515 = vsel %vm407, 0.0, %v428
      %v516 = vsel %vm407, 0.0, %v431
      %v517 = vsel %vm407, 0.0, %v434
      %v518 = vsel %vm407, 0.0, %v437
      %v519 = vsel %vm407, 0.0, %v440
      %v520 = vsel %vm407, 0.0, %v443
      %v521 = vsel %vm407, 0.0, %v446
      %v522 = vsel %vm407, 0.0, %v449
      %v523 = vsel %vm407, 0.0, %v452
      %v524 = vsel %vm407, 0.0, %v455
      %v525 = vsel %vm407, %v408, 0.0
      %v526 = vsel %vm407, %v411, 0.0
      %v527 = vsel %vm407, %v414, 0.0
      %v528 = vsel %vm407, %v417, 0.0
      %v529 = vsel %vm407, %v420, 0.0
      %v530 = vsel %vm407, %v423, 0.0
      %v531 = vsel %vm407, %v426, 0.0
      %v532 = vsel %vm407, %v429, 0.0
      %v533 = vsel %vm407, %v432, 0.0
      %v534 = vsel %vm407, %v435, 0.0
      %v535 = vsel %vm407, %v438, 0.0
      %v536 = vsel %vm407, %v441, 0.0
      %v537 = vsel %vm407, %v444, 0.0
      %v538 = vsel %vm407, %v447, 0.0
      %v539 = vsel %vm407, %v450, 0.0
      %v540 = vsel %vm407, %v453, 0.0
      %v541 = vsel %vm407, %v456, 0.0
      %vm574 = vcmask 1046528
      %v575 = vrot.slane %v508, 1
      %v576 = vrot.slane %v409, 1
      %v577 = vsel %vm574, %v575, %v576
      %v578 = vrot.slane %v525, 1
      %v579 = vsel %vm574, %v576, %v578
      %v580 = vrot.slane %v509, 1
      %v581 = vrot.slane %v412, 1
      %v582 = vsel %vm574, %v580, %v581
      %v583 = vrot.slane %v526, 1
      %v584 = vsel %vm574, %v581, %v583
      %v585 = vrot.slane %v510, 1
      %v586 = vrot.slane %v415, 1
      %v587 = vsel %vm574, %v585, %v586
      %v588 = vrot.slane %v527, 1
      %v589 = vsel %vm574, %v586, %v588
      %v590 = vrot.slane %v511, 1
      %v591 = vrot.slane %v418, 1
      %v592 = vsel %vm574, %v590, %v591
      %v593 = vrot.slane %v528, 1
      %v594 = vsel %vm574, %v591, %v593
      %v595 = vrot.slane %v512, 1
      %v596 = vrot.slane %v421, 1
      %v597 = vsel %vm574, %v595, %v596
      %v598 = vrot.slane %v529, 1
      %v599 = vsel %vm574, %v596, %v598
      %v600 = vrot.slane %v513, 1
      %v601 = vrot.slane %v424, 1
      %v602 = vsel %vm574, %v600, %v601
      %v603 = vrot.slane %v530, 1
      %v604 = vsel %vm574, %v601, %v603
      %v605 = vrot.slane %v514, 1
      %v606 = vrot.slane %v427, 1
      %v607 = vsel %vm574, %v605, %v606
      %v608 = vrot.slane %v531, 1
      %v609 = vsel %vm574, %v606, %v608
      %v610 = vrot.slane %v515, 1
      %v611 = vrot.slane %v430, 1
      %v612 = vsel %vm574, %v610, %v611
      %v613 = vrot.slane %v532, 1
      %v614 = vsel %vm574, %v611, %v613
      %v615 = vrot.slane %v516, 1
      %v616 = vrot.slane %v433, 1
      %v617 = vsel %vm574, %v615, %v616
      %v618 = vrot.slane %v533, 1
      %v619 = vsel %vm574, %v616, %v618
      %v620 = vrot.slane %v517, 1
      %v621 = vrot.slane %v436, 1
      %v622 = vsel %vm574, %v620, %v621
      %v623 = vrot.slane %v534, 1
      %v624 = vsel %vm574, %v621, %v623
      %v625 = vrot.slane %v518, 1
      %v626 = vrot.slane %v439, 1
      %v627 = vsel %vm574, %v625, %v626
      %v628 = vrot.slane %v535, 1
      %v629 = vsel %vm574, %v626, %v628
      %v630 = vrot.slane %v519, 1
      %v631 = vrot.slane %v442, 1
      %v632 = vsel %vm574, %v630, %v631
      %v633 = vrot.slane %v536, 1
      %v634 = vsel %vm574, %v631, %v633
      %v635 = vrot.slane %v520, 1
      %v636 = vrot.slane %v445, 1
      %v637 = vsel %vm574, %v635, %v636
      %v638 = vrot.slane %v537, 1
      %v639 = vsel %vm574, %v636, %v638
      %v640 = vrot.slane %v521, 1
      %v641 = vrot.slane %v448, 1
      %v642 = vsel %vm574, %v640, %v641
      %v643 = vrot.slane %v538, 1
      %v644 = vsel %vm574, %v641, %v643
      %v645 = vrot.slane %v522, 1
      %v646 = vrot.slane %v451, 1
      %v647 = vsel %vm574, %v645, %v646
      %v648 = vrot.slane %v539, 1
      %v649 = vsel %vm574, %v646, %v648
      %v650 = vrot.slane %v523, 1
      %v651 = vrot.slane %v454, 1
      %v652 = vsel %vm574, %v650, %v651
      %v653 = vrot.slane %v540, 1
      %v654 = vsel %vm574, %v651, %v653
      %vm687 = vcmask 1045504
      %v688 = vrot.slane %v508, 2
      %v689 = vrot.slane %v409, 2
      %v690 = vsel %vm687, %v688, %v689
      %v691 = vrot.slane %v525, 2
      %v692 = vsel %vm687, %v689, %v691
      %v693 = vrot.slane %v509, 2
      %v694 = vrot.slane %v412, 2
      %v695 = vsel %vm687, %v693, %v694
      %v696 = vrot.slane %v526, 2
      %v697 = vsel %vm687, %v694, %v696
      %v698 = vrot.slane %v510, 2
      %v699 = vrot.slane %v415, 2
      %v700 = vsel %vm687, %v698, %v699
      %v701 = vrot.slane %v527, 2
      %v702 = vsel %vm687, %v699, %v701
      %v703 = vrot.slane %v511, 2
      %v704 = vrot.slane %v418, 2
      %v705 = vsel %vm687, %v703, %v704
      %v706 = vrot.slane %v528, 2
      %v707 = vsel %vm687, %v704, %v706
      %v708 = vrot.slane %v512, 2
      %v709 = vrot.slane %v421, 2
      %v710 = vsel %vm687, %v708, %v709
      %v711 = vrot.slane %v529, 2
      %v712 = vsel %vm687, %v709, %v711
      %v713 = vrot.slane %v513, 2
      %v714 = vrot.slane %v424, 2
      %v715 = vsel %vm687, %v713, %v714
      %v716 = vrot.slane %v530, 2
      %v717 = vsel %vm687, %v714, %v716
      %v718 = vrot.slane %v514, 2
      %v719 = vrot.slane %v427, 2
      %v720 = vsel %vm687, %v718, %v719
      %v721 = vrot.slane %v531, 2
      %v722 = vsel %vm687, %v719, %v721
      %v723 = vrot.slane %v515, 2
      %v724 = vrot.slane %v430, 2
      %v725 = vsel %vm687, %v723, %v724
      %v726 = vrot.slane %v532, 2
      %v727 = vsel %vm687, %v724, %v726
      %v728 = vrot.slane %v516, 2
      %v729 = vrot.slane %v433, 2
      %v730 = vsel %vm687, %v728, %v729
      %v731 = vrot.slane %v533, 2
      %v732 = vsel %vm687, %v729, %v731
      %v733 = vrot.slane %v517, 2
      %v734 = vrot.slane %v436, 2
      %v735 = vsel %vm687, %v733, %v734
      %v736 = vrot.slane %v534, 2
      %v737 = vsel %vm687, %v734, %v736
      %v738 = vrot.slane %v518, 2
      %v739 = vrot.slane %v439, 2
      %v740 = vsel %vm687, %v738, %v739
      %v741 = vrot.slane %v535, 2
      %v742 = vsel %vm687, %v739, %v741
      %v743 = vrot.slane %v519, 2
      %v744 = vrot.slane %v442, 2
      %v745 = vsel %vm687, %v743, %v744
      %v746 = vrot.slane %v536, 2
      %v747 = vsel %vm687, %v744, %v746
      %v748 = vrot.slane %v520, 2
      %v749 = vrot.slane %v445, 2
      %v750 = vsel %vm687, %v748, %v749
      %v751 = vrot.slane %v537, 2
      %v752 = vsel %vm687, %v749, %v751
      %v753 = vrot.slane %v521, 2
      %v754 = vrot.slane %v448, 2
      %v755 = vsel %vm687, %v753, %v754
      %v756 = vrot.slane %v538, 2
      %v757 = vsel %vm687, %v754, %v756
      %v758 = vrot.slane %v522, 2
      %v759 = vrot.slane %v451, 2
      %v760 = vsel %vm687, %v758, %v759
      %v761 = vrot.slane %v539, 2
      %v762 = vsel %vm687, %v759, %v761
      %v763 = vrot.slane %v523, 2
      %v764 = vrot.slane %v454, 2
      %v765 = vsel %vm687, %v763, %v764
      %v766 = vrot.slane %v540, 2
      %v767 = vsel %vm687, %v764, %v766
      %v802 = vrot.slane %v524, 1
      %v803 = vrot.slane %v457, 1
      %v804 = vsel %vm574, %v802, %v803
      %v805 = vrot.slane %v541, 1
      %v806 = vsel %vm574, %v803, %v805
      %v809 = vrot.slane %v524, 2
      %v810 = vrot.slane %v457, 2
      %v811 = vsel %vm687, %v809, %v810
      %v812 = vrot.slane %v541, 2
      %v813 = vsel %vm687, %v810, %v812
      %v816 = vpack.c.bf16 %v409, %v508
      %v817 = vpack.c.bf16 %v579, %v577
      %v818 = vpack.c.bf16 %v692, %v690
      %v819 = vpack.c.bf16 %v412, %v509
      %v820 = vpack.c.bf16 %v584, %v582
      %v821 = vpack.c.bf16 %v697, %v695
      %v822 = vpack.c.bf16 %v415, %v510
      %v823 = vpack.c.bf16 %v589, %v587
      %v824 = vpack.c.bf16 %v702, %v700
      %v825 = vpack.c.bf16 %v418, %v511
      %v826 = vpack.c.bf16 %v594, %v592
      %v827 = vpack.c.bf16 %v707, %v705
      %v828 = vpack.c.bf16 %v421, %v512
      %v829 = vpack.c.bf16 %v599, %v597
      %v830 = vpack.c.bf16 %v712, %v710
      %v831 = vpack.c.bf16 %v424, %v513
      %v832 = vpack.c.bf16 %v604, %v602
      %v833 = vpack.c.bf16 %v717, %v715
      %v834 = vpack.c.bf16 %v427, %v514
      %v835 = vpack.c.bf16 %v609, %v607
      %v836 = vpack.c.bf16 %v722, %v720
      %v837 = vpack.c.bf16 %v430, %v515
      %v838 = vpack.c.bf16 %v614, %v612
      %v839 = vpack.c.bf16 %v727, %v725
      %v840 = vpack.c.bf16 %v433, %v516
      %v841 = vpack.c.bf16 %v619, %v617
      %v842 = vpack.c.bf16 %v732, %v730
      %v843 = vpack.c.bf16 %v436, %v517
      %v844 = vpack.c.bf16 %v624, %v622
      %v845 = vpack.c.bf16 %v737, %v735
      %v846 = vpack.c.bf16 %v439, %v518
      %v847 = vpack.c.bf16 %v629, %v627
      %v848 = vpack.c.bf16 %v742, %v740
      %v849 = vpack.c.bf16 %v442, %v519
      %v850 = vpack.c.bf16 %v634, %v632
      %v851 = vpack.c.bf16 %v747, %v745
      %v852 = vpack.c.bf16 %v445, %v520
      %v853 = vpack.c.bf16 %v639, %v637
      %v854 = vpack.c.bf16 %v752, %v750
      %v855 = vpack.c.bf16 %v448, %v521
      %v856 = vpack.c.bf16 %v644, %v642
      %v857 = vpack.c.bf16 %v757, %v755
      %v858 = vpack.c.bf16 %v451, %v522
      %v859 = vpack.c.bf16 %v649, %v647
      %v860 = vpack.c.bf16 %v762, %v760
      %v861 = vpack.c.bf16 %v454, %v523
      %v862 = vpack.c.bf16 %v654, %v652
      %v863 = vpack.c.bf16 %v767, %v765
      %v864 = vpack.c.bf16 %v457, %v524
      %v865 = vpack.c.bf16 %v806, %v804
      %v866 = vpack.c.bf16 %v813, %v811
      %v867 = vld [vmem:[%s3] sm:$0xf]
      %v868 = vld [vmem:[%s3 + $0x4] sm:$0xf]
      %v869 = vld [vmem:[%s3 + $0x8] sm:$0xf]
      %v870 = vld [vmem:[%s3 + $0xc] sm:$0xf]
      %v871 = vld [vmem:[%s3 + $0x10] sm:$0xf]
      %v872 = vld [vmem:[%s3 + $0x14] sm:$0xf]
      %v873 = vld [vmem:[%s3 + $0x18] sm:$0xf]
      %v874 = vld [vmem:[%s3 + $0x1c] sm:$0xf]
      %v875 = vld [vmem:[%s3 + $0x20] sm:$0xf]
      %v876 = vld [vmem:[%s3 + $0x24] sm:$0xf]
      %v877 = vld [vmem:[%s3 + $0x28] sm:$0xf]
      %v878 = vld [vmem:[%s3 + $0x2c] sm:$0xf]
      %v879 = vld [vmem:[%s3 + $0x30] sm:$0xf]
      %v880 = vld [vmem:[%s3 + $0x34] sm:$0xf]
      %v881 = vld [vmem:[%s3 + $0x38] sm:$0xf]
      %v882 = vld [vmem:[%s3 + $0x3c] sm:$0xf]
      %v883 = vld [vmem:[%s3 + $0x40] sm:$0xf]
      %v884 = vld [vmem:[%s3 + $0x44] sm:$0xf]
      %v885 = vld [vmem:[%s3 + $0x48] sm:$0xf]
      %v886 = vld [vmem:[%s3 + $0x4c] sm:$0xf]
      %v887 = vld [vmem:[%s3 + $0x50] sm:$0xf]
      %v888 = vld [vmem:[%s3 + $0x54] sm:$0xf]
      %v889 = vld [vmem:[%s3 + $0x58] sm:$0xf]
      %v890 = vld [vmem:[%s3 + $0x5c] sm:$0xf]
      %v891 = vld [vmem:[%s3 + $0x60] sm:$0xf]
      %v892 = vld [vmem:[%s3 + $0x64] sm:$0xf]
      %v893 = vld [vmem:[%s3 + $0x68] sm:$0xf]
      %v894 = vld [vmem:[%s3 + $0x6c] sm:$0xf]
      %v895 = vld [vmem:[%s3 + $0x70] sm:$0xf]
      %v896 = vld [vmem:[%s3 + $0x74] sm:$0xf]
      %v897 = vld [vmem:[%s3 + $0x78] sm:$0xf]
      %v898 = vld [vmem:[%s3 + $0x7c] sm:$0xf]
      %v899 = vld [vmem:[%s3 + $0x80] sm:$0xf]
      %v900 = vld [vmem:[%s3 + $0x84] sm:$0xf]
      %v901 = vld [vmem:[%s3 + $0x88] sm:$0xf]
      %v902 = vld [vmem:[%s3 + $0x8c] sm:$0xf]
      %v903 = vld [vmem:[%s3 + $0x90] sm:$0xf]
      %v904 = vld [vmem:[%s3 + $0x94] sm:$0xf]
      %v905 = vld [vmem:[%s3 + $0x98] sm:$0xf]
      %v906 = vld [vmem:[%s3 + $0x9c] sm:$0xf]
      %v907 = vld [vmem:[%s3 + $0xa0] sm:$0xf]
      %v908 = vld [vmem:[%s3 + $0xa4] sm:$0xf]
      %v909 = vld [vmem:[%s3 + $0xa8] sm:$0xf]
      %v910 = vld [vmem:[%s3 + $0xac] sm:$0xf]
      %v911 = vld [vmem:[%s3 + $0xb0] sm:$0xf]
      %v912 = vld [vmem:[%s3 + $0xb4] sm:$0xf]
      %v913 = vld [vmem:[%s3 + $0xb8] sm:$0xf]
      %v914 = vld [vmem:[%s3 + $0xbc] sm:$0xf]
      %v915 = vld [vmem:[%s3 + $0xc0] sm:$0xf]
      %v916 = vld [vmem:[%s3 + $0xc4] sm:$0xf]
      %v917 = vld [vmem:[%s3 + $0xc8] sm:$0xf]
      %v918 = vld [vmem:[%s3 + $0xcc] sm:$0xf]
      %v919 = vld [vmem:[%s3 + $0xd0] sm:$0xf]
      %v920 = vld [vmem:[%s3 + $0xd4] sm:$0xf]
      %v921 = vld [vmem:[%s3 + $0xd8] sm:$0xf]
      %v922 = vld [vmem:[%s3 + $0xdc] sm:$0xf]
      %v923 = vld [vmem:[%s3 + $0xe0] sm:$0xf]
      %v924 = vld [vmem:[%s3 + $0xe4] sm:$0xf]
      %v925 = vld [vmem:[%s3 + $0xe8] sm:$0xf]
      %v926 = vld [vmem:[%s3 + $0xec] sm:$0xf]
      %v927 = vld [vmem:[%s3 + $0xf0] sm:$0xf]
      %v928 = vld [vmem:[%s3 + $0xf4] sm:$0xf]
      %v929 = vld [vmem:[%s3 + $0xf8] sm:$0xf]
      %v930 = vld [vmem:[%s3 + $0xfc] sm:$0xf]
      %v931 = vld [vmem:[%s3 + $0x100] sm:$0xf]
      %v932 = vld [vmem:[%s3 + $0x104] sm:$0xf]
      %v933 = vld [vmem:[%s3 + $0x108] sm:$0xf]
      %v934 = vld [vmem:[%s3 + $0x10c] sm:$0xf]
      %v935 = vld [vmem:[%s3 + $0x110] sm:$0xf]
      %v936 = vld [vmem:[%s3 + $0x114] sm:$0xf]
      %v937 = vld [vmem:[%s3 + $0x118] sm:$0xf]
      %v938 = vld [vmem:[%s3 + $0x11c] sm:$0xf]
      %v939 = vld [vmem:[%s3 + $0x120] sm:$0xf]
      %v940 = vld [vmem:[%s3 + $0x124] sm:$0xf]
      %v941 = vld [vmem:[%s3 + $0x128] sm:$0xf]
      %v942 = vld [vmem:[%s3 + $0x12c] sm:$0xf]
      %v943 = vld [vmem:[%s3 + $0x130] sm:$0xf]
      %v944 = vld [vmem:[%s3 + $0x134] sm:$0xf]
      %v945 = vld [vmem:[%s3 + $0x138] sm:$0xf]
      %v946 = vld [vmem:[%s3 + $0x13c] sm:$0xf]
      %v947 = vld [vmem:[%s3 + $0x140] sm:$0xf]
      %v948 = vld [vmem:[%s3 + $0x144] sm:$0xf]
      %v949 = vld [vmem:[%s3 + $0x148] sm:$0xf]
      %v950 = vld [vmem:[%s3 + $0x14c] sm:$0xf]
      %v951 = vld [vmem:[%s3 + $0x150] sm:$0xf]
      %v952 = vld [vmem:[%s3 + $0x154] sm:$0xf]
      %v953 = vld [vmem:[%s3 + $0x158] sm:$0xf]
      %v954 = vld [vmem:[%s3 + $0x15c] sm:$0xf]
      %v955 = vld [vmem:[%s3 + $0x160] sm:$0xf]
      %v956 = vld [vmem:[%s3 + $0x164] sm:$0xf]
      %v957 = vld [vmem:[%s3 + $0x168] sm:$0xf]
      %v958 = vld [vmem:[%s3 + $0x16c] sm:$0xf]
      %v959 = vld [vmem:[%s3 + $0x170] sm:$0xf]
      %v960 = vld [vmem:[%s3 + $0x174] sm:$0xf]
      %v961 = vld [vmem:[%s3 + $0x178] sm:$0xf]
      %v962 = vld [vmem:[%s3 + $0x17c] sm:$0xf]
      %v963 = vld [vmem:[%s3 + $0x180] sm:$0xf]
      %v964 = vld [vmem:[%s3 + $0x184] sm:$0xf]
      %v965 = vld [vmem:[%s3 + $0x188] sm:$0xf]
      %v966 = vld [vmem:[%s3 + $0x18c] sm:$0xf]
      %v967 = vld [vmem:[%s3 + $0x190] sm:$0xf]
      %v968 = vld [vmem:[%s3 + $0x194] sm:$0xf]
      %v969 = vld [vmem:[%s3 + $0x198] sm:$0xf]
      %v970 = vld [vmem:[%s3 + $0x19c] sm:$0xf]
      %v971 = vld [vmem:[%s3 + $0x1a0] sm:$0xf]
      %v972 = vld [vmem:[%s3 + $0x1a4] sm:$0xf]
      %v973 = vld [vmem:[%s3 + $0x1a8] sm:$0xf]
      %v974 = vld [vmem:[%s3 + $0x1ac] sm:$0xf]
      %v975 = vld [vmem:[%s3 + $0x1b0] sm:$0xf]
      %v976 = vld [vmem:[%s3 + $0x1b4] sm:$0xf]
      %v977 = vld [vmem:[%s3 + $0x1b8] sm:$0xf]
      %v978 = vld [vmem:[%s3 + $0x1bc] sm:$0xf]
      %v979 = vld [vmem:[%s3 + $0x1c0] sm:$0xf]
      %v980 = vld [vmem:[%s3 + $0x1c4] sm:$0xf]
      %v981 = vld [vmem:[%s3 + $0x1c8] sm:$0xf]
      %v982 = vld [vmem:[%s3 + $0x1cc] sm:$0xf]
      %v983 = vld [vmem:[%s3 + $0x1d0] sm:$0xf]
      %v984 = vld [vmem:[%s3 + $0x1d4] sm:$0xf]
      %v985 = vld [vmem:[%s3 + $0x1d8] sm:$0xf]
      %v986 = vld [vmem:[%s3 + $0x1dc] sm:$0xf]
      %v987 = vld [vmem:[%s3 + $0x1e0] sm:$0xf]
      %v988 = vld [vmem:[%s3 + $0x1e4] sm:$0xf]
      %v989 = vld [vmem:[%s3 + $0x1e8] sm:$0xf]
      %v990 = vld [vmem:[%s3 + $0x1ec] sm:$0xf]
      %v991 = vld [vmem:[%s3 + $0x1f0] sm:$0xf]
      %v992 = vld [vmem:[%s3 + $0x1f4] sm:$0xf]
      %v993 = vld [vmem:[%s3 + $0x1f8] sm:$0xf]
      %v994 = vld [vmem:[%s3 + $0x1fc] sm:$0xf]
      %v995 = vld [vmem:[%s3 + $0x200] sm:$0xf]
      %v996 = vld [vmem:[%s3 + $0x204] sm:$0xf]
      %v997 = vld [vmem:[%s3 + $0x208] sm:$0xf]
      %v998 = vld [vmem:[%s3 + $0x20c] sm:$0xf]
      %v999 = vld [vmem:[%s3 + $0x210] sm:$0xf]
      %v1000 = vld [vmem:[%s3 + $0x214] sm:$0xf]
      %v1001 = vld [vmem:[%s3 + $0x218] sm:$0xf]
      %v1002 = vld [vmem:[%s3 + $0x21c] sm:$0xf]
      %v1003 = vld [vmem:[%s3 + $0x220] sm:$0xf]
      %v1004 = vld [vmem:[%s3 + $0x224] sm:$0xf]
      %v1005 = vld [vmem:[%s3 + $0x228] sm:$0xf]
      %v1006 = vld [vmem:[%s3 + $0x22c] sm:$0xf]
      %v1007 = vld [vmem:[%s3 + $0x230] sm:$0xf]
      %v1008 = vld [vmem:[%s3 + $0x234] sm:$0xf]
      %v1009 = vld [vmem:[%s3 + $0x238] sm:$0xf]
      %v1010 = vld [vmem:[%s3 + $0x23c] sm:$0xf]
      %v1011 = vld [vmem:[%s4] sm:$0x1]
      %v1013 = vlaneseq
      %v1014 = vshrl.u32 %v1013, 7
      %v1015 = vsub.s32 0, %v1014
      %v1016 = vrot.slane %v1011, %v1015
      %v1162 = vunpack.c.l.b16 %v867
      %v1163 = vunpack.c.l.b16 %v868
      %v1164 = vunpack.c.l.b16 %v869
      %v1165 = vunpack.c.l.b16 %v870
      %v1166 = vunpack.c.l.b16 %v871
      %v1167 = vunpack.c.l.b16 %v872
      %v1168 = vunpack.c.l.b16 %v873
      %v1169 = vunpack.c.l.b16 %v874
      %v1170 = vunpack.c.l.b16 %v875
      %v1171 = vunpack.c.l.b16 %v876
      %v1172 = vunpack.c.l.b16 %v877
      %v1173 = vunpack.c.l.b16 %v878
      %v1174 = vunpack.c.l.b16 %v879
      %v1175 = vunpack.c.l.b16 %v880
      %v1176 = vunpack.c.l.b16 %v881
      %v1177 = vunpack.c.l.b16 %v882
      %v1178 = vunpack.c.l.b16 %v883
      %v1179 = vunpack.c.l.b16 %v884
      %v1180 = vunpack.c.l.b16 %v885
      %v1181 = vunpack.c.l.b16 %v886
      %v1182 = vunpack.c.l.b16 %v887
      %v1183 = vunpack.c.l.b16 %v888
      %v1184 = vunpack.c.l.b16 %v889
      %v1185 = vunpack.c.l.b16 %v890
      %v1186 = vunpack.c.l.b16 %v891
      %v1187 = vunpack.c.l.b16 %v892
      %v1188 = vunpack.c.l.b16 %v893
      %v1189 = vunpack.c.l.b16 %v894
      %v1190 = vunpack.c.l.b16 %v895
      %v1191 = vunpack.c.l.b16 %v896
      %v1192 = vunpack.c.l.b16 %v897
      %v1193 = vunpack.c.l.b16 %v898
      %v1194 = vunpack.c.l.b16 %v899
      %v1195 = vunpack.c.l.b16 %v900
      %v1196 = vunpack.c.l.b16 %v901
      %v1197 = vunpack.c.l.b16 %v902
      %v1198 = vunpack.c.l.b16 %v903
      %v1199 = vunpack.c.l.b16 %v904
      %v1200 = vunpack.c.l.b16 %v905
      %v1201 = vunpack.c.l.b16 %v906
      %v1202 = vunpack.c.l.b16 %v907
      %v1203 = vunpack.c.l.b16 %v908
      %v1204 = vunpack.c.l.b16 %v909
      %v1205 = vunpack.c.l.b16 %v910
      %v1206 = vunpack.c.l.b16 %v911
      %v1207 = vunpack.c.l.b16 %v912
      %v1208 = vunpack.c.l.b16 %v913
      %v1209 = vunpack.c.l.b16 %v914
      %v1210 = vunpack.c.l.b16 %v915
      %v1211 = vunpack.c.l.b16 %v916
      %v1212 = vunpack.c.l.b16 %v917
      %v1213 = vunpack.c.l.b16 %v918
      %v1214 = vunpack.c.l.b16 %v919
      %v1215 = vunpack.c.l.b16 %v920
      %v1216 = vunpack.c.l.b16 %v921
      %v1217 = vunpack.c.l.b16 %v922
      %v1218 = vunpack.c.l.b16 %v923
      %v1219 = vunpack.c.l.b16 %v924
      %v1220 = vunpack.c.l.b16 %v925
      %v1221 = vunpack.c.l.b16 %v926
      %v1222 = vunpack.c.l.b16 %v927
      %v1223 = vunpack.c.l.b16 %v928
      %v1224 = vunpack.c.l.b16 %v929
      %v1225 = vunpack.c.l.b16 %v930
      %v1226 = vunpack.c.l.b16 %v931
      %v1227 = vunpack.c.l.b16 %v932
      %v1228 = vunpack.c.l.b16 %v933
      %v1229 = vunpack.c.l.b16 %v934
      %v1230 = vunpack.c.l.b16 %v935
      %v1231 = vunpack.c.l.b16 %v936
      %v1232 = vunpack.c.l.b16 %v937
      %v1233 = vunpack.c.l.b16 %v938
      %v1234 = vunpack.c.l.b16 %v939
      %v1235 = vunpack.c.l.b16 %v940
      %v1236 = vunpack.c.l.b16 %v941
      %v1237 = vunpack.c.l.b16 %v942
      %v1238 = vunpack.c.l.b16 %v943
      %v1239 = vunpack.c.l.b16 %v944
      %v1240 = vunpack.c.l.b16 %v945
      %v1241 = vunpack.c.l.b16 %v946
      %v1242 = vunpack.c.l.b16 %v947
      %v1243 = vunpack.c.l.b16 %v948
      %v1244 = vunpack.c.l.b16 %v949
      %v1245 = vunpack.c.l.b16 %v950
      %v1246 = vunpack.c.l.b16 %v951
      %v1247 = vunpack.c.l.b16 %v952
      %v1248 = vunpack.c.l.b16 %v953
      %v1249 = vunpack.c.l.b16 %v954
      %v1250 = vunpack.c.l.b16 %v955
      %v1251 = vunpack.c.l.b16 %v956
      %v1252 = vunpack.c.l.b16 %v957
      %v1253 = vunpack.c.l.b16 %v958
      %v1254 = vunpack.c.l.b16 %v959
      %v1255 = vunpack.c.l.b16 %v960
      %v1256 = vunpack.c.l.b16 %v961
      %v1257 = vunpack.c.l.b16 %v962
      %v1258 = vunpack.c.l.b16 %v963
      %v1259 = vunpack.c.l.b16 %v964
      %v1260 = vunpack.c.l.b16 %v965
      %v1261 = vunpack.c.l.b16 %v966
      %v1262 = vunpack.c.l.b16 %v967
      %v1263 = vunpack.c.l.b16 %v968
      %v1264 = vunpack.c.l.b16 %v969
      %v1265 = vunpack.c.l.b16 %v970
      %v1266 = vunpack.c.l.b16 %v971
      %v1267 = vunpack.c.l.b16 %v972
      %v1268 = vunpack.c.l.b16 %v973
      %v1269 = vunpack.c.l.b16 %v974
      %v1270 = vunpack.c.l.b16 %v975
      %v1271 = vunpack.c.l.b16 %v976
      %v1272 = vunpack.c.l.b16 %v977
      %v1273 = vunpack.c.l.b16 %v978
      %v1274 = vunpack.c.l.b16 %v979
      %v1275 = vunpack.c.l.b16 %v980
      %v1276 = vunpack.c.l.b16 %v981
      %v1277 = vunpack.c.l.b16 %v982
      %v1278 = vunpack.c.l.b16 %v983
      %v1279 = vunpack.c.l.b16 %v984
      %v1280 = vunpack.c.l.b16 %v985
      %v1281 = vunpack.c.l.b16 %v986
      %v1282 = vunpack.c.l.b16 %v987
      %v1283 = vunpack.c.l.b16 %v988
      %v1284 = vunpack.c.l.b16 %v989
      %v1285 = vunpack.c.l.b16 %v990
      %v1286 = vunpack.c.l.b16 %v991
      %v1287 = vunpack.c.l.b16 %v992
      %v1288 = vunpack.c.l.b16 %v993
      %v1289 = vunpack.c.l.b16 %v994
      %v1290 = vunpack.c.l.b16 %v995
      %v1291 = vunpack.c.l.b16 %v996
      %v1292 = vunpack.c.l.b16 %v997
      %v1293 = vunpack.c.l.b16 %v998
      %v1294 = vunpack.c.l.b16 %v999
      %v1295 = vunpack.c.l.b16 %v1000
      %v1296 = vunpack.c.l.b16 %v1001
      %v1297 = vunpack.c.l.b16 %v1002
      %v1298 = vunpack.c.l.b16 %v1003
      %v1299 = vunpack.c.l.b16 %v1004
      %v1300 = vunpack.c.l.b16 %v1005
      %v1301 = vunpack.c.l.b16 %v1006
      %v1302 = vunpack.c.l.b16 %v1007
      %v1303 = vunpack.c.l.b16 %v1008
      %v1304 = vunpack.c.l.b16 %v1009
      %v1305 = vunpack.c.l.b16 %v1010
      %v1306 = vpack.c.b16 %v1163, %v1162
      %v1307 = vpack.c.b16 %v1165, %v1164
      %v1308 = vpack.c.b16 %v1167, %v1166
      %v1309 = vpack.c.b16 %v1169, %v1168
      %v1310 = vpack.c.b16 %v1171, %v1170
      %v1311 = vpack.c.b16 %v1173, %v1172
      %v1312 = vpack.c.b16 %v1175, %v1174
      %v1313 = vpack.c.b16 %v1177, %v1176
      %v1314 = vpack.c.b16 %v1179, %v1178
      %v1315 = vpack.c.b16 %v1181, %v1180
      %v1316 = vpack.c.b16 %v1183, %v1182
      %v1317 = vpack.c.b16 %v1185, %v1184
      %v1318 = vpack.c.b16 %v1187, %v1186
      %v1319 = vpack.c.b16 %v1189, %v1188
      %v1320 = vpack.c.b16 %v1191, %v1190
      %v1321 = vpack.c.b16 %v1193, %v1192
      %v1322 = vpack.c.b16 %v1195, %v1194
      %v1323 = vpack.c.b16 %v1197, %v1196
      %v1324 = vpack.c.b16 %v1199, %v1198
      %v1325 = vpack.c.b16 %v1201, %v1200
      %v1326 = vpack.c.b16 %v1203, %v1202
      %v1327 = vpack.c.b16 %v1205, %v1204
      %v1328 = vpack.c.b16 %v1207, %v1206
      %v1329 = vpack.c.b16 %v1209, %v1208
      %v1330 = vpack.c.b16 %v1211, %v1210
      %v1331 = vpack.c.b16 %v1213, %v1212
      %v1332 = vpack.c.b16 %v1215, %v1214
      %v1333 = vpack.c.b16 %v1217, %v1216
      %v1334 = vpack.c.b16 %v1219, %v1218
      %v1335 = vpack.c.b16 %v1221, %v1220
      %v1336 = vpack.c.b16 %v1223, %v1222
      %v1337 = vpack.c.b16 %v1225, %v1224
      %v1338 = vpack.c.b16 %v1227, %v1226
      %v1339 = vpack.c.b16 %v1229, %v1228
      %v1340 = vpack.c.b16 %v1231, %v1230
      %v1341 = vpack.c.b16 %v1233, %v1232
      %v1342 = vpack.c.b16 %v1235, %v1234
      %v1343 = vpack.c.b16 %v1237, %v1236
      %v1344 = vpack.c.b16 %v1239, %v1238
      %v1345 = vpack.c.b16 %v1241, %v1240
      %v1346 = vpack.c.b16 %v1243, %v1242
      %v1347 = vpack.c.b16 %v1245, %v1244
      %v1348 = vpack.c.b16 %v1247, %v1246
      %v1349 = vpack.c.b16 %v1249, %v1248
      %v1350 = vpack.c.b16 %v1251, %v1250
      %v1351 = vpack.c.b16 %v1253, %v1252
      %v1352 = vpack.c.b16 %v1255, %v1254
      %v1353 = vpack.c.b16 %v1257, %v1256
      %v1354 = vpack.c.b16 %v1259, %v1258
      %v1355 = vpack.c.b16 %v1261, %v1260
      %v1356 = vpack.c.b16 %v1263, %v1262
      %v1357 = vpack.c.b16 %v1265, %v1264
      %v1358 = vpack.c.b16 %v1267, %v1266
      %v1359 = vpack.c.b16 %v1269, %v1268
      %v1360 = vpack.c.b16 %v1271, %v1270
      %v1361 = vpack.c.b16 %v1273, %v1272
      %v1362 = vpack.c.b16 %v1275, %v1274
      %v1363 = vpack.c.b16 %v1277, %v1276
      %v1364 = vpack.c.b16 %v1279, %v1278
      %v1365 = vpack.c.b16 %v1281, %v1280
      %v1366 = vpack.c.b16 %v1283, %v1282
      %v1367 = vpack.c.b16 %v1285, %v1284
      %v1368 = vpack.c.b16 %v1287, %v1286
      %v1369 = vpack.c.b16 %v1289, %v1288
      %v1370 = vpack.c.b16 %v1291, %v1290
      %v1371 = vpack.c.b16 %v1293, %v1292
      %v1372 = vpack.c.b16 %v1295, %v1294
      %v1373 = vpack.c.b16 %v1297, %v1296
      %v1374 = vpack.c.b16 %v1299, %v1298
      %v1375 = vpack.c.b16 %v1301, %v1300
      %v1376 = vpack.c.b16 %v1303, %v1302
      %v1377 = vpack.c.b16 %v1305, %v1304
      %1450 = vmatprep.subr.bf16.mxu0 0
      %1451 = vmatpush1.bf16.msra.mxu0 %v1313
      %1452 = vmatprep.subr.bf16.mxu0 0
      %1453 = vmatpush1.bf16.msra.mxu0 %v1312
      %1454 = vmatprep.subr.bf16.mxu0 0
      %1455 = vmatpush1.bf16.msra.mxu0 %v1311
      %1456 = vmatprep.subr.bf16.mxu0 0
      %1457 = vmatpush1.bf16.msra.mxu0 %v1310
      %1458 = vmatprep.subr.bf16.mxu0 0
      %1459 = vmatpush1.bf16.msra.mxu0 %v1309
      %1460 = vmatprep.subr.bf16.mxu0 0
      %1461 = vmatpush1.bf16.msra.mxu0 %v1308
      %1462 = vmatprep.subr.bf16.mxu0 0
      %1463 = vmatpush1.bf16.msra.mxu0 %v1307
      %1464 = vmatprep.subr.bf16.mxu0 0
      %1465 = vmatpush1.bf16.msra.mxu0 %v1306
      %1466 = vmatprep.subr.bf16.mxu0 0
      %1467 = vmatpush2.bf16.msra.mxu0 %v1321
      %1468 = vmatprep.subr.bf16.mxu0 0
      %1469 = vmatpush2.bf16.msra.mxu0 %v1320
      %1470 = vmatprep.subr.bf16.mxu0 0
      %1471 = vmatpush2.bf16.msra.mxu0 %v1319
      %1472 = vmatprep.subr.bf16.mxu0 0
      %1473 = vmatpush2.bf16.msra.mxu0 %v1318
      %1474 = vmatprep.subr.bf16.mxu0 0
      %1475 = vmatpush2.bf16.msra.mxu0 %v1317
      %1476 = vmatprep.subr.bf16.mxu0 0
      %1477 = vmatpush2.bf16.msra.mxu0 %v1316
      %1478 = vmatprep.subr.bf16.mxu0 0
      %1479 = vmatpush2.bf16.msra.mxu0 %v1315
      %1480 = vmatprep.subr.bf16.mxu0 0
      %1481 = vmatpush2.bf16.msra.mxu0 %v1314
      %1482 = vmatprep.mubr.bf16.mxu0 %v817
      %1483 = vmatmul.mubr.bf16.gmra.mxu0 %v816
      %v1484 = vpop.f32.mrf.mxu0
      %v1485 = vadd.f32 %v1016, %v1484
      %v1486 = vpop.f32.mrf.mxu0
      %v1487 = vpop.f32.mrf.mxu0
      %v1488 = vadd.f32 %v1016, %v1487
      %v1489 = vpop.f32.mrf.mxu0
      %1490 = vmatprep.mubr.bf16.mxu0 %v820
      %1491 = vmatmul.mubr.bf16.gmra.mxu0 %v819
      %v1492 = vpop.f32.mrf.mxu0
      %v1493 = vadd.f32 %v1016, %v1492
      %v1494 = vpop.f32.mrf.mxu0
      %v1495 = vpop.f32.mrf.mxu0
      %v1496 = vadd.f32 %v1016, %v1495
      %v1497 = vpop.f32.mrf.mxu0
      %1498 = vmatprep.mubr.bf16.mxu0 %v823
      %1499 = vmatmul.mubr.bf16.gmra.mxu0 %v822
      %v1500 = vpop.f32.mrf.mxu0
      %v1501 = vadd.f32 %v1016, %v1500
      %v1502 = vpop.f32.mrf.mxu0
      %v1503 = vpop.f32.mrf.mxu0
      %v1504 = vadd.f32 %v1016, %v1503
      %v1505 = vpop.f32.mrf.mxu0
      %1506 = vmatprep.mubr.bf16.mxu0 %v826
      %1507 = vmatmul.mubr.bf16.gmra.mxu0 %v825
      %v1508 = vpop.f32.mrf.mxu0
      %v1509 = vadd.f32 %v1016, %v1508
      %v1510 = vpop.f32.mrf.mxu0
      %v1511 = vpop.f32.mrf.mxu0
      %v1512 = vadd.f32 %v1016, %v1511
      %v1513 = vpop.f32.mrf.mxu0
      %1514 = vmatprep.mubr.bf16.mxu0 %v829
      %1515 = vmatmul.mubr.bf16.gmra.mxu0 %v828
      %v1516 = vpop.f32.mrf.mxu0
      %v1517 = vadd.f32 %v1016, %v1516
      %v1518 = vpop.f32.mrf.mxu0
      %v1519 = vpop.f32.mrf.mxu0
      %v1520 = vadd.f32 %v1016, %v1519
      %v1521 = vpop.f32.mrf.mxu0
      %1522 = vmatprep.mubr.bf16.mxu0 %v832
      %1523 = vmatmul.mubr.bf16.gmra.mxu0 %v831
      %v1524 = vpop.f32.mrf.mxu0
      %v1525 = vadd.f32 %v1016, %v1524
      %v1526 = vpop.f32.mrf.mxu0
      %v1527 = vpop.f32.mrf.mxu0
      %v1528 = vadd.f32 %v1016, %v1527
      %v1529 = vpop.f32.mrf.mxu0
      %1530 = vmatprep.mubr.bf16.mxu0 %v835
      %1531 = vmatmul.mubr.bf16.gmra.mxu0 %v834
      %v1532 = vpop.f32.mrf.mxu0
      %v1533 = vadd.f32 %v1016, %v1532
      %v1534 = vpop.f32.mrf.mxu0
      %v1535 = vpop.f32.mrf.mxu0
      %v1536 = vadd.f32 %v1016, %v1535
      %v1537 = vpop.f32.mrf.mxu0
      %1538 = vmatprep.mubr.bf16.mxu0 %v838
      %1539 = vmatmul.mubr.bf16.gmra.mxu0 %v837
      %v1540 = vpop.f32.mrf.mxu0
      %v1541 = vadd.f32 %v1016, %v1540
      %v1542 = vpop.f32.mrf.mxu0
      %v1543 = vpop.f32.mrf.mxu0
      %v1544 = vadd.f32 %v1016, %v1543
      %v1545 = vpop.f32.mrf.mxu0
      %1546 = vmatprep.mubr.bf16.mxu0 %v841
      %1547 = vmatmul.mubr.bf16.gmra.mxu0 %v840
      %v1548 = vpop.f32.mrf.mxu0
      %v1549 = vadd.f32 %v1016, %v1548
      %v1550 = vpop.f32.mrf.mxu0
      %v1551 = vpop.f32.mrf.mxu0
      %v1552 = vadd.f32 %v1016, %v1551
      %v1553 = vpop.f32.mrf.mxu0
      %1554 = vmatprep.mubr.bf16.mxu0 %v844
      %1555 = vmatmul.mubr.bf16.gmra.mxu0 %v843
      %v1556 = vpop.f32.mrf.mxu0
      %v1557 = vadd.f32 %v1016, %v1556
      %v1558 = vpop.f32.mrf.mxu0
      %v1559 = vpop.f32.mrf.mxu0
      %v1560 = vadd.f32 %v1016, %v1559
      %v1561 = vpop.f32.mrf.mxu0
      %1562 = vmatprep.mubr.bf16.mxu0 %v847
      %1563 = vmatmul.mubr.bf16.gmra.mxu0 %v846
      %v1564 = vpop.f32.mrf.mxu0
      %v1565 = vadd.f32 %v1016, %v1564
      %v1566 = vpop.f32.mrf.mxu0
      %v1567 = vpop.f32.mrf.mxu0
      %v1568 = vadd.f32 %v1016, %v1567
      %v1569 = vpop.f32.mrf.mxu0
      %1570 = vmatprep.mubr.bf16.mxu0 %v850
      %1571 = vmatmul.mubr.bf16.gmra.mxu0 %v849
      %v1572 = vpop.f32.mrf.mxu0
      %v1573 = vadd.f32 %v1016, %v1572
      %v1574 = vpop.f32.mrf.mxu0
      %v1575 = vpop.f32.mrf.mxu0
      %v1576 = vadd.f32 %v1016, %v1575
      %v1577 = vpop.f32.mrf.mxu0
      %1578 = vmatprep.mubr.bf16.mxu0 %v853
      %1579 = vmatmul.mubr.bf16.gmra.mxu0 %v852
      %v1580 = vpop.f32.mrf.mxu0
      %v1581 = vadd.f32 %v1016, %v1580
      %v1582 = vpop.f32.mrf.mxu0
      %v1583 = vpop.f32.mrf.mxu0
      %v1584 = vadd.f32 %v1016, %v1583
      %v1585 = vpop.f32.mrf.mxu0
      %1586 = vmatprep.mubr.bf16.mxu0 %v856
      %1587 = vmatmul.mubr.bf16.gmra.mxu0 %v855
      %v1588 = vpop.f32.mrf.mxu0
      %v1589 = vadd.f32 %v1016, %v1588
      %v1590 = vpop.f32.mrf.mxu0
      %v1591 = vpop.f32.mrf.mxu0
      %v1592 = vadd.f32 %v1016, %v1591
      %v1593 = vpop.f32.mrf.mxu0
      %1594 = vmatprep.mubr.bf16.mxu0 %v859
      %1595 = vmatmul.mubr.bf16.gmra.mxu0 %v858
      %v1596 = vpop.f32.mrf.mxu0
      %v1597 = vadd.f32 %v1016, %v1596
      %v1598 = vpop.f32.mrf.mxu0
      %v1599 = vpop.f32.mrf.mxu0
      %v1600 = vadd.f32 %v1016, %v1599
      %v1601 = vpop.f32.mrf.mxu0
      %1602 = vmatprep.mubr.bf16.mxu0 %v862
      %1603 = vmatmul.mubr.bf16.gmra.mxu0 %v861
      %v1604 = vpop.f32.mrf.mxu0
      %v1605 = vadd.f32 %v1016, %v1604
      %v1606 = vpop.f32.mrf.mxu0
      %v1607 = vpop.f32.mrf.mxu0
      %v1608 = vadd.f32 %v1016, %v1607
      %v1609 = vpop.f32.mrf.mxu0
      %1610 = vdwg.mxu0
      %1611 = vmatprep.subr.bf16.mxu0 0
      %1612 = vmatpush1.bf16.msra.mxu0 %v1329
      %1613 = vmatprep.subr.bf16.mxu0 0
      %1614 = vmatpush1.bf16.msra.mxu0 %v1328
      %1615 = vmatprep.subr.bf16.mxu0 0
      %1616 = vmatpush1.bf16.msra.mxu0 %v1327
      %1617 = vmatprep.subr.bf16.mxu0 0
      %1618 = vmatpush1.bf16.msra.mxu0 %v1326
      %1619 = vmatprep.subr.bf16.mxu0 0
      %1620 = vmatpush1.bf16.msra.mxu0 %v1325
      %1621 = vmatprep.subr.bf16.mxu0 0
      %1622 = vmatpush1.bf16.msra.mxu0 %v1324
      %1623 = vmatprep.subr.bf16.mxu0 0
      %1624 = vmatpush1.bf16.msra.mxu0 %v1323
      %1625 = vmatprep.subr.bf16.mxu0 0
      %1626 = vmatpush1.bf16.msra.mxu0 %v1322
      %1627 = vmatprep.subr.bf16.mxu0 0
      %1628 = vmatpush2.bf16.msra.mxu0 %v1337
      %1629 = vmatprep.subr.bf16.mxu0 0
      %1630 = vmatpush2.bf16.msra.mxu0 %v1336
      %1631 = vmatprep.subr.bf16.mxu0 0
      %1632 = vmatpush2.bf16.msra.mxu0 %v1335
      %1633 = vmatprep.subr.bf16.mxu0 0
      %1634 = vmatpush2.bf16.msra.mxu0 %v1334
      %1635 = vmatprep.subr.bf16.mxu0 0
      %1636 = vmatpush2.bf16.msra.mxu0 %v1333
      %1637 = vmatprep.subr.bf16.mxu0 0
      %1638 = vmatpush2.bf16.msra.mxu0 %v1332
      %1639 = vmatprep.subr.bf16.mxu0 0
      %1640 = vmatpush2.bf16.msra.mxu0 %v1331
      %1641 = vmatprep.subr.bf16.mxu0 0
      %1642 = vmatpush2.bf16.msra.mxu0 %v1330
      %1643 = vmatprep.mubr.bf16.mxu0 %v819
      %1644 = vmatmul.mubr.bf16.gmra.mxu0 %v818
      %v1645 = vpop.f32.mrf.mxu0
      %v1646 = vadd.f32 %v1485, %v1645
      %v1647 = vpop.f32.mrf.mxu0
      %v1648 = vpop.f32.mrf.mxu0
      %v1649 = vadd.f32 %v1488, %v1648
      %v1650 = vpop.f32.mrf.mxu0
      %1651 = vmatprep.mubr.bf16.mxu0 %v822
      %1652 = vmatmul.mubr.bf16.gmra.mxu0 %v821
      %v1653 = vpop.f32.mrf.mxu0
      %v1654 = vadd.f32 %v1493, %v1653
      %v1655 = vpop.f32.mrf.mxu0
      %v1656 = vpop.f32.mrf.mxu0
      %v1657 = vadd.f32 %v1496, %v1656
      %v1658 = vpop.f32.mrf.mxu0
      %1659 = vmatprep.mubr.bf16.mxu0 %v825
      %1660 = vmatmul.mubr.bf16.gmra.mxu0 %v824
      %v1661 = vpop.f32.mrf.mxu0
      %v1662 = vadd.f32 %v1501, %v1661
      %v1663 = vpop.f32.mrf.mxu0
      %v1664 = vpop.f32.mrf.mxu0
      %v1665 = vadd.f32 %v1504, %v1664
      %v1666 = vpop.f32.mrf.mxu0
      %1667 = vmatprep.mubr.bf16.mxu0 %v828
      %1668 = vmatmul.mubr.bf16.gmra.mxu0 %v827
      %v1669 = vpop.f32.mrf.mxu0
      %v1670 = vadd.f32 %v1509, %v1669
      %v1671 = vpop.f32.mrf.mxu0
      %v1672 = vpop.f32.mrf.mxu0
      %v1673 = vadd.f32 %v1512, %v1672
      %v1674 = vpop.f32.mrf.mxu0
      %1675 = vmatprep.mubr.bf16.mxu0 %v831
      %1676 = vmatmul.mubr.bf16.gmra.mxu0 %v830
      %v1677 = vpop.f32.mrf.mxu0
      %v1678 = vadd.f32 %v1517, %v1677
      %v1679 = vpop.f32.mrf.mxu0
      %v1680 = vpop.f32.mrf.mxu0
      %v1681 = vadd.f32 %v1520, %v1680
      %v1682 = vpop.f32.mrf.mxu0
      %1683 = vmatprep.mubr.bf16.mxu0 %v834
      %1684 = vmatmul.mubr.bf16.gmra.mxu0 %v833
      %v1685 = vpop.f32.mrf.mxu0
      %v1686 = vadd.f32 %v1525, %v1685
      %v1687 = vpop.f32.mrf.mxu0
      %v1688 = vpop.f32.mrf.mxu0
      %v1689 = vadd.f32 %v1528, %v1688
      %v1690 = vpop.f32.mrf.mxu0
      %1691 = vmatprep.mubr.bf16.mxu0 %v837
      %1692 = vmatmul.mubr.bf16.gmra.mxu0 %v836
      %v1693 = vpop.f32.mrf.mxu0
      %v1694 = vadd.f32 %v1533, %v1693
      %v1695 = vpop.f32.mrf.mxu0
      %v1696 = vpop.f32.mrf.mxu0
      %v1697 = vadd.f32 %v1536, %v1696
      %v1698 = vpop.f32.mrf.mxu0
      %1699 = vmatprep.mubr.bf16.mxu0 %v840
      %1700 = vmatmul.mubr.bf16.gmra.mxu0 %v839
      %v1701 = vpop.f32.mrf.mxu0
      %v1702 = vadd.f32 %v1541, %v1701
      %v1703 = vpop.f32.mrf.mxu0
      %v1704 = vpop.f32.mrf.mxu0
      %v1705 = vadd.f32 %v1544, %v1704
      %v1706 = vpop.f32.mrf.mxu0
      %1707 = vmatprep.mubr.bf16.mxu0 %v843
      %1708 = vmatmul.mubr.bf16.gmra.mxu0 %v842
      %v1709 = vpop.f32.mrf.mxu0
      %v1710 = vadd.f32 %v1549, %v1709
      %v1711 = vpop.f32.mrf.mxu0
      %v1712 = vpop.f32.mrf.mxu0
      %v1713 = vadd.f32 %v1552, %v1712
      %v1714 = vpop.f32.mrf.mxu0
      %1715 = vmatprep.mubr.bf16.mxu0 %v846
      %1716 = vmatmul.mubr.bf16.gmra.mxu0 %v845
      %v1717 = vpop.f32.mrf.mxu0
      %v1718 = vadd.f32 %v1557, %v1717
      %v1719 = vpop.f32.mrf.mxu0
      %v1720 = vpop.f32.mrf.mxu0
      %v1721 = vadd.f32 %v1560, %v1720
      %v1722 = vpop.f32.mrf.mxu0
      %1723 = vmatprep.mubr.bf16.mxu0 %v849
      %1724 = vmatmul.mubr.bf16.gmra.mxu0 %v848
      %v1725 = vpop.f32.mrf.mxu0
      %v1726 = vadd.f32 %v1565, %v1725
      %v1727 = vpop.f32.mrf.mxu0
      %v1728 = vpop.f32.mrf.mxu0
      %v1729 = vadd.f32 %v1568, %v1728
      %v1730 = vpop.f32.mrf.mxu0
      %1731 = vmatprep.mubr.bf16.mxu0 %v852
      %1732 = vmatmul.mubr.bf16.gmra.mxu0 %v851
      %v1733 = vpop.f32.mrf.mxu0
      %v1734 = vadd.f32 %v1573, %v1733
      %v1735 = vpop.f32.mrf.mxu0
      %v1736 = vpop.f32.mrf.mxu0
      %v1737 = vadd.f32 %v1576, %v1736
      %v1738 = vpop.f32.mrf.mxu0
      %1739 = vmatprep.mubr.bf16.mxu0 %v855
      %1740 = vmatmul.mubr.bf16.gmra.mxu0 %v854
      %v1741 = vpop.f32.mrf.mxu0
      %v1742 = vadd.f32 %v1581, %v1741
      %v1743 = vpop.f32.mrf.mxu0
      %v1744 = vpop.f32.mrf.mxu0
      %v1745 = vadd.f32 %v1584, %v1744
      %v1746 = vpop.f32.mrf.mxu0
      %1747 = vmatprep.mubr.bf16.mxu0 %v858
      %1748 = vmatmul.mubr.bf16.gmra.mxu0 %v857
      %v1749 = vpop.f32.mrf.mxu0
      %v1750 = vadd.f32 %v1589, %v1749
      %v1751 = vpop.f32.mrf.mxu0
      %v1752 = vpop.f32.mrf.mxu0
      %v1753 = vadd.f32 %v1592, %v1752
      %v1754 = vpop.f32.mrf.mxu0
      %1755 = vmatprep.mubr.bf16.mxu0 %v861
      %1756 = vmatmul.mubr.bf16.gmra.mxu0 %v860
      %v1757 = vpop.f32.mrf.mxu0
      %v1758 = vadd.f32 %v1597, %v1757
      %v1759 = vpop.f32.mrf.mxu0
      %v1760 = vpop.f32.mrf.mxu0
      %v1761 = vadd.f32 %v1600, %v1760
      %v1762 = vpop.f32.mrf.mxu0
      %1763 = vmatprep.mubr.bf16.mxu0 %v864
      %1764 = vmatmul.mubr.bf16.gmra.mxu0 %v863
      %v1765 = vpop.f32.mrf.mxu0
      %v1766 = vadd.f32 %v1605, %v1765
      %v1767 = vpop.f32.mrf.mxu0
      %v1768 = vpop.f32.mrf.mxu0
      %v1769 = vadd.f32 %v1608, %v1768
      %v1770 = vpop.f32.mrf.mxu0
      %1771 = vdwg.mxu0
      %1772 = vmatprep.subr.bf16.mxu0 0
      %1773 = vmatpush1.bf16.msra.mxu0 %v1345
      %1774 = vmatprep.subr.bf16.mxu0 0
      %1775 = vmatpush1.bf16.msra.mxu0 %v1344
      %1776 = vmatprep.subr.bf16.mxu0 0
      %1777 = vmatpush1.bf16.msra.mxu0 %v1343
      %1778 = vmatprep.subr.bf16.mxu0 0
      %1779 = vmatpush1.bf16.msra.mxu0 %v1342
      %1780 = vmatprep.subr.bf16.mxu0 0
      %1781 = vmatpush1.bf16.msra.mxu0 %v1341
      %1782 = vmatprep.subr.bf16.mxu0 0
      %1783 = vmatpush1.bf16.msra.mxu0 %v1340
      %1784 = vmatprep.subr.bf16.mxu0 0
      %1785 = vmatpush1.bf16.msra.mxu0 %v1339
      %1786 = vmatprep.subr.bf16.mxu0 0
      %1787 = vmatpush1.bf16.msra.mxu0 %v1338
      %1788 = vmatprep.subr.bf16.mxu0 0
      %1789 = vmatpush2.bf16.msra.mxu0 %v1353
      %1790 = vmatprep.subr.bf16.mxu0 0
      %1791 = vmatpush2.bf16.msra.mxu0 %v1352
      %1792 = vmatprep.subr.bf16.mxu0 0
      %1793 = vmatpush2.bf16.msra.mxu0 %v1351
      %1794 = vmatprep.subr.bf16.mxu0 0
      %1795 = vmatpush2.bf16.msra.mxu0 %v1350
      %1796 = vmatprep.subr.bf16.mxu0 0
      %1797 = vmatpush2.bf16.msra.mxu0 %v1349
      %1798 = vmatprep.subr.bf16.mxu0 0
      %1799 = vmatpush2.bf16.msra.mxu0 %v1348
      %1800 = vmatprep.subr.bf16.mxu0 0
      %1801 = vmatpush2.bf16.msra.mxu0 %v1347
      %1802 = vmatprep.subr.bf16.mxu0 0
      %1803 = vmatpush2.bf16.msra.mxu0 %v1346
      %1804 = vmatprep.mubr.bf16.mxu0 %v821
      %1805 = vmatmul.mubr.bf16.gmra.mxu0 %v820
      %v1806 = vpop.f32.mrf.mxu0
      %v1807 = vadd.f32 %v1646, %v1806
      %v1808 = vpop.f32.mrf.mxu0
      %v1809 = vpop.f32.mrf.mxu0
      %v1810 = vadd.f32 %v1649, %v1809
      %v1811 = vpop.f32.mrf.mxu0
      %1812 = vmatprep.mubr.bf16.mxu0 %v824
      %1813 = vmatmul.mubr.bf16.gmra.mxu0 %v823
      %v1814 = vpop.f32.mrf.mxu0
      %v1815 = vadd.f32 %v1654, %v1814
      %v1816 = vpop.f32.mrf.mxu0
      %v1817 = vpop.f32.mrf.mxu0
      %v1818 = vadd.f32 %v1657, %v1817
      %v1819 = vpop.f32.mrf.mxu0
      %1820 = vmatprep.mubr.bf16.mxu0 %v827
      %1821 = vmatmul.mubr.bf16.gmra.mxu0 %v826
      %v1822 = vpop.f32.mrf.mxu0
      %v1823 = vadd.f32 %v1662, %v1822
      %v1824 = vpop.f32.mrf.mxu0
      %v1825 = vpop.f32.mrf.mxu0
      %v1826 = vadd.f32 %v1665, %v1825
      %v1827 = vpop.f32.mrf.mxu0
      %1828 = vmatprep.mubr.bf16.mxu0 %v830
      %1829 = vmatmul.mubr.bf16.gmra.mxu0 %v829
      %v1830 = vpop.f32.mrf.mxu0
      %v1831 = vadd.f32 %v1670, %v1830
      %v1832 = vpop.f32.mrf.mxu0
      %v1833 = vpop.f32.mrf.mxu0
      %v1834 = vadd.f32 %v1673, %v1833
      %v1835 = vpop.f32.mrf.mxu0
      %1836 = vmatprep.mubr.bf16.mxu0 %v833
      %1837 = vmatmul.mubr.bf16.gmra.mxu0 %v832
      %v1838 = vpop.f32.mrf.mxu0
      %v1839 = vadd.f32 %v1678, %v1838
      %v1840 = vpop.f32.mrf.mxu0
      %v1841 = vpop.f32.mrf.mxu0
      %v1842 = vadd.f32 %v1681, %v1841
      %v1843 = vpop.f32.mrf.mxu0
      %1844 = vmatprep.mubr.bf16.mxu0 %v836
      %1845 = vmatmul.mubr.bf16.gmra.mxu0 %v835
      %v1846 = vpop.f32.mrf.mxu0
      %v1847 = vadd.f32 %v1686, %v1846
      %v1848 = vpop.f32.mrf.mxu0
      %v1849 = vpop.f32.mrf.mxu0
      %v1850 = vadd.f32 %v1689, %v1849
      %v1851 = vpop.f32.mrf.mxu0
      %1852 = vmatprep.mubr.bf16.mxu0 %v839
      %1853 = vmatmul.mubr.bf16.gmra.mxu0 %v838
      %v1854 = vpop.f32.mrf.mxu0
      %v1855 = vadd.f32 %v1694, %v1854
      %v1856 = vpop.f32.mrf.mxu0
      %v1857 = vpop.f32.mrf.mxu0
      %v1858 = vadd.f32 %v1697, %v1857
      %v1859 = vpop.f32.mrf.mxu0
      %1860 = vmatprep.mubr.bf16.mxu0 %v842
      %1861 = vmatmul.mubr.bf16.gmra.mxu0 %v841
      %v1862 = vpop.f32.mrf.mxu0
      %v1863 = vadd.f32 %v1702, %v1862
      %v1864 = vpop.f32.mrf.mxu0
      %v1865 = vpop.f32.mrf.mxu0
      %v1866 = vadd.f32 %v1705, %v1865
      %v1867 = vpop.f32.mrf.mxu0
      %1868 = vmatprep.mubr.bf16.mxu0 %v845
      %1869 = vmatmul.mubr.bf16.gmra.mxu0 %v844
      %v1870 = vpop.f32.mrf.mxu0
      %v1871 = vadd.f32 %v1710, %v1870
      %v1872 = vpop.f32.mrf.mxu0
      %v1873 = vpop.f32.mrf.mxu0
      %v1874 = vadd.f32 %v1713, %v1873
      %v1875 = vpop.f32.mrf.mxu0
      %1876 = vmatprep.mubr.bf16.mxu0 %v848
      %1877 = vmatmul.mubr.bf16.gmra.mxu0 %v847
      %v1878 = vpop.f32.mrf.mxu0
      %v1879 = vadd.f32 %v1718, %v1878
      %v1880 = vpop.f32.mrf.mxu0
      %v1881 = vpop.f32.mrf.mxu0
      %v1882 = vadd.f32 %v1721, %v1881
      %v1883 = vpop.f32.mrf.mxu0
      %1884 = vmatprep.mubr.bf16.mxu0 %v851
      %1885 = vmatmul.mubr.bf16.gmra.mxu0 %v850
      %v1886 = vpop.f32.mrf.mxu0
      %v1887 = vadd.f32 %v1726, %v1886
      %v1888 = vpop.f32.mrf.mxu0
      %v1889 = vpop.f32.mrf.mxu0
      %v1890 = vadd.f32 %v1729, %v1889
      %v1891 = vpop.f32.mrf.mxu0
      %1892 = vmatprep.mubr.bf16.mxu0 %v854
      %1893 = vmatmul.mubr.bf16.gmra.mxu0 %v853
      %v1894 = vpop.f32.mrf.mxu0
      %v1895 = vadd.f32 %v1734, %v1894
      %v1896 = vpop.f32.mrf.mxu0
      %v1897 = vpop.f32.mrf.mxu0
      %v1898 = vadd.f32 %v1737, %v1897
      %v1899 = vpop.f32.mrf.mxu0
      %1900 = vmatprep.mubr.bf16.mxu0 %v857
      %1901 = vmatmul.mubr.bf16.gmra.mxu0 %v856
      %v1902 = vpop.f32.mrf.mxu0
      %v1903 = vadd.f32 %v1742, %v1902
      %v1904 = vpop.f32.mrf.mxu0
      %v1905 = vpop.f32.mrf.mxu0
      %v1906 = vadd.f32 %v1745, %v1905
      %v1907 = vpop.f32.mrf.mxu0
      %1908 = vmatprep.mubr.bf16.mxu0 %v860
      %1909 = vmatmul.mubr.bf16.gmra.mxu0 %v859
      %v1910 = vpop.f32.mrf.mxu0
      %v1911 = vadd.f32 %v1750, %v1910
      %v1912 = vpop.f32.mrf.mxu0
      %v1913 = vpop.f32.mrf.mxu0
      %v1914 = vadd.f32 %v1753, %v1913
      %v1915 = vpop.f32.mrf.mxu0
      %1916 = vmatprep.mubr.bf16.mxu0 %v863
      %1917 = vmatmul.mubr.bf16.gmra.mxu0 %v862
      %v1918 = vpop.f32.mrf.mxu0
      %v1919 = vadd.f32 %v1758, %v1918
      %v1920 = vpop.f32.mrf.mxu0
      %v1921 = vpop.f32.mrf.mxu0
      %v1922 = vadd.f32 %v1761, %v1921
      %v1923 = vpop.f32.mrf.mxu0
      %1924 = vmatprep.mubr.bf16.mxu0 %v866
      %1925 = vmatmul.mubr.bf16.gmra.mxu0 %v865
      %v1926 = vpop.f32.mrf.mxu0
      %v1927 = vadd.f32 %v1766, %v1926
      %v1928 = vpop.f32.mrf.mxu0
      %v1929 = vpop.f32.mrf.mxu0
      %v1930 = vadd.f32 %v1769, %v1929
      %v1931 = vpop.f32.mrf.mxu0
      %1932 = vdwg.mxu0
      %1933 = vmatprep.subr.bf16.mxu0 0
      %1934 = vmatpush1.bf16.msra.mxu0 %v1361
      %1935 = vmatprep.subr.bf16.mxu0 0
      %1936 = vmatpush1.bf16.msra.mxu0 %v1360
      %1937 = vmatprep.subr.bf16.mxu0 0
      %1938 = vmatpush1.bf16.msra.mxu0 %v1359
      %1939 = vmatprep.subr.bf16.mxu0 0
      %1940 = vmatpush1.bf16.msra.mxu0 %v1358
      %1941 = vmatprep.subr.bf16.mxu0 0
      %1942 = vmatpush1.bf16.msra.mxu0 %v1357
      %1943 = vmatprep.subr.bf16.mxu0 0
      %1944 = vmatpush1.bf16.msra.mxu0 %v1356
      %1945 = vmatprep.subr.bf16.mxu0 0
      %1946 = vmatpush1.bf16.msra.mxu0 %v1355
      %1947 = vmatprep.subr.bf16.mxu0 0
      %1948 = vmatpush1.bf16.msra.mxu0 %v1354
      %1949 = vmatprep.subr.bf16.mxu0 0
      %1950 = vmatpush2.bf16.msra.mxu0 %v1369
      %1951 = vmatprep.subr.bf16.mxu0 0
      %1952 = vmatpush2.bf16.msra.mxu0 %v1368
      %1953 = vmatprep.subr.bf16.mxu0 0
      %1954 = vmatpush2.bf16.msra.mxu0 %v1367
      %1955 = vmatprep.subr.bf16.mxu0 0
      %1956 = vmatpush2.bf16.msra.mxu0 %v1366
      %1957 = vmatprep.subr.bf16.mxu0 0
      %1958 = vmatpush2.bf16.msra.mxu0 %v1365
      %1959 = vmatprep.subr.bf16.mxu0 0
      %1960 = vmatpush2.bf16.msra.mxu0 %v1364
      %1961 = vmatprep.subr.bf16.mxu0 0
      %1962 = vmatpush2.bf16.msra.mxu0 %v1363
      %1963 = vmatprep.subr.bf16.mxu0 0
      %1964 = vmatpush2.bf16.msra.mxu0 %v1362
      %1965 = vmatprep.mubr.bf16.mxu0 %v823
      %1966 = vmatmul.mubr.bf16.gmra.mxu0 %v822
      %v1967 = vpop.f32.mrf.mxu0
      %v1968 = vadd.f32 %v1807, %v1967
      %v1969 = vpop.f32.mrf.mxu0
      %v1970 = vpop.f32.mrf.mxu0
      %v1971 = vadd.f32 %v1810, %v1970
      %v1972 = vpop.f32.mrf.mxu0
      %1973 = vmatprep.mubr.bf16.mxu0 %v826
      %1974 = vmatmul.mubr.bf16.gmra.mxu0 %v825
      %v1975 = vpop.f32.mrf.mxu0
      %v1976 = vadd.f32 %v1815, %v1975
      %v1977 = vpop.f32.mrf.mxu0
      %v1978 = vpop.f32.mrf.mxu0
      %v1979 = vadd.f32 %v1818, %v1978
      %v1980 = vpop.f32.mrf.mxu0
      %1981 = vmatprep.mubr.bf16.mxu0 %v829
      %1982 = vmatmul.mubr.bf16.gmra.mxu0 %v828
      %v1983 = vpop.f32.mrf.mxu0
      %v1984 = vadd.f32 %v1823, %v1983
      %v1985 = vpop.f32.mrf.mxu0
      %v1986 = vpop.f32.mrf.mxu0
      %v1987 = vadd.f32 %v1826, %v1986
      %v1988 = vpop.f32.mrf.mxu0
      %1989 = vmatprep.mubr.bf16.mxu0 %v832
      %1990 = vmatmul.mubr.bf16.gmra.mxu0 %v831
      %v1991 = vpop.f32.mrf.mxu0
      %v1992 = vadd.f32 %v1831, %v1991
      %v1993 = vpop.f32.mrf.mxu0
      %v1994 = vpop.f32.mrf.mxu0
      %v1995 = vadd.f32 %v1834, %v1994
      %v1996 = vpop.f32.mrf.mxu0
      %1997 = vmatprep.mubr.bf16.mxu0 %v835
      %1998 = vmatmul.mubr.bf16.gmra.mxu0 %v834
      %v1999 = vpop.f32.mrf.mxu0
      %v2000 = vadd.f32 %v1839, %v1999
      %v2001 = vpop.f32.mrf.mxu0
      %v2002 = vpop.f32.mrf.mxu0
      %v2003 = vadd.f32 %v1842, %v2002
      %v2004 = vpop.f32.mrf.mxu0
      %2005 = vmatprep.mubr.bf16.mxu0 %v838
      %2006 = vmatmul.mubr.bf16.gmra.mxu0 %v837
      %v2007 = vpop.f32.mrf.mxu0
      %v2008 = vadd.f32 %v1847, %v2007
      %v2009 = vpop.f32.mrf.mxu0
      %v2010 = vpop.f32.mrf.mxu0
      %v2011 = vadd.f32 %v1850, %v2010
      %v2012 = vpop.f32.mrf.mxu0
      %2013 = vmatprep.mubr.bf16.mxu0 %v841
      %2014 = vmatmul.mubr.bf16.gmra.mxu0 %v840
      %v2015 = vpop.f32.mrf.mxu0
      %v2016 = vadd.f32 %v1855, %v2015
      %v2017 = vpop.f32.mrf.mxu0
      %v2018 = vpop.f32.mrf.mxu0
      %v2019 = vadd.f32 %v1858, %v2018
      %v2020 = vpop.f32.mrf.mxu0
      %2021 = vmatprep.mubr.bf16.mxu0 %v844
      %2022 = vmatmul.mubr.bf16.gmra.mxu0 %v843
      %v2023 = vpop.f32.mrf.mxu0
      %v2024 = vadd.f32 %v1863, %v2023
      %v2025 = vpop.f32.mrf.mxu0
      %v2026 = vpop.f32.mrf.mxu0
      %v2027 = vadd.f32 %v1866, %v2026
      %v2028 = vpop.f32.mrf.mxu0
      %2029 = vmatprep.mubr.bf16.mxu0 %v847
      %2030 = vmatmul.mubr.bf16.gmra.mxu0 %v846
      %v2031 = vpop.f32.mrf.mxu0
      %v2032 = vadd.f32 %v1871, %v2031
      %v2033 = vpop.f32.mrf.mxu0
      %v2034 = vpop.f32.mrf.mxu0
      %v2035 = vadd.f32 %v1874, %v2034
      %v2036 = vpop.f32.mrf.mxu0
      %2037 = vmatprep.mubr.bf16.mxu0 %v850
      %2038 = vmatmul.mubr.bf16.gmra.mxu0 %v849
      %v2039 = vpop.f32.mrf.mxu0
      %v2040 = vadd.f32 %v1879, %v2039
      %v2041 = vpop.f32.mrf.mxu0
      %v2042 = vpop.f32.mrf.mxu0
      %v2043 = vadd.f32 %v1882, %v2042
      %v2044 = vpop.f32.mrf.mxu0
      %2045 = vmatprep.mubr.bf16.mxu0 %v853
      %2046 = vmatmul.mubr.bf16.gmra.mxu0 %v852
      %v2047 = vpop.f32.mrf.mxu0
      %v2048 = vadd.f32 %v1887, %v2047
      %v2049 = vpop.f32.mrf.mxu0
      %v2050 = vpop.f32.mrf.mxu0
      %v2051 = vadd.f32 %v1890, %v2050
      %v2052 = vpop.f32.mrf.mxu0
      %2053 = vmatprep.mubr.bf16.mxu0 %v856
      %2054 = vmatmul.mubr.bf16.gmra.mxu0 %v855
      %v2055 = vpop.f32.mrf.mxu0
      %v2056 = vadd.f32 %v1895, %v2055
      %v2057 = vpop.f32.mrf.mxu0
      %v2058 = vpop.f32.mrf.mxu0
      %v2059 = vadd.f32 %v1898, %v2058
      %v2060 = vpop.f32.mrf.mxu0
      %2061 = vmatprep.mubr.bf16.mxu0 %v859
      %2062 = vmatmul.mubr.bf16.gmra.mxu0 %v858
      %v2063 = vpop.f32.mrf.mxu0
      %v2064 = vadd.f32 %v1903, %v2063
      %v2065 = vpop.f32.mrf.mxu0
      %v2066 = vpop.f32.mrf.mxu0
      %v2067 = vadd.f32 %v1906, %v2066
      %v2068 = vpop.f32.mrf.mxu0
      %2069 = vmatprep.mubr.bf16.mxu0 %v862
      %2070 = vmatmul.mubr.bf16.gmra.mxu0 %v861
      %v2071 = vpop.f32.mrf.mxu0
      %v2072 = vadd.f32 %v1911, %v2071
      %v2073 = vpop.f32.mrf.mxu0
      %v2074 = vpop.f32.mrf.mxu0
      %v2075 = vadd.f32 %v1914, %v2074
      %v2076 = vpop.f32.mrf.mxu0
      %2077 = vmatprep.mubr.bf16.mxu0 %v865
      %2078 = vmatmul.mubr.bf16.gmra.mxu0 %v864
      %v2079 = vpop.f32.mrf.mxu0
      %v2080 = vadd.f32 %v1919, %v2079
      %v2081 = vpop.f32.mrf.mxu0
      %v2082 = vpop.f32.mrf.mxu0
      %v2083 = vadd.f32 %v1922, %v2082
      %v2084 = vpop.f32.mrf.mxu0
      %2085 = vmatprep.mubr.bf16.mxu0 %v817
      %2086 = vmatmul.mubr.bf16.gmra.mxu0 %v816
      %v2087 = vpop.f32.mrf.mxu0
      %v2088 = vadd.f32 %v1927, %v2087
      %v2089 = vpop.f32.mrf.mxu0
      %v2090 = vpop.f32.mrf.mxu0
      %v2091 = vadd.f32 %v1930, %v2090
      %v2092 = vpop.f32.mrf.mxu0
      %2093 = vdwg.mxu0
      %2094 = vmatprep.subr.bf16.mxu0 0
      %2095 = vmatpush1.bf16.msra.mxu0 %v1377
      %2096 = vmatprep.subr.bf16.mxu0 0
      %2097 = vmatpush1.bf16.msra.mxu0 %v1376
      %2098 = vmatprep.subr.bf16.mxu0 0
      %2099 = vmatpush1.bf16.msra.mxu0 %v1375
      %2100 = vmatprep.subr.bf16.mxu0 0
      %2101 = vmatpush1.bf16.msra.mxu0 %v1374
      %2102 = vmatprep.subr.bf16.mxu0 0
      %2103 = vmatpush1.bf16.msra.mxu0 %v1373
      %2104 = vmatprep.subr.bf16.mxu0 0
      %2105 = vmatpush1.bf16.msra.mxu0 %v1372
      %2106 = vmatprep.subr.bf16.mxu0 0
      %2107 = vmatpush1.bf16.msra.mxu0 %v1371
      %2108 = vmatprep.subr.bf16.mxu0 0
      %2109 = vmatpush1.bf16.msra.mxu0 %v1370
      %2110 = vmatprep.subr.bf16.mxu0 0
      %2111 = vmatpush2.bf16.msra.mxu0 0
      %2112 = vmatprep.subr.bf16.mxu0 0
      %2113 = vmatpush2.bf16.msra.mxu0 0
      %2114 = vmatprep.subr.bf16.mxu0 0
      %2115 = vmatpush2.bf16.msra.mxu0 0
      %2116 = vmatprep.subr.bf16.mxu0 0
      %2117 = vmatpush2.bf16.msra.mxu0 0
      %2118 = vmatprep.subr.bf16.mxu0 0
      %2119 = vmatpush2.bf16.msra.mxu0 0
      %2120 = vmatprep.subr.bf16.mxu0 0
      %2121 = vmatpush2.bf16.msra.mxu0 0
      %2122 = vmatprep.subr.bf16.mxu0 0
      %2123 = vmatpush2.bf16.msra.mxu0 0
      %2124 = vmatprep.subr.bf16.mxu0 0
      %2125 = vmatpush2.bf16.msra.mxu0 0
      %2126 = vmatprep.mubr.bf16.mxu0 0
      %2127 = vmatmul.mubr.bf16.gmra.mxu0 %v824
      %v2128 = vpop.f32.mrf.mxu0
      %v2129 = vadd.f32 %v1968, %v2128
      %v2130 = vpop.f32.mrf.mxu0
      %v2131 = vpop.f32.mrf.mxu0
      %v2132 = vadd.f32 %v1971, %v2131
      %v2133 = vpop.f32.mrf.mxu0
      %2134 = vmatprep.mubr.bf16.mxu0 0
      %2135 = vmatmul.mubr.bf16.gmra.mxu0 %v827
      %v2136 = vpop.f32.mrf.mxu0
      %v2137 = vadd.f32 %v1976, %v2136
      %v2138 = vpop.f32.mrf.mxu0
      %v2139 = vpop.f32.mrf.mxu0
      %v2140 = vadd.f32 %v1979, %v2139
      %v2141 = vpop.f32.mrf.mxu0
      %2142 = vmatprep.mubr.bf16.mxu0 0
      %2143 = vmatmul.mubr.bf16.gmra.mxu0 %v830
      %v2144 = vpop.f32.mrf.mxu0
      %v2145 = vadd.f32 %v1984, %v2144
      %v2146 = vpop.f32.mrf.mxu0
      %v2147 = vpop.f32.mrf.mxu0
      %v2148 = vadd.f32 %v1987, %v2147
      %v2149 = vpop.f32.mrf.mxu0
      %2150 = vmatprep.mubr.bf16.mxu0 0
      %2151 = vmatmul.mubr.bf16.gmra.mxu0 %v833
      %v2152 = vpop.f32.mrf.mxu0
      %v2153 = vadd.f32 %v1992, %v2152
      %v2154 = vpop.f32.mrf.mxu0
      %v2155 = vpop.f32.mrf.mxu0
      %v2156 = vadd.f32 %v1995, %v2155
      %v2157 = vpop.f32.mrf.mxu0
      %2158 = vmatprep.mubr.bf16.mxu0 0
      %2159 = vmatmul.mubr.bf16.gmra.mxu0 %v836
      %v2160 = vpop.f32.mrf.mxu0
      %v2161 = vadd.f32 %v2000, %v2160
      %v2162 = vpop.f32.mrf.mxu0
      %v2163 = vpop.f32.mrf.mxu0
      %v2164 = vadd.f32 %v2003, %v2163
      %v2165 = vpop.f32.mrf.mxu0
      %2166 = vmatprep.mubr.bf16.mxu0 0
      %2167 = vmatmul.mubr.bf16.gmra.mxu0 %v839
      %v2168 = vpop.f32.mrf.mxu0
      %v2169 = vadd.f32 %v2008, %v2168
      %v2170 = vpop.f32.mrf.mxu0
      %v2171 = vpop.f32.mrf.mxu0
      %v2172 = vadd.f32 %v2011, %v2171
      %v2173 = vpop.f32.mrf.mxu0
      %2174 = vmatprep.mubr.bf16.mxu0 0
      %2175 = vmatmul.mubr.bf16.gmra.mxu0 %v842
      %v2176 = vpop.f32.mrf.mxu0
      %v2177 = vadd.f32 %v2016, %v2176
      %v2178 = vpop.f32.mrf.mxu0
      %v2179 = vpop.f32.mrf.mxu0
      %v2180 = vadd.f32 %v2019, %v2179
      %v2181 = vpop.f32.mrf.mxu0
      %2182 = vmatprep.mubr.bf16.mxu0 0
      %2183 = vmatmul.mubr.bf16.gmra.mxu0 %v845
      %v2184 = vpop.f32.mrf.mxu0
      %v2185 = vadd.f32 %v2024, %v2184
      %v2186 = vpop.f32.mrf.mxu0
      %v2187 = vpop.f32.mrf.mxu0
      %v2188 = vadd.f32 %v2027, %v2187
      %v2189 = vpop.f32.mrf.mxu0
      %2190 = vmatprep.mubr.bf16.mxu0 0
      %2191 = vmatmul.mubr.bf16.gmra.mxu0 %v848
      %v2192 = vpop.f32.mrf.mxu0
      %v2193 = vadd.f32 %v2032, %v2192
      %v2194 = vpop.f32.mrf.mxu0
      %v2195 = vpop.f32.mrf.mxu0
      %v2196 = vadd.f32 %v2035, %v2195
      %v2197 = vpop.f32.mrf.mxu0
      %2198 = vmatprep.mubr.bf16.mxu0 0
      %2199 = vmatmul.mubr.bf16.gmra.mxu0 %v851
      %v2200 = vpop.f32.mrf.mxu0
      %v2201 = vadd.f32 %v2040, %v2200
      %v2202 = vpop.f32.mrf.mxu0
      %v2203 = vpop.f32.mrf.mxu0
      %v2204 = vadd.f32 %v2043, %v2203
      %v2205 = vpop.f32.mrf.mxu0
      %2206 = vmatprep.mubr.bf16.mxu0 0
      %2207 = vmatmul.mubr.bf16.gmra.mxu0 %v854
      %v2208 = vpop.f32.mrf.mxu0
      %v2209 = vadd.f32 %v2048, %v2208
      %v2210 = vpop.f32.mrf.mxu0
      %v2211 = vpop.f32.mrf.mxu0
      %v2212 = vadd.f32 %v2051, %v2211
      %v2213 = vpop.f32.mrf.mxu0
      %2214 = vmatprep.mubr.bf16.mxu0 0
      %2215 = vmatmul.mubr.bf16.gmra.mxu0 %v857
      %v2216 = vpop.f32.mrf.mxu0
      %v2217 = vadd.f32 %v2056, %v2216
      %v2218 = vpop.f32.mrf.mxu0
      %v2219 = vpop.f32.mrf.mxu0
      %v2220 = vadd.f32 %v2059, %v2219
      %v2221 = vpop.f32.mrf.mxu0
      %2222 = vmatprep.mubr.bf16.mxu0 0
      %2223 = vmatmul.mubr.bf16.gmra.mxu0 %v860
      %v2224 = vpop.f32.mrf.mxu0
      %v2225 = vadd.f32 %v2064, %v2224
      %v2226 = vpop.f32.mrf.mxu0
      %v2227 = vpop.f32.mrf.mxu0
      %v2228 = vadd.f32 %v2067, %v2227
      %v2229 = vpop.f32.mrf.mxu0
      %2230 = vmatprep.mubr.bf16.mxu0 0
      %2231 = vmatmul.mubr.bf16.gmra.mxu0 %v863
      %v2232 = vpop.f32.mrf.mxu0
      %v2233 = vadd.f32 %v2072, %v2232
      %v2234 = vpop.f32.mrf.mxu0
      %v2235 = vpop.f32.mrf.mxu0
      %v2236 = vadd.f32 %v2075, %v2235
      %v2237 = vpop.f32.mrf.mxu0
      %2238 = vmatprep.mubr.bf16.mxu0 0
      %2239 = vmatmul.mubr.bf16.gmra.mxu0 %v866
      %v2240 = vpop.f32.mrf.mxu0
      %v2241 = vadd.f32 %v2080, %v2240
      %v2242 = vpop.f32.mrf.mxu0
      %v2243 = vpop.f32.mrf.mxu0
      %v2244 = vadd.f32 %v2083, %v2243
      %v2245 = vpop.f32.mrf.mxu0
      %2246 = vmatprep.mubr.bf16.mxu0 0
      %2247 = vmatmul.mubr.bf16.gmra.mxu0 %v818
      %v2248 = vpop.f32.mrf.mxu0
      %v2249 = vadd.f32 %v2088, %v2248
      %v2250 = vpop.f32.mrf.mxu0
      %v2251 = vpop.f32.mrf.mxu0
      %v2252 = vadd.f32 %v2091, %v2251
      %v2253 = vpop.f32.mrf.mxu0
      %2254 = vdwg.mxu0
      %2255 = vst [vmem:[%s258] sm:$0xff] %v2129
      %2256 = vst [vmem:[%s258 + $0x8] sm:$0xff] %v2132
      %2257 = vst [vmem:[%s258 + $0x10] sm:$0xff] %v2137
      %2258 = vst [vmem:[%s258 + $0x18] sm:$0xff] %v2140
      %2259 = vst [vmem:[%s258 + $0x20] sm:$0xff] %v2145
      %2260 = vst [vmem:[%s258 + $0x28] sm:$0xff] %v2148
      %2261 = vst [vmem:[%s258 + $0x30] sm:$0xff] %v2153
      %2262 = vst [vmem:[%s258 + $0x38] sm:$0xff] %v2156
      %2263 = vst [vmem:[%s258 + $0x40] sm:$0xff] %v2161
      %2264 = vst [vmem:[%s258 + $0x48] sm:$0xff] %v2164
      %2265 = vst [vmem:[%s258 + $0x50] sm:$0xff] %v2169
      %2266 = vst [vmem:[%s258 + $0x58] sm:$0xff] %v2172
      %2267 = vst [vmem:[%s258 + $0x60] sm:$0xff] %v2177
      %2268 = vst [vmem:[%s258 + $0x68] sm:$0xff] %v2180
      %2269 = vst [vmem:[%s258 + $0x70] sm:$0xff] %v2185
      %2270 = vst [vmem:[%s258 + $0x78] sm:$0xff] %v2188
      %2271 = vst [vmem:[%s258 + $0x80] sm:$0xff] %v2193
      %2272 = vst [vmem:[%s258 + $0x88] sm:$0xff] %v2196
      %2273 = vst [vmem:[%s258 + $0x90] sm:$0xff] %v2201
      %2274 = vst [vmem:[%s258 + $0x98] sm:$0xff] %v2204
      %2275 = vst [vmem:[%s258 + $0xa0] sm:$0xff] %v2209
      %2276 = vst [vmem:[%s258 + $0xa8] sm:$0xff] %v2212
      %2277 = vst [vmem:[%s258 + $0xb0] sm:$0xff] %v2217
      %2278 = vst [vmem:[%s258 + $0xb8] sm:$0xff] %v2220
      %2279 = vst [vmem:[%s258 + $0xc0] sm:$0xff] %v2225
      %2280 = vst [vmem:[%s258 + $0xc8] sm:$0xff] %v2228
      %2281 = vst [vmem:[%s258 + $0xd0] sm:$0xff] %v2233
      %2282 = vst [vmem:[%s258 + $0xd8] sm:$0xff] %v2236
      %2283 = vst [vmem:[%s258 + $0xe0] sm:$0xff] %v2241
      %2284 = vst [vmem:[%s258 + $0xe8] sm:$0xff] %v2244
      %2285 = vst [vmem:[%s258 + $0xf0] sm:$0xff] %v2249
      %2286 = vst [vmem:[%s258 + $0xf8] sm:$0xff] %v2252
      %v2287 = vadd.f32 %v2129, %v2132
      %v2288 = vadd.f32 %v2287, %v2137
      %v2289 = vadd.f32 %v2288, %v2140
      %v2290 = vadd.f32 %v2289, %v2145
      %v2291 = vadd.f32 %v2290, %v2148
      %v2292 = vadd.f32 %v2291, %v2153
      %v2293 = vadd.f32 %v2292, %v2156
      %v2294 = vadd.f32 %v2293, %v2161
      %v2295 = vadd.f32 %v2294, %v2164
      %v2296 = vadd.f32 %v2295, %v2169
      %v2297 = vadd.f32 %v2296, %v2172
      %v2298 = vadd.f32 %v2297, %v2177
      %v2299 = vadd.f32 %v2298, %v2180
      %v2300 = vadd.f32 %v2299, %v2185
      %v2301 = vadd.f32 %v2300, %v2188
      %v2302 = vadd.f32 %v2301, %v2193
      %v2303 = vadd.f32 %v2302, %v2196
      %v2304 = vadd.f32 %v2303, %v2201
      %v2305 = vadd.f32 %v2304, %v2204
      %v2306 = vadd.f32 %v2305, %v2209
      %v2307 = vadd.f32 %v2306, %v2212
      %v2308 = vadd.f32 %v2307, %v2217
      %v2309 = vadd.f32 %v2308, %v2220
      %v2310 = vadd.f32 %v2309, %v2225
      %v2311 = vadd.f32 %v2310, %v2228
      %v2312 = vadd.f32 %v2311, %v2233
      %v2313 = vadd.f32 %v2312, %v2236
      %v2314 = vadd.f32 %v2313, %v2241
      %v2315 = vadd.f32 %v2314, %v2244
      %v2316 = vadd.f32 %v2315, %v2249
      %v2317 = vadd.f32 %v2316, %v2252
      %v2318 = vrot.slane %v2317, 4
      %v2319 = vadd.f32 %v2317, %v2318
      %v2320 = vrot.slane %v2319, 2
      %v2321 = vadd.f32 %v2319, %v2320
      %v2322 = vrot.slane %v2321, 1
      %v2323 = vadd.f32 %v2321, %v2322
      %v2324 = vmul.f32 %v2129, %v2129
      %v2325 = vmul.f32 %v2132, %v2132
      %v2326 = vmul.f32 %v2137, %v2137
      %v2327 = vmul.f32 %v2140, %v2140
      %v2328 = vmul.f32 %v2145, %v2145
      %v2329 = vmul.f32 %v2148, %v2148
      %v2330 = vmul.f32 %v2153, %v2153
      %v2331 = vmul.f32 %v2156, %v2156
      %v2332 = vmul.f32 %v2161, %v2161
      %v2333 = vmul.f32 %v2164, %v2164
      %v2334 = vmul.f32 %v2169, %v2169
      %v2335 = vmul.f32 %v2172, %v2172
      %v2336 = vmul.f32 %v2177, %v2177
      %v2337 = vmul.f32 %v2180, %v2180
      %v2338 = vmul.f32 %v2185, %v2185
      %v2339 = vmul.f32 %v2188, %v2188
      %v2340 = vmul.f32 %v2193, %v2193
      %v2341 = vmul.f32 %v2196, %v2196
      %v2342 = vmul.f32 %v2201, %v2201
      %v2343 = vmul.f32 %v2204, %v2204
      %v2344 = vmul.f32 %v2209, %v2209
      %v2345 = vmul.f32 %v2212, %v2212
      %v2346 = vmul.f32 %v2217, %v2217
      %v2347 = vmul.f32 %v2220, %v2220
      %v2348 = vmul.f32 %v2225, %v2225
      %v2349 = vmul.f32 %v2228, %v2228
      %v2350 = vmul.f32 %v2233, %v2233
      %v2351 = vmul.f32 %v2236, %v2236
      %v2352 = vmul.f32 %v2241, %v2241
      %v2353 = vmul.f32 %v2244, %v2244
      %v2354 = vmul.f32 %v2249, %v2249
      %v2355 = vmul.f32 %v2252, %v2252
      %v2356 = vadd.f32 %v2324, %v2325
      %v2357 = vadd.f32 %v2356, %v2326
      %v2358 = vadd.f32 %v2357, %v2327
      %v2359 = vadd.f32 %v2358, %v2328
      %v2360 = vadd.f32 %v2359, %v2329
      %v2361 = vadd.f32 %v2360, %v2330
      %v2362 = vadd.f32 %v2361, %v2331
      %v2363 = vadd.f32 %v2362, %v2332
      %v2364 = vadd.f32 %v2363, %v2333
      %v2365 = vadd.f32 %v2364, %v2334
      %v2366 = vadd.f32 %v2365, %v2335
      %v2367 = vadd.f32 %v2366, %v2336
      %v2368 = vadd.f32 %v2367, %v2337
      %v2369 = vadd.f32 %v2368, %v2338
      %v2370 = vadd.f32 %v2369, %v2339
      %v2371 = vadd.f32 %v2370, %v2340
      %v2372 = vadd.f32 %v2371, %v2341
      %v2373 = vadd.f32 %v2372, %v2342
      %v2374 = vadd.f32 %v2373, %v2343
      %v2375 = vadd.f32 %v2374, %v2344
      %v2376 = vadd.f32 %v2375, %v2345
      %v2377 = vadd.f32 %v2376, %v2346
      %v2378 = vadd.f32 %v2377, %v2347
      %v2379 = vadd.f32 %v2378, %v2348
      %v2380 = vadd.f32 %v2379, %v2349
      %v2381 = vadd.f32 %v2380, %v2350
      %v2382 = vadd.f32 %v2381, %v2351
      %v2383 = vadd.f32 %v2382, %v2352
      %v2384 = vadd.f32 %v2383, %v2353
      %v2385 = vadd.f32 %v2384, %v2354
      %v2386 = vadd.f32 %v2385, %v2355
      %v2387 = vrot.slane %v2386, 4
      %v2388 = vadd.f32 %v2386, %v2387
      %v2389 = vrot.slane %v2388, 2
      %v2390 = vadd.f32 %v2388, %v2389
      %v2391 = vrot.slane %v2390, 1
      %v2392 = vadd.f32 %v2390, %v2391
      %v2393 = vsel %vm407, %v2323, %v2392
      %2394 = vst [vmem:[%s262] sm:$0x3] %v2393
      %p2395 = scmp.lt.s32.totalorder %s18, 1
      %s2396 = scalar_select %p2395, %s18, 1
      %s2397 = smul.addr %s2396, 32
      %s2398 = smul.addr %s2397, 8
      %s2399 = scalar_lea.vmem %s5, %s2398
      %p2400 = scmp.lt.s32.totalorder %s18, 1
      %s2401 = scalar_select %p2400, %s18, 1
      %s2402 = smul.addr %s2401, 2
      %s2403 = scalar_lea.vmem %s6, %s2402
      // Predicated region
      $region41: #{block_forward.3} parent=39 // pred_check
        %p2404 = pneg %p146
      $region42: #{block_forward.3} parent=39 // pred_check_branch
        %2406 = sbr.rel (%p2404) target = $region44
      $region43: #{block_forward.3} parent=39 // pred_region
        _
      $region44: #{block_forward.3} parent=39 // pred_fallthru
        _
      // Predicated region
      $region45: #{block_forward.3} parent=39 // pred_check
        %p2407 = pneg %p172
      $region46: #{block_forward.3} parent=39 // pred_check_branch
        %2409 = sbr.rel (%p2407) target = $region48
      $region47: #{block_forward.3} parent=39 // pred_region
        _
      $region48: #{block_forward.3} parent=39 // pred_fallthru
        _
    $region40: #{block_forward.3} parent=5 // pred_fallthru
      _
    %p2410 = scmp.le.s32.totalorder 2, %s13
    // Predicated region
    $region49: #{block_forward.3} parent=5 // pred_check
      %p2411 = pneg %p2410
    $region50: #{block_forward.3} parent=5 // pred_check_branch
      %2413 = sbr.rel (%p2411) target = $region52
    $region51: #{block_forward.3} parent=5 // pred_region
      %s2414 = ssub.s32 %s13, 2
      // Predicated region
      $region53: #{block_forward.3} parent=51 // pred_check
        %p2415 = pneg %p152
      $region54: #{block_forward.3} parent=51 // pred_check_branch
        %2417 = sbr.rel (%p2415) target = $region56
      $region55: #{block_forward.3} parent=51 // pred_region
        %p2418 = scmp.lt.s32.totalorder %s19, 1
        %s2419 = scalar_select %p2418, %s19, 1
        %s2420 = smul.addr %s2419, 32
        %s2421 = smul.addr %s2420, 8
        %s2422 = scalar_lea.vmem %s5, %s2421
      $region56: #{block_forward.3} parent=51 // pred_fallthru
        _
      // Predicated region
      $region57: #{block_forward.3} parent=51 // pred_check
        %p2423 = pneg %p178
      $region58: #{block_forward.3} parent=51 // pred_check_branch
        %2425 = sbr.rel (%p2423) target = $region60
      $region59: #{block_forward.3} parent=51 // pred_region
        %p2426 = scmp.lt.s32.totalorder %s19, 1
        %s2427 = scalar_select %p2426, %s19, 1
        %s2428 = smul.addr %s2427, 2
        %s2429 = scalar_lea.vmem %s6, %s2428
      $region60: #{block_forward.3} parent=51 // pred_fallthru
        _
    $region52: #{block_forward.3} parent=5 // pred_fallthru
      _
  $region6: #{block_forward.3} parent=0 // loop_footer
    %s17 = sadd.s32 1, %s13
  $region7: #{block_forward.3} parent=0 // loop_footer_branch
    %12 = sbr.rel target = $region3
  $region8: #{block_forward.3} parent=0 // loop_exit
    _

// kernel: block_forward.4
$region0: #{block_forward.4}
  #allocation0 [shape = 'u32[]', space=smem, size = 0x4, offset = 0x4, fixed_abs, tag = 'smem constant byte address 0x4 - core index']
  #allocation1 [shape = 'u32[144,128]{1,0:T(1,128)}', space=vmem, size = 0x12000, scoped, tag = 'internal scratch']
  %s0 = inlined_call_operand.vmem [shape: f32[2,256,128], index: 0, kind: input, shape index: {}]
  %s1 = inlined_call_operand.vmem [shape: f32[1,128], index: 1, kind: input, shape index: {}]
  %s2 = inlined_call_operand.vmem [shape: f32[1,128], index: 2, kind: input, shape index: {}]
  %s3 = inlined_call_operand.vmem [shape: bf16[1152,128], index: 3, kind: input, shape index: {}]
  %s4 = inlined_call_operand.vmem [shape: f32[1,128], index: 4, kind: input, shape index: {}]
  %s5 = inlined_call_operand.vmem [shape: f32[2,256,128], index: 5, kind: output, shape index: {0}]
  %s6 = inlined_call_operand.vmem [shape: f32[2,2,128], index: 6, kind: output, shape index: {1}]
  %7 = xla_tuple %s5, %s6
  %s8 = sld [smem:[#allocation0]]
  $region61: #{block_forward.4} parent=0
    _
  %s10 = ssub.s32 1, %s8
  %s11 = scalar_select 0, %s10, %s8
  loop: start=0, step=1, limit=4
  $region2: #{block_forward.4} parent=0 // loop_pre_header
    _
  $region3: #{block_forward.4} parent=0 // loop_header
    %s13 = sphi 0, %s17
    %p14 = scmp.ge.s32.totalorder %s13, 4
    %s23 = sphi 0, %s25
    %s26 = sphi 0, %s23
    %s27 = sphi 0, %s26
    %s43 = sphi 0, %s27
    %s47 = sphi 0, %s47
    %s49 = sphi 0, %s47
    %s50 = sphi 0, %s49
    %s64 = sphi 0, %s50
    %s68 = sphi 0, %s68
    %s70 = sphi 0, %s68
    %s71 = sphi 0, %s70
    %s85 = sphi 0, %s71
    %s89 = sphi 0, %s89
    %s91 = sphi 0, %s89
    %s92 = sphi 0, %s91
    %s106 = sphi 0, %s92
    %s110 = sphi 0, %s110
    %s112 = sphi 0, %s110
    %s113 = sphi 0, %s112
    %s127 = sphi 0, %s113
    %s133 = sphi 0, %s135
    %s136 = sphi 0, %s133
    %s137 = sphi 0, %s136
    %s153 = sphi 0, %s137
    %s159 = sphi 0, %s161
    %s162 = sphi 0, %s159
    %s163 = sphi 0, %s162
    %s179 = sphi 0, %s163
  $region4: #{block_forward.4} parent=0 // loop_header_branch
    %16 = sbr.rel (%p14) target = $region8
  $region5: #{block_forward.4} parent=0 // loop_body
    %s18 = ssub.s32 %s13, 1
    %s19 = ssub.s32 %s13, 2
    %s20 = sadd.s32 %s13, 1
    %s21 = ssub.s32 %s13, %s20
    %p22 = scmp.eq.s32.totalorder %s21, 0
    %s24 = sadd.s32 %s23, 1
    %s25 = scalar_select %p22, %s23, %s24
    %p28 = pneg %p22
    %p29 = scmp.eq.s32.totalorder %s13, 1
    %p30 = por %p28, %p29
    %p31 = scmp.ne.s32.totalorder %s23, %s26
    %p32 = scmp.eq.s32.totalorder %s13, 0
    %p33 = por %p31, %p32
    %p34 = scmp.ne.s32.totalorder %s23, %s26
    %p35 = scmp.eq.s32.totalorder %s18, 1
    %p36 = por %p34, %p35
    %p37 = scmp.ne.s32.totalorder %s26, %s27
    %p38 = scmp.eq.s32.totalorder %s18, 0
    %p39 = por %p37, %p38
    %p40 = scmp.ne.s32.totalorder %s26, %s27
    %p41 = scmp.eq.s32.totalorder %s19, 1
    %p42 = por %p40, %p41
    %p44 = scmp.ne.s32.totalorder %s27, %s43
    %p45 = scmp.eq.s32.totalorder %s19, 0
    %p46 = por %p44, %p45
    %s48 = sadd.s32 %s47, 1
    %p51 = scmp.eq.s32.totalorder %s13, 1
    %p52 = scmp.ne.s32.totalorder %s47, %s49
    %p53 = scmp.eq.s32.totalorder %s13, 0
    %p54 = por %p52, %p53
    %p55 = scmp.ne.s32.totalorder %s47, %s49
    %p56 = scmp.eq.s32.totalorder %s18, 1
    %p57 = por %p55, %p56
    %p58 = scmp.ne.s32.totalorder %s49, %s50
    %p59 = scmp.eq.s32.totalorder %s18, 0
    %p60 = por %p58, %p59
    %p61 = scmp.ne.s32.totalorder %s49, %s50
    %p62 = scmp.eq.s32.totalorder %s19, 1
    %p63 = por %p61, %p62
    %p65 = scmp.ne.s32.totalorder %s50, %s64
    %p66 = scmp.eq.s32.totalorder %s19, 0
    %p67 = por %p65, %p66
    %s69 = sadd.s32 %s68, 1
    %p72 = scmp.eq.s32.totalorder %s13, 1
    %p73 = scmp.ne.s32.totalorder %s68, %s70
    %p74 = scmp.eq.s32.totalorder %s13, 0
    %p75 = por %p73, %p74
    %p76 = scmp.ne.s32.totalorder %s68, %s70
    %p77 = scmp.eq.s32.totalorder %s18, 1
    %p78 = por %p76, %p77
    %p79 = scmp.ne.s32.totalorder %s70, %s71
    %p80 = scmp.eq.s32.totalorder %s18, 0
    %p81 = por %p79, %p80
    %p82 = scmp.ne.s32.totalorder %s70, %s71
    %p83 = scmp.eq.s32.totalorder %s19, 1
    %p84 = por %p82, %p83
    %p86 = scmp.ne.s32.totalorder %s71, %s85
    %p87 = scmp.eq.s32.totalorder %s19, 0
    %p88 = por %p86, %p87
    %s90 = sadd.s32 %s89, 1
    %p93 = scmp.eq.s32.totalorder %s13, 1
    %p94 = scmp.ne.s32.totalorder %s89, %s91
    %p95 = scmp.eq.s32.totalorder %s13, 0
    %p96 = por %p94, %p95
    %p97 = scmp.ne.s32.totalorder %s89, %s91
    %p98 = scmp.eq.s32.totalorder %s18, 1
    %p99 = por %p97, %p98
    %p100 = scmp.ne.s32.totalorder %s91, %s92
    %p101 = scmp.eq.s32.totalorder %s18, 0
    %p102 = por %p100, %p101
    %p103 = scmp.ne.s32.totalorder %s91, %s92
    %p104 = scmp.eq.s32.totalorder %s19, 1
    %p105 = por %p103, %p104
    %p107 = scmp.ne.s32.totalorder %s92, %s106
    %p108 = scmp.eq.s32.totalorder %s19, 0
    %p109 = por %p107, %p108
    %s111 = sadd.s32 %s110, 1
    %p114 = scmp.eq.s32.totalorder %s13, 1
    %p115 = scmp.ne.s32.totalorder %s110, %s112
    %p116 = scmp.eq.s32.totalorder %s13, 0
    %p117 = por %p115, %p116
    %p118 = scmp.ne.s32.totalorder %s110, %s112
    %p119 = scmp.eq.s32.totalorder %s18, 1
    %p120 = por %p118, %p119
    %p121 = scmp.ne.s32.totalorder %s112, %s113
    %p122 = scmp.eq.s32.totalorder %s18, 0
    %p123 = por %p121, %p122
    %p124 = scmp.ne.s32.totalorder %s112, %s113
    %p125 = scmp.eq.s32.totalorder %s19, 1
    %p126 = por %p124, %p125
    %p128 = scmp.ne.s32.totalorder %s113, %s127
    %p129 = scmp.eq.s32.totalorder %s19, 0
    %p130 = por %p128, %p129
    %s131 = ssub.s32 %s13, %s20
    %p132 = scmp.eq.s32.totalorder %s131, 0
    %s134 = sadd.s32 %s133, 1
    %s135 = scalar_select %p132, %s133, %s134
    %p138 = pneg %p132
    %p139 = scmp.eq.s32.totalorder %s13, 1
    %p140 = por %p138, %p139
    %p141 = scmp.ne.s32.totalorder %s133, %s136
    %p142 = scmp.eq.s32.totalorder %s13, 0
    %p143 = por %p141, %p142
    %p144 = scmp.ne.s32.totalorder %s133, %s136
    %p145 = scmp.eq.s32.totalorder %s18, 1
    %p146 = por %p144, %p145
    %p147 = scmp.ne.s32.totalorder %s136, %s137
    %p148 = scmp.eq.s32.totalorder %s18, 0
    %p149 = por %p147, %p148
    %p150 = scmp.ne.s32.totalorder %s136, %s137
    %p151 = scmp.eq.s32.totalorder %s19, 1
    %p152 = por %p150, %p151
    %p154 = scmp.ne.s32.totalorder %s137, %s153
    %p155 = scmp.eq.s32.totalorder %s19, 0
    %p156 = por %p154, %p155
    %s157 = ssub.s32 %s13, %s20
    %p158 = scmp.eq.s32.totalorder %s157, 0
    %s160 = sadd.s32 %s159, 1
    %s161 = scalar_select %p158, %s159, %s160
    %p164 = pneg %p158
    %p165 = scmp.eq.s32.totalorder %s13, 1
    %p166 = por %p164, %p165
    %p167 = scmp.ne.s32.totalorder %s159, %s162
    %p168 = scmp.eq.s32.totalorder %s13, 0
    %p169 = por %p167, %p168
    %p170 = scmp.ne.s32.totalorder %s159, %s162
    %p171 = scmp.eq.s32.totalorder %s18, 1
    %p172 = por %p170, %p171
    %p173 = scmp.ne.s32.totalorder %s162, %s163
    %p174 = scmp.eq.s32.totalorder %s18, 0
    %p175 = por %p173, %p174
    %p176 = scmp.ne.s32.totalorder %s162, %s163
    %p177 = scmp.eq.s32.totalorder %s19, 1
    %p178 = por %p176, %p177
    %p180 = scmp.ne.s32.totalorder %s163, %s179
    %p181 = scmp.eq.s32.totalorder %s19, 0
    %p182 = por %p180, %p181
    %p183 = scmp.le.s32.totalorder 1, %s13
    %p184 = scmp.lt.s32.totalorder %s13, 3
    %p185 = pnand %p183, %p184
    %p186 = pneg %p185
    // Predicated region
    $region9: #{block_forward.4} parent=5 // pred_check
      _
    $region10: #{block_forward.4} parent=5 // pred_check_branch
      %188 = sbr.rel (%p185) target = $region12
    $region11: #{block_forward.4} parent=5 // pred_region
      %s189 = ssub.s32 %s13, 1
      // Predicated region
      $region13: #{block_forward.4} parent=11 // pred_check
        %p190 = pneg %p60
      $region14: #{block_forward.4} parent=11 // pred_check_branch
        %192 = sbr.rel (%p190) target = $region16
      $region15: #{block_forward.4} parent=11 // pred_region
        _
      $region16: #{block_forward.4} parent=11 // pred_fallthru
        _
      // Predicated region
      $region17: #{block_forward.4} parent=11 // pred_check
        %p193 = pneg %p81
      $region18: #{block_forward.4} parent=11 // pred_check_branch
        %195 = sbr.rel (%p193) target = $region20
      $region19: #{block_forward.4} parent=11 // pred_region
        _
      $region20: #{block_forward.4} parent=11 // pred_fallthru
        _
      // Predicated region
      $region21: #{block_forward.4} parent=11 // pred_check
        %p196 = pneg %p102
      $region22: #{block_forward.4} parent=11 // pred_check_branch
        %198 = sbr.rel (%p196) target = $region24
      $region23: #{block_forward.4} parent=11 // pred_region
        _
      $region24: #{block_forward.4} parent=11 // pred_fallthru
        _
      // Predicated region
      $region25: #{block_forward.4} parent=11 // pred_check
        %p199 = pneg %p123
      $region26: #{block_forward.4} parent=11 // pred_check_branch
        %201 = sbr.rel (%p199) target = $region28
      $region27: #{block_forward.4} parent=11 // pred_region
        _
      $region28: #{block_forward.4} parent=11 // pred_fallthru
        _
    $region12: #{block_forward.4} parent=5 // pred_fallthru
      _
    %p202 = scmp.lt.s32.totalorder %s13, 2
    // Predicated region
    $region29: #{block_forward.4} parent=5 // pred_check
      %p203 = pneg %p202
    $region30: #{block_forward.4} parent=5 // pred_check_branch
      %205 = sbr.rel (%p203) target = $region32
    $region31: #{block_forward.4} parent=5 // pred_region
      // Predicated region
      $region33: #{block_forward.4} parent=31 // pred_check
        %p206 = pneg %p33
      $region34: #{block_forward.4} parent=31 // pred_check_branch
        %208 = sbr.rel (%p206) target = $region36
      $region35: #{block_forward.4} parent=31 // pred_region
        %p209 = scmp.lt.s32.totalorder %s13, 1
        %s210 = scalar_select %p209, %s13, 1
        %s211 = smul.addr %s210, 32
        %s212 = smul.addr %s211, 8
        %s213 = scalar_lea.vmem %s0, %s212
      $region36: #{block_forward.4} parent=31 // pred_fallthru
        _
    $region32: #{block_forward.4} parent=5 // pred_fallthru
      _
    %p214 = scmp.le.s32.totalorder 1, %s13
    %p215 = scmp.lt.s32.totalorder %s13, 3
    %p216 = pnand %p214, %p215
    %p217 = pneg %p216
    // Predicated region
    $region37: #{block_forward.4} parent=5 // pred_check
      _
    $region38: #{block_forward.4} parent=5 // pred_check_branch
      %219 = sbr.rel (%p216) target = $region40
    $region39: #{block_forward.4} parent=5 // pred_region
      %s220 = ssub.s32 %s13, 1
      %p221 = scmp.lt.s32.totalorder %s18, 1
      %s222 = scalar_select %p221, %s18, 1
      %s223 = smul.addr %s222, 32
      %s224 = smul.addr %s223, 8
      %s225 = scalar_lea.vmem %s0, %s224
      %p226 = pneg %p39
      %p227 = pneg %p36
      %p228 = pneg %p60
      %p229 = pneg %p57
      %p230 = pneg %p81
      %p231 = pneg %p78
      %p232 = pneg %p102
      %p233 = pneg %p99
      %p234 = pneg %p123
      %p235 = pneg %p120
      %p236 = pneg %p149
      %p237 = pneg %p146
      %p238 = scmp.lt.s32.totalorder %s18, 1
      %s239 = scalar_select %p238, %s18, 1
      %s240 = smul.addr %s239, 32
      %s241 = smul.addr %s240, 8
      %s242 = scalar_lea.vmem %s5, %s241
      %p243 = pneg %p175
      %p244 = pneg %p172
      %p245 = scmp.lt.s32.totalorder %s18, 1
      %s246 = scalar_select %p245, %s18, 1
      %s247 = smul.addr %s246, 2
      %s248 = scalar_lea.vmem %s6, %s247
      %p249 = scmp.lt.s32.totalorder %s18, 1
      %s250 = scalar_select %p249, %s18, 1
      %s251 = smul.addr %s250, 32
      %s252 = smul.addr %s251, 8
      %s253 = scalar_lea.vmem %s0, %s252
      %p254 = scmp.lt.s32.totalorder %s18, 1
      %s255 = scalar_select %p254, %s18, 1
      %s256 = smul.addr %s255, 32
      %s257 = smul.addr %s256, 8
      %s258 = scalar_lea.vmem %s5, %s257
      %p259 = scmp.lt.s32.totalorder %s18, 1
      %s260 = scalar_select %p259, %s18, 1
      %s261 = smul.addr %s260, 2
      %s262 = scalar_lea.vmem %s6, %s261
      %v264 = vld [vmem:[%s253] sm:$0xff]
      %v265 = vld [vmem:[%s253 + $0x8] sm:$0xff]
      %v266 = vld [vmem:[%s253 + $0x10] sm:$0xff]
      %v267 = vld [vmem:[%s253 + $0x18] sm:$0xff]
      %v268 = vld [vmem:[%s253 + $0x20] sm:$0xff]
      %v269 = vld [vmem:[%s253 + $0x28] sm:$0xff]
      %v270 = vld [vmem:[%s253 + $0x30] sm:$0xff]
      %v271 = vld [vmem:[%s253 + $0x38] sm:$0xff]
      %v272 = vld [vmem:[%s253 + $0x40] sm:$0xff]
      %v273 = vld [vmem:[%s253 + $0x48] sm:$0xff]
      %v274 = vld [vmem:[%s253 + $0x50] sm:$0xff]
      %v275 = vld [vmem:[%s253 + $0x58] sm:$0xff]
      %v276 = vld [vmem:[%s253 + $0x60] sm:$0xff]
      %v277 = vld [vmem:[%s253 + $0x68] sm:$0xff]
      %v278 = vld [vmem:[%s253 + $0x70] sm:$0xff]
      %v279 = vld [vmem:[%s253 + $0x78] sm:$0xff]
      %v280 = vld [vmem:[%s253 + $0x80] sm:$0xff]
      %v281 = vld [vmem:[%s253 + $0x88] sm:$0xff]
      %v282 = vld [vmem:[%s253 + $0x90] sm:$0xff]
      %v283 = vld [vmem:[%s253 + $0x98] sm:$0xff]
      %v284 = vld [vmem:[%s253 + $0xa0] sm:$0xff]
      %v285 = vld [vmem:[%s253 + $0xa8] sm:$0xff]
      %v286 = vld [vmem:[%s253 + $0xb0] sm:$0xff]
      %v287 = vld [vmem:[%s253 + $0xb8] sm:$0xff]
      %v288 = vld [vmem:[%s253 + $0xc0] sm:$0xff]
      %v289 = vld [vmem:[%s253 + $0xc8] sm:$0xff]
      %v290 = vld [vmem:[%s253 + $0xd0] sm:$0xff]
      %v291 = vld [vmem:[%s253 + $0xd8] sm:$0xff]
      %v292 = vld [vmem:[%s253 + $0xe0] sm:$0xff]
      %v293 = vld [vmem:[%s253 + $0xe8] sm:$0xff]
      %v294 = vld [vmem:[%s253 + $0xf0] sm:$0xff]
      %v295 = vld [vmem:[%s253 + $0xf8] sm:$0xff]
      %v296 = vld [vmem:[%s1] sm:$0x1]
      %v298 = vlaneseq
      %v299 = vshrl.u32 %v298, 7
      %v300 = vsub.s32 0, %v299
      %v301 = vrot.slane %v296, %v300
      %v303 = vmul.f32 %v264, %v301
      %v304 = vmul.f32 %v265, %v301
      %v305 = vmul.f32 %v266, %v301
      %v306 = vmul.f32 %v267, %v301
      %v307 = vmul.f32 %v268, %v301
      %v308 = vmul.f32 %v269, %v301
      %v309 = vmul.f32 %v270, %v301
      %v310 = vmul.f32 %v271, %v301
      %v311 = vmul.f32 %v272, %v301
      %v312 = vmul.f32 %v273, %v301
      %v313 = vmul.f32 %v274, %v301
      %v314 = vmul.f32 %v275, %v301
      %v315 = vmul.f32 %v276, %v301
      %v316 = vmul.f32 %v277, %v301
      %v317 = vmul.f32 %v278, %v301
      %v318 = vmul.f32 %v279, %v301
      %v319 = vmul.f32 %v280, %v301
      %v320 = vmul.f32 %v281, %v301
      %v321 = vmul.f32 %v282, %v301
      %v322 = vmul.f32 %v283, %v301
      %v323 = vmul.f32 %v284, %v301
      %v324 = vmul.f32 %v285, %v301
      %v325 = vmul.f32 %v286, %v301
      %v326 = vmul.f32 %v287, %v301
      %v327 = vmul.f32 %v288, %v301
      %v328 = vmul.f32 %v289, %v301
      %v329 = vmul.f32 %v290, %v301
      %v330 = vmul.f32 %v291, %v301
      %v331 = vmul.f32 %v292, %v301
      %v332 = vmul.f32 %v293, %v301
      %v333 = vmul.f32 %v294, %v301
      %v334 = vmul.f32 %v295, %v301
      %v335 = vld [vmem:[%s2] sm:$0x1]
      %v337 = vlaneseq
      %v338 = vshrl.u32 %v337, 7
      %v339 = vsub.s32 0, %v338
      %v340 = vrot.slane %v335, %v339
      %v342 = vadd.f32 %v303, %v340
      %v343 = vadd.f32 %v304, %v340
      %v344 = vadd.f32 %v305, %v340
      %v345 = vadd.f32 %v306, %v340
      %v346 = vadd.f32 %v307, %v340
      %v347 = vadd.f32 %v308, %v340
      %v348 = vadd.f32 %v309, %v340
      %v349 = vadd.f32 %v310, %v340
      %v350 = vadd.f32 %v311, %v340
      %v351 = vadd.f32 %v312, %v340
      %v352 = vadd.f32 %v313, %v340
      %v353 = vadd.f32 %v314, %v340
      %v354 = vadd.f32 %v315, %v340
      %v355 = vadd.f32 %v316, %v340
      %v356 = vadd.f32 %v317, %v340
      %v357 = vadd.f32 %v318, %v340
      %v358 = vadd.f32 %v319, %v340
      %v359 = vadd.f32 %v320, %v340
      %v360 = vadd.f32 %v321, %v340
      %v361 = vadd.f32 %v322, %v340
      %v362 = vadd.f32 %v323, %v340
      %v363 = vadd.f32 %v324, %v340
      %v364 = vadd.f32 %v325, %v340
      %v365 = vadd.f32 %v326, %v340
      %v366 = vadd.f32 %v327, %v340
      %v367 = vadd.f32 %v328, %v340
      %v368 = vadd.f32 %v329, %v340
      %v369 = vadd.f32 %v330, %v340
      %v370 = vadd.f32 %v331, %v340
      %v371 = vadd.f32 %v332, %v340
      %v372 = vadd.f32 %v333, %v340
      %v373 = vadd.f32 %v334, %v340
      %v374 = vmax.f32 %v342, 0.0
      %v375 = vmax.f32 %v343, 0.0
      %v376 = vmax.f32 %v344, 0.0
      %v377 = vmax.f32 %v345, 0.0
      %v378 = vmax.f32 %v346, 0.0
      %v379 = vmax.f32 %v347, 0.0
      %v380 = vmax.f32 %v348, 0.0
      %v381 = vmax.f32 %v349, 0.0
      %v382 = vmax.f32 %v350, 0.0
      %v383 = vmax.f32 %v351, 0.0
      %v384 = vmax.f32 %v352, 0.0
      %v385 = vmax.f32 %v353, 0.0
      %v386 = vmax.f32 %v354, 0.0
      %v387 = vmax.f32 %v355, 0.0
      %v388 = vmax.f32 %v356, 0.0
      %v389 = vmax.f32 %v357, 0.0
      %v390 = vmax.f32 %v358, 0.0
      %v391 = vmax.f32 %v359, 0.0
      %v392 = vmax.f32 %v360, 0.0
      %v393 = vmax.f32 %v361, 0.0
      %v394 = vmax.f32 %v362, 0.0
      %v395 = vmax.f32 %v363, 0.0
      %v396 = vmax.f32 %v364, 0.0
      %v397 = vmax.f32 %v365, 0.0
      %v398 = vmax.f32 %v366, 0.0
      %v399 = vmax.f32 %v367, 0.0
      %v400 = vmax.f32 %v368, 0.0
      %v401 = vmax.f32 %v369, 0.0
      %v402 = vmax.f32 %v370, 0.0
      %v403 = vmax.f32 %v371, 0.0
      %v404 = vmax.f32 %v372, 0.0
      %v405 = vmax.f32 %v373, 0.0
      %vm439 = vcmask 1040384
      %v440 = vrot.slane 0.0, 7
      %v441 = vsel %vm439, %v440, %v440
      %v442 = vrot.slane %v374, 7
      %v443 = vrot.slane %v375, 7
      %v444 = vsel %vm439, %v442, %v443
      %v445 = vrot.slane %v376, 7
      %v446 = vrot.slane %v377, 7
      %v447 = vsel %vm439, %v445, %v446
      %v448 = vrot.slane %v378, 7
      %v449 = vrot.slane %v379, 7
      %v450 = vsel %vm439, %v448, %v449
      %v451 = vrot.slane %v380, 7
      %v452 = vrot.slane %v381, 7
      %v453 = vsel %vm439, %v451, %v452
      %v454 = vrot.slane %v382, 7
      %v455 = vrot.slane %v383, 7
      %v456 = vsel %vm439, %v454, %v455
      %v457 = vrot.slane %v384, 7
      %v458 = vrot.slane %v385, 7
      %v459 = vsel %vm439, %v457, %v458
      %v460 = vrot.slane %v386, 7
      %v461 = vrot.slane %v387, 7
      %v462 = vsel %vm439, %v460, %v461
      %v463 = vrot.slane %v388, 7
      %v464 = vrot.slane %v389, 7
      %v465 = vsel %vm439, %v463, %v464
      %v466 = vrot.slane %v390, 7
      %v467 = vrot.slane %v391, 7
      %v468 = vsel %vm439, %v466, %v467
      %v469 = vrot.slane %v392, 7
      %v470 = vrot.slane %v393, 7
      %v471 = vsel %vm439, %v469, %v470
      %v472 = vrot.slane %v394, 7
      %v473 = vrot.slane %v395, 7
      %v474 = vsel %vm439, %v472, %v473
      %v475 = vrot.slane %v396, 7
      %v476 = vrot.slane %v397, 7
      %v477 = vsel %vm439, %v475, %v476
      %v478 = vrot.slane %v398, 7
      %v479 = vrot.slane %v399, 7
      %v480 = vsel %vm439, %v478, %v479
      %v481 = vrot.slane %v400, 7
      %v482 = vrot.slane %v401, 7
      %v483 = vsel %vm439, %v481, %v482
      %v484 = vrot.slane %v402, 7
      %v485 = vrot.slane %v403, 7
      %v486 = vsel %vm439, %v484, %v485
      %v487 = vrot.slane %v404, 7
      %v488 = vrot.slane %v405, 7
      %v489 = vsel %vm439, %v487, %v488
      %v540 = vsel %vm439, 0.0, %v440
      %v541 = vsel %vm439, 0.0, %v442
      %v542 = vsel %vm439, 0.0, %v445
      %v543 = vsel %vm439, 0.0, %v448
      %v544 = vsel %vm439, 0.0, %v451
      %v545 = vsel %vm439, 0.0, %v454
      %v546 = vsel %vm439, 0.0, %v457
      %v547 = vsel %vm439, 0.0, %v460
      %v548 = vsel %vm439, 0.0, %v463
      %v549 = vsel %vm439, 0.0, %v466
      %v550 = vsel %vm439, 0.0, %v469
      %v551 = vsel %vm439, 0.0, %v472
      %v552 = vsel %vm439, 0.0, %v475
      %v553 = vsel %vm439, 0.0, %v478
      %v554 = vsel %vm439, 0.0, %v481
      %v555 = vsel %vm439, 0.0, %v484
      %v556 = vsel %vm439, 0.0, %v487
      %v557 = vsel %vm439, %v440, 0.0
      %v558 = vsel %vm439, %v443, 0.0
      %v559 = vsel %vm439, %v446, 0.0
      %v560 = vsel %vm439, %v449, 0.0
      %v561 = vsel %vm439, %v452, 0.0
      %v562 = vsel %vm439, %v455, 0.0
      %v563 = vsel %vm439, %v458, 0.0
      %v564 = vsel %vm439, %v461, 0.0
      %v565 = vsel %vm439, %v464, 0.0
      %v566 = vsel %vm439, %v467, 0.0
      %v567 = vsel %vm439, %v470, 0.0
      %v568 = vsel %vm439, %v473, 0.0
      %v569 = vsel %vm439, %v476, 0.0
      %v570 = vsel %vm439, %v479, 0.0
      %v571 = vsel %vm439, %v482, 0.0
      %v572 = vsel %vm439, %v485, 0.0
      %v573 = vsel %vm439, %v488, 0.0
      %vm606 = vcmask 1046528
      %v607 = vrot.slane %v540, 1
      %v608 = vrot.slane %v441, 1
      %v609 = vsel %vm606, %v607, %v608
      %v610 = vrot.slane %v557, 1
      %v611 = vsel %vm606, %v608, %v610
      %v612 = vrot.slane %v541, 1
      %v613 = vrot.slane %v444, 1
      %v614 = vsel %vm606, %v612, %v613
      %v615 = vrot.slane %v558, 1
      %v616 = vsel %vm606, %v613, %v615
      %v617 = vrot.slane %v542, 1
      %v618 = vrot.slane %v447, 1
      %v619 = vsel %vm606, %v617, %v618
      %v620 = vrot.slane %v559, 1
      %v621 = vsel %vm606, %v618, %v620
      %v622 = vrot.slane %v543, 1
      %v623 = vrot.slane %v450, 1
      %v624 = vsel %vm606, %v622, %v623
      %v625 = vrot.slane %v560, 1
      %v626 = vsel %vm606, %v623, %v625
      %v627 = vrot.slane %v544, 1
      %v628 = vrot.slane %v453, 1
      %v629 = vsel %vm606, %v627, %v628
      %v630 = vrot.slane %v561, 1
      %v631 = vsel %vm606, %v628, %v630
      %v632 = vrot.slane %v545, 1
      %v633 = vrot.slane %v456, 1
      %v634 = vsel %vm606, %v632, %v633
      %v635 = vrot.slane %v562, 1
      %v636 = vsel %vm606, %v633, %v635
      %v637 = vrot.slane %v546, 1
      %v638 = vrot.slane %v459, 1
      %v639 = vsel %vm606, %v637, %v638
      %v640 = vrot.slane %v563, 1
      %v641 = vsel %vm606, %v638, %v640
      %v642 = vrot.slane %v547, 1
      %v643 = vrot.slane %v462, 1
      %v644 = vsel %vm606, %v642, %v643
      %v645 = vrot.slane %v564, 1
      %v646 = vsel %vm606, %v643, %v645
      %v647 = vrot.slane %v548, 1
      %v648 = vrot.slane %v465, 1
      %v649 = vsel %vm606, %v647, %v648
      %v650 = vrot.slane %v565, 1
      %v651 = vsel %vm606, %v648, %v650
      %v652 = vrot.slane %v549, 1
      %v653 = vrot.slane %v468, 1
      %v654 = vsel %vm606, %v652, %v653
      %v655 = vrot.slane %v566, 1
      %v656 = vsel %vm606, %v653, %v655
      %v657 = vrot.slane %v550, 1
      %v658 = vrot.slane %v471, 1
      %v659 = vsel %vm606, %v657, %v658
      %v660 = vrot.slane %v567, 1
      %v661 = vsel %vm606, %v658, %v660
      %v662 = vrot.slane %v551, 1
      %v663 = vrot.slane %v474, 1
      %v664 = vsel %vm606, %v662, %v663
      %v665 = vrot.slane %v568, 1
      %v666 = vsel %vm606, %v663, %v665
      %v667 = vrot.slane %v552, 1
      %v668 = vrot.slane %v477, 1
      %v669 = vsel %vm606, %v667, %v668
      %v670 = vrot.slane %v569, 1
      %v671 = vsel %vm606, %v668, %v670
      %v672 = vrot.slane %v553, 1
      %v673 = vrot.slane %v480, 1
      %v674 = vsel %vm606, %v672, %v673
      %v675 = vrot.slane %v570, 1
      %v676 = vsel %vm606, %v673, %v675
      %v677 = vrot.slane %v554, 1
      %v678 = vrot.slane %v483, 1
      %v679 = vsel %vm606, %v677, %v678
      %v680 = vrot.slane %v571, 1
      %v681 = vsel %vm606, %v678, %v680
      %v682 = vrot.slane %v555, 1
      %v683 = vrot.slane %v486, 1
      %v684 = vsel %vm606, %v682, %v683
      %v685 = vrot.slane %v572, 1
      %v686 = vsel %vm606, %v683, %v685
      %vm719 = vcmask 1045504
      %v720 = vrot.slane %v540, 2
      %v721 = vrot.slane %v441, 2
      %v722 = vsel %vm719, %v720, %v721
      %v723 = vrot.slane %v557, 2
      %v724 = vsel %vm719, %v721, %v723
      %v725 = vrot.slane %v541, 2
      %v726 = vrot.slane %v444, 2
      %v727 = vsel %vm719, %v725, %v726
      %v728 = vrot.slane %v558, 2
      %v729 = vsel %vm719, %v726, %v728
      %v730 = vrot.slane %v542, 2
      %v731 = vrot.slane %v447, 2
      %v732 = vsel %vm719, %v730, %v731
      %v733 = vrot.slane %v559, 2
      %v734 = vsel %vm719, %v731, %v733
      %v735 = vrot.slane %v543, 2
      %v736 = vrot.slane %v450, 2
      %v737 = vsel %vm719, %v735, %v736
      %v738 = vrot.slane %v560, 2
      %v739 = vsel %vm719, %v736, %v738
      %v740 = vrot.slane %v544, 2
      %v741 = vrot.slane %v453, 2
      %v742 = vsel %vm719, %v740, %v741
      %v743 = vrot.slane %v561, 2
      %v744 = vsel %vm719, %v741, %v743
      %v745 = vrot.slane %v545, 2
      %v746 = vrot.slane %v456, 2
      %v747 = vsel %vm719, %v745, %v746
      %v748 = vrot.slane %v562, 2
      %v749 = vsel %vm719, %v746, %v748
      %v750 = vrot.slane %v546, 2
      %v751 = vrot.slane %v459, 2
      %v752 = vsel %vm719, %v750, %v751
      %v753 = vrot.slane %v563, 2
      %v754 = vsel %vm719, %v751, %v753
      %v755 = vrot.slane %v547, 2
      %v756 = vrot.slane %v462, 2
      %v757 = vsel %vm719, %v755, %v756
      %v758 = vrot.slane %v564, 2
      %v759 = vsel %vm719, %v756, %v758
      %v760 = vrot.slane %v548, 2
      %v761 = vrot.slane %v465, 2
      %v762 = vsel %vm719, %v760, %v761
      %v763 = vrot.slane %v565, 2
      %v764 = vsel %vm719, %v761, %v763
      %v765 = vrot.slane %v549, 2
      %v766 = vrot.slane %v468, 2
      %v767 = vsel %vm719, %v765, %v766
      %v768 = vrot.slane %v566, 2
      %v769 = vsel %vm719, %v766, %v768
      %v770 = vrot.slane %v550, 2
      %v771 = vrot.slane %v471, 2
      %v772 = vsel %vm719, %v770, %v771
      %v773 = vrot.slane %v567, 2
      %v774 = vsel %vm719, %v771, %v773
      %v775 = vrot.slane %v551, 2
      %v776 = vrot.slane %v474, 2
      %v777 = vsel %vm719, %v775, %v776
      %v778 = vrot.slane %v568, 2
      %v779 = vsel %vm719, %v776, %v778
      %v780 = vrot.slane %v552, 2
      %v781 = vrot.slane %v477, 2
      %v782 = vsel %vm719, %v780, %v781
      %v783 = vrot.slane %v569, 2
      %v784 = vsel %vm719, %v781, %v783
      %v785 = vrot.slane %v553, 2
      %v786 = vrot.slane %v480, 2
      %v787 = vsel %vm719, %v785, %v786
      %v788 = vrot.slane %v570, 2
      %v789 = vsel %vm719, %v786, %v788
      %v790 = vrot.slane %v554, 2
      %v791 = vrot.slane %v483, 2
      %v792 = vsel %vm719, %v790, %v791
      %v793 = vrot.slane %v571, 2
      %v794 = vsel %vm719, %v791, %v793
      %v795 = vrot.slane %v555, 2
      %v796 = vrot.slane %v486, 2
      %v797 = vsel %vm719, %v795, %v796
      %v798 = vrot.slane %v572, 2
      %v799 = vsel %vm719, %v796, %v798
      %v834 = vrot.slane %v556, 1
      %v835 = vrot.slane %v489, 1
      %v836 = vsel %vm606, %v834, %v835
      %v837 = vrot.slane %v573, 1
      %v838 = vsel %vm606, %v835, %v837
      %v841 = vrot.slane %v556, 2
      %v842 = vrot.slane %v489, 2
      %v843 = vsel %vm719, %v841, %v842
      %v844 = vrot.slane %v573, 2
      %v845 = vsel %vm719, %v842, %v844
      %v848 = vpack.c.bf16 %v441, %v540
      %v849 = vpack.c.bf16 %v611, %v609
      %v850 = vpack.c.bf16 %v724, %v722
      %v851 = vpack.c.bf16 %v444, %v541
      %v852 = vpack.c.bf16 %v616, %v614
      %v853 = vpack.c.bf16 %v729, %v727
      %v854 = vpack.c.bf16 %v447, %v542
      %v855 = vpack.c.bf16 %v621, %v619
      %v856 = vpack.c.bf16 %v734, %v732
      %v857 = vpack.c.bf16 %v450, %v543
      %v858 = vpack.c.bf16 %v626, %v624
      %v859 = vpack.c.bf16 %v739, %v737
      %v860 = vpack.c.bf16 %v453, %v544
      %v861 = vpack.c.bf16 %v631, %v629
      %v862 = vpack.c.bf16 %v744, %v742
      %v863 = vpack.c.bf16 %v456, %v545
      %v864 = vpack.c.bf16 %v636, %v634
      %v865 = vpack.c.bf16 %v749, %v747
      %v866 = vpack.c.bf16 %v459, %v546
      %v867 = vpack.c.bf16 %v641, %v639
      %v868 = vpack.c.bf16 %v754, %v752
      %v869 = vpack.c.bf16 %v462, %v547
      %v870 = vpack.c.bf16 %v646, %v644
      %v871 = vpack.c.bf16 %v759, %v757
      %v872 = vpack.c.bf16 %v465, %v548
      %v873 = vpack.c.bf16 %v651, %v649
      %v874 = vpack.c.bf16 %v764, %v762
      %v875 = vpack.c.bf16 %v468, %v549
      %v876 = vpack.c.bf16 %v656, %v654
      %v877 = vpack.c.bf16 %v769, %v767
      %v878 = vpack.c.bf16 %v471, %v550
      %v879 = vpack.c.bf16 %v661, %v659
      %v880 = vpack.c.bf16 %v774, %v772
      %v881 = vpack.c.bf16 %v474, %v551
      %v882 = vpack.c.bf16 %v666, %v664
      %v883 = vpack.c.bf16 %v779, %v777
      %v884 = vpack.c.bf16 %v477, %v552
      %v885 = vpack.c.bf16 %v671, %v669
      %v886 = vpack.c.bf16 %v784, %v782
      %v887 = vpack.c.bf16 %v480, %v553
      %v888 = vpack.c.bf16 %v676, %v674
      %v889 = vpack.c.bf16 %v789, %v787
      %v890 = vpack.c.bf16 %v483, %v554
      %v891 = vpack.c.bf16 %v681, %v679
      %v892 = vpack.c.bf16 %v794, %v792
      %v893 = vpack.c.bf16 %v486, %v555
      %v894 = vpack.c.bf16 %v686, %v684
      %v895 = vpack.c.bf16 %v799, %v797
      %v896 = vpack.c.bf16 %v489, %v556
      %v897 = vpack.c.bf16 %v838, %v836
      %v898 = vpack.c.bf16 %v845, %v843
      %v899 = vld [vmem:[%s3] sm:$0xf]
      %v900 = vld [vmem:[%s3 + $0x4] sm:$0xf]
      %v901 = vld [vmem:[%s3 + $0x8] sm:$0xf]
      %v902 = vld [vmem:[%s3 + $0xc] sm:$0xf]
      %v903 = vld [vmem:[%s3 + $0x10] sm:$0xf]
      %v904 = vld [vmem:[%s3 + $0x14] sm:$0xf]
      %v905 = vld [vmem:[%s3 + $0x18] sm:$0xf]
      %v906 = vld [vmem:[%s3 + $0x1c] sm:$0xf]
      %v907 = vld [vmem:[%s3 + $0x20] sm:$0xf]
      %v908 = vld [vmem:[%s3 + $0x24] sm:$0xf]
      %v909 = vld [vmem:[%s3 + $0x28] sm:$0xf]
      %v910 = vld [vmem:[%s3 + $0x2c] sm:$0xf]
      %v911 = vld [vmem:[%s3 + $0x30] sm:$0xf]
      %v912 = vld [vmem:[%s3 + $0x34] sm:$0xf]
      %v913 = vld [vmem:[%s3 + $0x38] sm:$0xf]
      %v914 = vld [vmem:[%s3 + $0x3c] sm:$0xf]
      %v915 = vld [vmem:[%s3 + $0x40] sm:$0xf]
      %v916 = vld [vmem:[%s3 + $0x44] sm:$0xf]
      %v917 = vld [vmem:[%s3 + $0x48] sm:$0xf]
      %v918 = vld [vmem:[%s3 + $0x4c] sm:$0xf]
      %v919 = vld [vmem:[%s3 + $0x50] sm:$0xf]
      %v920 = vld [vmem:[%s3 + $0x54] sm:$0xf]
      %v921 = vld [vmem:[%s3 + $0x58] sm:$0xf]
      %v922 = vld [vmem:[%s3 + $0x5c] sm:$0xf]
      %v923 = vld [vmem:[%s3 + $0x60] sm:$0xf]
      %v924 = vld [vmem:[%s3 + $0x64] sm:$0xf]
      %v925 = vld [vmem:[%s3 + $0x68] sm:$0xf]
      %v926 = vld [vmem:[%s3 + $0x6c] sm:$0xf]
      %v927 = vld [vmem:[%s3 + $0x70] sm:$0xf]
      %v928 = vld [vmem:[%s3 + $0x74] sm:$0xf]
      %v929 = vld [vmem:[%s3 + $0x78] sm:$0xf]
      %v930 = vld [vmem:[%s3 + $0x7c] sm:$0xf]
      %v931 = vld [vmem:[%s3 + $0x80] sm:$0xf]
      %v932 = vld [vmem:[%s3 + $0x84] sm:$0xf]
      %v933 = vld [vmem:[%s3 + $0x88] sm:$0xf]
      %v934 = vld [vmem:[%s3 + $0x8c] sm:$0xf]
      %v935 = vld [vmem:[%s3 + $0x90] sm:$0xf]
      %v936 = vld [vmem:[%s3 + $0x94] sm:$0xf]
      %v937 = vld [vmem:[%s3 + $0x98] sm:$0xf]
      %v938 = vld [vmem:[%s3 + $0x9c] sm:$0xf]
      %v939 = vld [vmem:[%s3 + $0xa0] sm:$0xf]
      %v940 = vld [vmem:[%s3 + $0xa4] sm:$0xf]
      %v941 = vld [vmem:[%s3 + $0xa8] sm:$0xf]
      %v942 = vld [vmem:[%s3 + $0xac] sm:$0xf]
      %v943 = vld [vmem:[%s3 + $0xb0] sm:$0xf]
      %v944 = vld [vmem:[%s3 + $0xb4] sm:$0xf]
      %v945 = vld [vmem:[%s3 + $0xb8] sm:$0xf]
      %v946 = vld [vmem:[%s3 + $0xbc] sm:$0xf]
      %v947 = vld [vmem:[%s3 + $0xc0] sm:$0xf]
      %v948 = vld [vmem:[%s3 + $0xc4] sm:$0xf]
      %v949 = vld [vmem:[%s3 + $0xc8] sm:$0xf]
      %v950 = vld [vmem:[%s3 + $0xcc] sm:$0xf]
      %v951 = vld [vmem:[%s3 + $0xd0] sm:$0xf]
      %v952 = vld [vmem:[%s3 + $0xd4] sm:$0xf]
      %v953 = vld [vmem:[%s3 + $0xd8] sm:$0xf]
      %v954 = vld [vmem:[%s3 + $0xdc] sm:$0xf]
      %v955 = vld [vmem:[%s3 + $0xe0] sm:$0xf]
      %v956 = vld [vmem:[%s3 + $0xe4] sm:$0xf]
      %v957 = vld [vmem:[%s3 + $0xe8] sm:$0xf]
      %v958 = vld [vmem:[%s3 + $0xec] sm:$0xf]
      %v959 = vld [vmem:[%s3 + $0xf0] sm:$0xf]
      %v960 = vld [vmem:[%s3 + $0xf4] sm:$0xf]
      %v961 = vld [vmem:[%s3 + $0xf8] sm:$0xf]
      %v962 = vld [vmem:[%s3 + $0xfc] sm:$0xf]
      %v963 = vld [vmem:[%s3 + $0x100] sm:$0xf]
      %v964 = vld [vmem:[%s3 + $0x104] sm:$0xf]
      %v965 = vld [vmem:[%s3 + $0x108] sm:$0xf]
      %v966 = vld [vmem:[%s3 + $0x10c] sm:$0xf]
      %v967 = vld [vmem:[%s3 + $0x110] sm:$0xf]
      %v968 = vld [vmem:[%s3 + $0x114] sm:$0xf]
      %v969 = vld [vmem:[%s3 + $0x118] sm:$0xf]
      %v970 = vld [vmem:[%s3 + $0x11c] sm:$0xf]
      %v971 = vld [vmem:[%s3 + $0x120] sm:$0xf]
      %v972 = vld [vmem:[%s3 + $0x124] sm:$0xf]
      %v973 = vld [vmem:[%s3 + $0x128] sm:$0xf]
      %v974 = vld [vmem:[%s3 + $0x12c] sm:$0xf]
      %v975 = vld [vmem:[%s3 + $0x130] sm:$0xf]
      %v976 = vld [vmem:[%s3 + $0x134] sm:$0xf]
      %v977 = vld [vmem:[%s3 + $0x138] sm:$0xf]
      %v978 = vld [vmem:[%s3 + $0x13c] sm:$0xf]
      %v979 = vld [vmem:[%s3 + $0x140] sm:$0xf]
      %v980 = vld [vmem:[%s3 + $0x144] sm:$0xf]
      %v981 = vld [vmem:[%s3 + $0x148] sm:$0xf]
      %v982 = vld [vmem:[%s3 + $0x14c] sm:$0xf]
      %v983 = vld [vmem:[%s3 + $0x150] sm:$0xf]
      %v984 = vld [vmem:[%s3 + $0x154] sm:$0xf]
      %v985 = vld [vmem:[%s3 + $0x158] sm:$0xf]
      %v986 = vld [vmem:[%s3 + $0x15c] sm:$0xf]
      %v987 = vld [vmem:[%s3 + $0x160] sm:$0xf]
      %v988 = vld [vmem:[%s3 + $0x164] sm:$0xf]
      %v989 = vld [vmem:[%s3 + $0x168] sm:$0xf]
      %v990 = vld [vmem:[%s3 + $0x16c] sm:$0xf]
      %v991 = vld [vmem:[%s3 + $0x170] sm:$0xf]
      %v992 = vld [vmem:[%s3 + $0x174] sm:$0xf]
      %v993 = vld [vmem:[%s3 + $0x178] sm:$0xf]
      %v994 = vld [vmem:[%s3 + $0x17c] sm:$0xf]
      %v995 = vld [vmem:[%s3 + $0x180] sm:$0xf]
      %v996 = vld [vmem:[%s3 + $0x184] sm:$0xf]
      %v997 = vld [vmem:[%s3 + $0x188] sm:$0xf]
      %v998 = vld [vmem:[%s3 + $0x18c] sm:$0xf]
      %v999 = vld [vmem:[%s3 + $0x190] sm:$0xf]
      %v1000 = vld [vmem:[%s3 + $0x194] sm:$0xf]
      %v1001 = vld [vmem:[%s3 + $0x198] sm:$0xf]
      %v1002 = vld [vmem:[%s3 + $0x19c] sm:$0xf]
      %v1003 = vld [vmem:[%s3 + $0x1a0] sm:$0xf]
      %v1004 = vld [vmem:[%s3 + $0x1a4] sm:$0xf]
      %v1005 = vld [vmem:[%s3 + $0x1a8] sm:$0xf]
      %v1006 = vld [vmem:[%s3 + $0x1ac] sm:$0xf]
      %v1007 = vld [vmem:[%s3 + $0x1b0] sm:$0xf]
      %v1008 = vld [vmem:[%s3 + $0x1b4] sm:$0xf]
      %v1009 = vld [vmem:[%s3 + $0x1b8] sm:$0xf]
      %v1010 = vld [vmem:[%s3 + $0x1bc] sm:$0xf]
      %v1011 = vld [vmem:[%s3 + $0x1c0] sm:$0xf]
      %v1012 = vld [vmem:[%s3 + $0x1c4] sm:$0xf]
      %v1013 = vld [vmem:[%s3 + $0x1c8] sm:$0xf]
      %v1014 = vld [vmem:[%s3 + $0x1cc] sm:$0xf]
      %v1015 = vld [vmem:[%s3 + $0x1d0] sm:$0xf]
      %v1016 = vld [vmem:[%s3 + $0x1d4] sm:$0xf]
      %v1017 = vld [vmem:[%s3 + $0x1d8] sm:$0xf]
      %v1018 = vld [vmem:[%s3 + $0x1dc] sm:$0xf]
      %v1019 = vld [vmem:[%s3 + $0x1e0] sm:$0xf]
      %v1020 = vld [vmem:[%s3 + $0x1e4] sm:$0xf]
      %v1021 = vld [vmem:[%s3 + $0x1e8] sm:$0xf]
      %v1022 = vld [vmem:[%s3 + $0x1ec] sm:$0xf]
      %v1023 = vld [vmem:[%s3 + $0x1f0] sm:$0xf]
      %v1024 = vld [vmem:[%s3 + $0x1f4] sm:$0xf]
      %v1025 = vld [vmem:[%s3 + $0x1f8] sm:$0xf]
      %v1026 = vld [vmem:[%s3 + $0x1fc] sm:$0xf]
      %v1027 = vld [vmem:[%s3 + $0x200] sm:$0xf]
      %v1028 = vld [vmem:[%s3 + $0x204] sm:$0xf]
      %v1029 = vld [vmem:[%s3 + $0x208] sm:$0xf]
      %v1030 = vld [vmem:[%s3 + $0x20c] sm:$0xf]
      %v1031 = vld [vmem:[%s3 + $0x210] sm:$0xf]
      %v1032 = vld [vmem:[%s3 + $0x214] sm:$0xf]
      %v1033 = vld [vmem:[%s3 + $0x218] sm:$0xf]
      %v1034 = vld [vmem:[%s3 + $0x21c] sm:$0xf]
      %v1035 = vld [vmem:[%s3 + $0x220] sm:$0xf]
      %v1036 = vld [vmem:[%s3 + $0x224] sm:$0xf]
      %v1037 = vld [vmem:[%s3 + $0x228] sm:$0xf]
      %v1038 = vld [vmem:[%s3 + $0x22c] sm:$0xf]
      %v1039 = vld [vmem:[%s3 + $0x230] sm:$0xf]
      %v1040 = vld [vmem:[%s3 + $0x234] sm:$0xf]
      %v1041 = vld [vmem:[%s3 + $0x238] sm:$0xf]
      %v1042 = vld [vmem:[%s3 + $0x23c] sm:$0xf]
      %v1043 = vld [vmem:[%s4] sm:$0x1]
      %v1045 = vlaneseq
      %v1046 = vshrl.u32 %v1045, 7
      %v1047 = vsub.s32 0, %v1046
      %v1048 = vrot.slane %v1043, %v1047
      %v1194 = vunpack.c.l.b16 %v899
      %v1195 = vunpack.c.l.b16 %v900
      %v1196 = vunpack.c.l.b16 %v901
      %v1197 = vunpack.c.l.b16 %v902
      %v1198 = vunpack.c.l.b16 %v903
      %v1199 = vunpack.c.l.b16 %v904
      %v1200 = vunpack.c.l.b16 %v905
      %v1201 = vunpack.c.l.b16 %v906
      %v1202 = vunpack.c.l.b16 %v907
      %v1203 = vunpack.c.l.b16 %v908
      %v1204 = vunpack.c.l.b16 %v909
      %v1205 = vunpack.c.l.b16 %v910
      %v1206 = vunpack.c.l.b16 %v911
      %v1207 = vunpack.c.l.b16 %v912
      %v1208 = vunpack.c.l.b16 %v913
      %v1209 = vunpack.c.l.b16 %v914
      %v1210 = vunpack.c.l.b16 %v915
      %v1211 = vunpack.c.l.b16 %v916
      %v1212 = vunpack.c.l.b16 %v917
      %v1213 = vunpack.c.l.b16 %v918
      %v1214 = vunpack.c.l.b16 %v919
      %v1215 = vunpack.c.l.b16 %v920
      %v1216 = vunpack.c.l.b16 %v921
      %v1217 = vunpack.c.l.b16 %v922
      %v1218 = vunpack.c.l.b16 %v923
      %v1219 = vunpack.c.l.b16 %v924
      %v1220 = vunpack.c.l.b16 %v925
      %v1221 = vunpack.c.l.b16 %v926
      %v1222 = vunpack.c.l.b16 %v927
      %v1223 = vunpack.c.l.b16 %v928
      %v1224 = vunpack.c.l.b16 %v929
      %v1225 = vunpack.c.l.b16 %v930
      %v1226 = vunpack.c.l.b16 %v931
      %v1227 = vunpack.c.l.b16 %v932
      %v1228 = vunpack.c.l.b16 %v933
      %v1229 = vunpack.c.l.b16 %v934
      %v1230 = vunpack.c.l.b16 %v935
      %v1231 = vunpack.c.l.b16 %v936
      %v1232 = vunpack.c.l.b16 %v937
      %v1233 = vunpack.c.l.b16 %v938
      %v1234 = vunpack.c.l.b16 %v939
      %v1235 = vunpack.c.l.b16 %v940
      %v1236 = vunpack.c.l.b16 %v941
      %v1237 = vunpack.c.l.b16 %v942
      %v1238 = vunpack.c.l.b16 %v943
      %v1239 = vunpack.c.l.b16 %v944
      %v1240 = vunpack.c.l.b16 %v945
      %v1241 = vunpack.c.l.b16 %v946
      %v1242 = vunpack.c.l.b16 %v947
      %v1243 = vunpack.c.l.b16 %v948
      %v1244 = vunpack.c.l.b16 %v949
      %v1245 = vunpack.c.l.b16 %v950
      %v1246 = vunpack.c.l.b16 %v951
      %v1247 = vunpack.c.l.b16 %v952
      %v1248 = vunpack.c.l.b16 %v953
      %v1249 = vunpack.c.l.b16 %v954
      %v1250 = vunpack.c.l.b16 %v955
      %v1251 = vunpack.c.l.b16 %v956
      %v1252 = vunpack.c.l.b16 %v957
      %v1253 = vunpack.c.l.b16 %v958
      %v1254 = vunpack.c.l.b16 %v959
      %v1255 = vunpack.c.l.b16 %v960
      %v1256 = vunpack.c.l.b16 %v961
      %v1257 = vunpack.c.l.b16 %v962
      %v1258 = vunpack.c.l.b16 %v963
      %v1259 = vunpack.c.l.b16 %v964
      %v1260 = vunpack.c.l.b16 %v965
      %v1261 = vunpack.c.l.b16 %v966
      %v1262 = vunpack.c.l.b16 %v967
      %v1263 = vunpack.c.l.b16 %v968
      %v1264 = vunpack.c.l.b16 %v969
      %v1265 = vunpack.c.l.b16 %v970
      %v1266 = vunpack.c.l.b16 %v971
      %v1267 = vunpack.c.l.b16 %v972
      %v1268 = vunpack.c.l.b16 %v973
      %v1269 = vunpack.c.l.b16 %v974
      %v1270 = vunpack.c.l.b16 %v975
      %v1271 = vunpack.c.l.b16 %v976
      %v1272 = vunpack.c.l.b16 %v977
      %v1273 = vunpack.c.l.b16 %v978
      %v1274 = vunpack.c.l.b16 %v979
      %v1275 = vunpack.c.l.b16 %v980
      %v1276 = vunpack.c.l.b16 %v981
      %v1277 = vunpack.c.l.b16 %v982
      %v1278 = vunpack.c.l.b16 %v983
      %v1279 = vunpack.c.l.b16 %v984
      %v1280 = vunpack.c.l.b16 %v985
      %v1281 = vunpack.c.l.b16 %v986
      %v1282 = vunpack.c.l.b16 %v987
      %v1283 = vunpack.c.l.b16 %v988
      %v1284 = vunpack.c.l.b16 %v989
      %v1285 = vunpack.c.l.b16 %v990
      %v1286 = vunpack.c.l.b16 %v991
      %v1287 = vunpack.c.l.b16 %v992
      %v1288 = vunpack.c.l.b16 %v993
      %v1289 = vunpack.c.l.b16 %v994
      %v1290 = vunpack.c.l.b16 %v995
      %v1291 = vunpack.c.l.b16 %v996
      %v1292 = vunpack.c.l.b16 %v997
      %v1293 = vunpack.c.l.b16 %v998
      %v1294 = vunpack.c.l.b16 %v999
      %v1295 = vunpack.c.l.b16 %v1000
      %v1296 = vunpack.c.l.b16 %v1001
      %v1297 = vunpack.c.l.b16 %v1002
      %v1298 = vunpack.c.l.b16 %v1003
      %v1299 = vunpack.c.l.b16 %v1004
      %v1300 = vunpack.c.l.b16 %v1005
      %v1301 = vunpack.c.l.b16 %v1006
      %v1302 = vunpack.c.l.b16 %v1007
      %v1303 = vunpack.c.l.b16 %v1008
      %v1304 = vunpack.c.l.b16 %v1009
      %v1305 = vunpack.c.l.b16 %v1010
      %v1306 = vunpack.c.l.b16 %v1011
      %v1307 = vunpack.c.l.b16 %v1012
      %v1308 = vunpack.c.l.b16 %v1013
      %v1309 = vunpack.c.l.b16 %v1014
      %v1310 = vunpack.c.l.b16 %v1015
      %v1311 = vunpack.c.l.b16 %v1016
      %v1312 = vunpack.c.l.b16 %v1017
      %v1313 = vunpack.c.l.b16 %v1018
      %v1314 = vunpack.c.l.b16 %v1019
      %v1315 = vunpack.c.l.b16 %v1020
      %v1316 = vunpack.c.l.b16 %v1021
      %v1317 = vunpack.c.l.b16 %v1022
      %v1318 = vunpack.c.l.b16 %v1023
      %v1319 = vunpack.c.l.b16 %v1024
      %v1320 = vunpack.c.l.b16 %v1025
      %v1321 = vunpack.c.l.b16 %v1026
      %v1322 = vunpack.c.l.b16 %v1027
      %v1323 = vunpack.c.l.b16 %v1028
      %v1324 = vunpack.c.l.b16 %v1029
      %v1325 = vunpack.c.l.b16 %v1030
      %v1326 = vunpack.c.l.b16 %v1031
      %v1327 = vunpack.c.l.b16 %v1032
      %v1328 = vunpack.c.l.b16 %v1033
      %v1329 = vunpack.c.l.b16 %v1034
      %v1330 = vunpack.c.l.b16 %v1035
      %v1331 = vunpack.c.l.b16 %v1036
      %v1332 = vunpack.c.l.b16 %v1037
      %v1333 = vunpack.c.l.b16 %v1038
      %v1334 = vunpack.c.l.b16 %v1039
      %v1335 = vunpack.c.l.b16 %v1040
      %v1336 = vunpack.c.l.b16 %v1041
      %v1337 = vunpack.c.l.b16 %v1042
      %v1338 = vpack.c.b16 %v1195, %v1194
      %v1339 = vpack.c.b16 %v1197, %v1196
      %v1340 = vpack.c.b16 %v1199, %v1198
      %v1341 = vpack.c.b16 %v1201, %v1200
      %v1342 = vpack.c.b16 %v1203, %v1202
      %v1343 = vpack.c.b16 %v1205, %v1204
      %v1344 = vpack.c.b16 %v1207, %v1206
      %v1345 = vpack.c.b16 %v1209, %v1208
      %v1346 = vpack.c.b16 %v1211, %v1210
      %v1347 = vpack.c.b16 %v1213, %v1212
      %v1348 = vpack.c.b16 %v1215, %v1214
      %v1349 = vpack.c.b16 %v1217, %v1216
      %v1350 = vpack.c.b16 %v1219, %v1218
      %v1351 = vpack.c.b16 %v1221, %v1220
      %v1352 = vpack.c.b16 %v1223, %v1222
      %v1353 = vpack.c.b16 %v1225, %v1224
      %v1354 = vpack.c.b16 %v1227, %v1226
      %v1355 = vpack.c.b16 %v1229, %v1228
      %v1356 = vpack.c.b16 %v1231, %v1230
      %v1357 = vpack.c.b16 %v1233, %v1232
      %v1358 = vpack.c.b16 %v1235, %v1234
      %v1359 = vpack.c.b16 %v1237, %v1236
      %v1360 = vpack.c.b16 %v1239, %v1238
      %v1361 = vpack.c.b16 %v1241, %v1240
      %v1362 = vpack.c.b16 %v1243, %v1242
      %v1363 = vpack.c.b16 %v1245, %v1244
      %v1364 = vpack.c.b16 %v1247, %v1246
      %v1365 = vpack.c.b16 %v1249, %v1248
      %v1366 = vpack.c.b16 %v1251, %v1250
      %v1367 = vpack.c.b16 %v1253, %v1252
      %v1368 = vpack.c.b16 %v1255, %v1254
      %v1369 = vpack.c.b16 %v1257, %v1256
      %v1370 = vpack.c.b16 %v1259, %v1258
      %v1371 = vpack.c.b16 %v1261, %v1260
      %v1372 = vpack.c.b16 %v1263, %v1262
      %v1373 = vpack.c.b16 %v1265, %v1264
      %v1374 = vpack.c.b16 %v1267, %v1266
      %v1375 = vpack.c.b16 %v1269, %v1268
      %v1376 = vpack.c.b16 %v1271, %v1270
      %v1377 = vpack.c.b16 %v1273, %v1272
      %v1378 = vpack.c.b16 %v1275, %v1274
      %v1379 = vpack.c.b16 %v1277, %v1276
      %v1380 = vpack.c.b16 %v1279, %v1278
      %v1381 = vpack.c.b16 %v1281, %v1280
      %v1382 = vpack.c.b16 %v1283, %v1282
      %v1383 = vpack.c.b16 %v1285, %v1284
      %v1384 = vpack.c.b16 %v1287, %v1286
      %v1385 = vpack.c.b16 %v1289, %v1288
      %v1386 = vpack.c.b16 %v1291, %v1290
      %v1387 = vpack.c.b16 %v1293, %v1292
      %v1388 = vpack.c.b16 %v1295, %v1294
      %v1389 = vpack.c.b16 %v1297, %v1296
      %v1390 = vpack.c.b16 %v1299, %v1298
      %v1391 = vpack.c.b16 %v1301, %v1300
      %v1392 = vpack.c.b16 %v1303, %v1302
      %v1393 = vpack.c.b16 %v1305, %v1304
      %v1394 = vpack.c.b16 %v1307, %v1306
      %v1395 = vpack.c.b16 %v1309, %v1308
      %v1396 = vpack.c.b16 %v1311, %v1310
      %v1397 = vpack.c.b16 %v1313, %v1312
      %v1398 = vpack.c.b16 %v1315, %v1314
      %v1399 = vpack.c.b16 %v1317, %v1316
      %v1400 = vpack.c.b16 %v1319, %v1318
      %v1401 = vpack.c.b16 %v1321, %v1320
      %v1402 = vpack.c.b16 %v1323, %v1322
      %v1403 = vpack.c.b16 %v1325, %v1324
      %v1404 = vpack.c.b16 %v1327, %v1326
      %v1405 = vpack.c.b16 %v1329, %v1328
      %v1406 = vpack.c.b16 %v1331, %v1330
      %v1407 = vpack.c.b16 %v1333, %v1332
      %v1408 = vpack.c.b16 %v1335, %v1334
      %v1409 = vpack.c.b16 %v1337, %v1336
      %1482 = vmatprep.subr.bf16.mxu0 0
      %1483 = vmatpush1.bf16.msra.mxu0 %v1345
      %1484 = vmatprep.subr.bf16.mxu0 0
      %1485 = vmatpush1.bf16.msra.mxu0 %v1344
      %1486 = vmatprep.subr.bf16.mxu0 0
      %1487 = vmatpush1.bf16.msra.mxu0 %v1343
      %1488 = vmatprep.subr.bf16.mxu0 0
      %1489 = vmatpush1.bf16.msra.mxu0 %v1342
      %1490 = vmatprep.subr.bf16.mxu0 0
      %1491 = vmatpush1.bf16.msra.mxu0 %v1341
      %1492 = vmatprep.subr.bf16.mxu0 0
      %1493 = vmatpush1.bf16.msra.mxu0 %v1340
      %1494 = vmatprep.subr.bf16.mxu0 0
      %1495 = vmatpush1.bf16.msra.mxu0 %v1339
      %1496 = vmatprep.subr.bf16.mxu0 0
      %1497 = vmatpush1.bf16.msra.mxu0 %v1338
      %1498 = vmatprep.subr.bf16.mxu0 0
      %1499 = vmatpush2.bf16.msra.mxu0 %v1353
      %1500 = vmatprep.subr.bf16.mxu0 0
      %1501 = vmatpush2.bf16.msra.mxu0 %v1352
      %1502 = vmatprep.subr.bf16.mxu0 0
      %1503 = vmatpush2.bf16.msra.mxu0 %v1351
      %1504 = vmatprep.subr.bf16.mxu0 0
      %1505 = vmatpush2.bf16.msra.mxu0 %v1350
      %1506 = vmatprep.subr.bf16.mxu0 0
      %1507 = vmatpush2.bf16.msra.mxu0 %v1349
      %1508 = vmatprep.subr.bf16.mxu0 0
      %1509 = vmatpush2.bf16.msra.mxu0 %v1348
      %1510 = vmatprep.subr.bf16.mxu0 0
      %1511 = vmatpush2.bf16.msra.mxu0 %v1347
      %1512 = vmatprep.subr.bf16.mxu0 0
      %1513 = vmatpush2.bf16.msra.mxu0 %v1346
      %1514 = vmatprep.mubr.bf16.mxu0 %v849
      %1515 = vmatmul.mubr.bf16.gmra.mxu0 %v848
      %v1516 = vpop.f32.mrf.mxu0
      %v1517 = vadd.f32 %v1048, %v1516
      %v1518 = vpop.f32.mrf.mxu0
      %v1519 = vpop.f32.mrf.mxu0
      %v1520 = vadd.f32 %v1048, %v1519
      %v1521 = vpop.f32.mrf.mxu0
      %1522 = vmatprep.mubr.bf16.mxu0 %v852
      %1523 = vmatmul.mubr.bf16.gmra.mxu0 %v851
      %v1524 = vpop.f32.mrf.mxu0
      %v1525 = vadd.f32 %v1048, %v1524
      %v1526 = vpop.f32.mrf.mxu0
      %v1527 = vpop.f32.mrf.mxu0
      %v1528 = vadd.f32 %v1048, %v1527
      %v1529 = vpop.f32.mrf.mxu0
      %1530 = vmatprep.mubr.bf16.mxu0 %v855
      %1531 = vmatmul.mubr.bf16.gmra.mxu0 %v854
      %v1532 = vpop.f32.mrf.mxu0
      %v1533 = vadd.f32 %v1048, %v1532
      %v1534 = vpop.f32.mrf.mxu0
      %v1535 = vpop.f32.mrf.mxu0
      %v1536 = vadd.f32 %v1048, %v1535
      %v1537 = vpop.f32.mrf.mxu0
      %1538 = vmatprep.mubr.bf16.mxu0 %v858
      %1539 = vmatmul.mubr.bf16.gmra.mxu0 %v857
      %v1540 = vpop.f32.mrf.mxu0
      %v1541 = vadd.f32 %v1048, %v1540
      %v1542 = vpop.f32.mrf.mxu0
      %v1543 = vpop.f32.mrf.mxu0
      %v1544 = vadd.f32 %v1048, %v1543
      %v1545 = vpop.f32.mrf.mxu0
      %1546 = vmatprep.mubr.bf16.mxu0 %v861
      %1547 = vmatmul.mubr.bf16.gmra.mxu0 %v860
      %v1548 = vpop.f32.mrf.mxu0
      %v1549 = vadd.f32 %v1048, %v1548
      %v1550 = vpop.f32.mrf.mxu0
      %v1551 = vpop.f32.mrf.mxu0
      %v1552 = vadd.f32 %v1048, %v1551
      %v1553 = vpop.f32.mrf.mxu0
      %1554 = vmatprep.mubr.bf16.mxu0 %v864
      %1555 = vmatmul.mubr.bf16.gmra.mxu0 %v863
      %v1556 = vpop.f32.mrf.mxu0
      %v1557 = vadd.f32 %v1048, %v1556
      %v1558 = vpop.f32.mrf.mxu0
      %v1559 = vpop.f32.mrf.mxu0
      %v1560 = vadd.f32 %v1048, %v1559
      %v1561 = vpop.f32.mrf.mxu0
      %1562 = vmatprep.mubr.bf16.mxu0 %v867
      %1563 = vmatmul.mubr.bf16.gmra.mxu0 %v866
      %v1564 = vpop.f32.mrf.mxu0
      %v1565 = vadd.f32 %v1048, %v1564
      %v1566 = vpop.f32.mrf.mxu0
      %v1567 = vpop.f32.mrf.mxu0
      %v1568 = vadd.f32 %v1048, %v1567
      %v1569 = vpop.f32.mrf.mxu0
      %1570 = vmatprep.mubr.bf16.mxu0 %v870
      %1571 = vmatmul.mubr.bf16.gmra.mxu0 %v869
      %v1572 = vpop.f32.mrf.mxu0
      %v1573 = vadd.f32 %v1048, %v1572
      %v1574 = vpop.f32.mrf.mxu0
      %v1575 = vpop.f32.mrf.mxu0
      %v1576 = vadd.f32 %v1048, %v1575
      %v1577 = vpop.f32.mrf.mxu0
      %1578 = vmatprep.mubr.bf16.mxu0 %v873
      %1579 = vmatmul.mubr.bf16.gmra.mxu0 %v872
      %v1580 = vpop.f32.mrf.mxu0
      %v1581 = vadd.f32 %v1048, %v1580
      %v1582 = vpop.f32.mrf.mxu0
      %v1583 = vpop.f32.mrf.mxu0
      %v1584 = vadd.f32 %v1048, %v1583
      %v1585 = vpop.f32.mrf.mxu0
      %1586 = vmatprep.mubr.bf16.mxu0 %v876
      %1587 = vmatmul.mubr.bf16.gmra.mxu0 %v875
      %v1588 = vpop.f32.mrf.mxu0
      %v1589 = vadd.f32 %v1048, %v1588
      %v1590 = vpop.f32.mrf.mxu0
      %v1591 = vpop.f32.mrf.mxu0
      %v1592 = vadd.f32 %v1048, %v1591
      %v1593 = vpop.f32.mrf.mxu0
      %1594 = vmatprep.mubr.bf16.mxu0 %v879
      %1595 = vmatmul.mubr.bf16.gmra.mxu0 %v878
      %v1596 = vpop.f32.mrf.mxu0
      %v1597 = vadd.f32 %v1048, %v1596
      %v1598 = vpop.f32.mrf.mxu0
      %v1599 = vpop.f32.mrf.mxu0
      %v1600 = vadd.f32 %v1048, %v1599
      %v1601 = vpop.f32.mrf.mxu0
      %1602 = vmatprep.mubr.bf16.mxu0 %v882
      %1603 = vmatmul.mubr.bf16.gmra.mxu0 %v881
      %v1604 = vpop.f32.mrf.mxu0
      %v1605 = vadd.f32 %v1048, %v1604
      %v1606 = vpop.f32.mrf.mxu0
      %v1607 = vpop.f32.mrf.mxu0
      %v1608 = vadd.f32 %v1048, %v1607
      %v1609 = vpop.f32.mrf.mxu0
      %1610 = vmatprep.mubr.bf16.mxu0 %v885
      %1611 = vmatmul.mubr.bf16.gmra.mxu0 %v884
      %v1612 = vpop.f32.mrf.mxu0
      %v1613 = vadd.f32 %v1048, %v1612
      %v1614 = vpop.f32.mrf.mxu0
      %v1615 = vpop.f32.mrf.mxu0
      %v1616 = vadd.f32 %v1048, %v1615
      %v1617 = vpop.f32.mrf.mxu0
      %1618 = vmatprep.mubr.bf16.mxu0 %v888
      %1619 = vmatmul.mubr.bf16.gmra.mxu0 %v887
      %v1620 = vpop.f32.mrf.mxu0
      %v1621 = vadd.f32 %v1048, %v1620
      %v1622 = vpop.f32.mrf.mxu0
      %v1623 = vpop.f32.mrf.mxu0
      %v1624 = vadd.f32 %v1048, %v1623
      %v1625 = vpop.f32.mrf.mxu0
      %1626 = vmatprep.mubr.bf16.mxu0 %v891
      %1627 = vmatmul.mubr.bf16.gmra.mxu0 %v890
      %v1628 = vpop.f32.mrf.mxu0
      %v1629 = vadd.f32 %v1048, %v1628
      %v1630 = vpop.f32.mrf.mxu0
      %v1631 = vpop.f32.mrf.mxu0
      %v1632 = vadd.f32 %v1048, %v1631
      %v1633 = vpop.f32.mrf.mxu0
      %1634 = vmatprep.mubr.bf16.mxu0 %v894
      %1635 = vmatmul.mubr.bf16.gmra.mxu0 %v893
      %v1636 = vpop.f32.mrf.mxu0
      %v1637 = vadd.f32 %v1048, %v1636
      %v1638 = vpop.f32.mrf.mxu0
      %v1639 = vpop.f32.mrf.mxu0
      %v1640 = vadd.f32 %v1048, %v1639
      %v1641 = vpop.f32.mrf.mxu0
      %1642 = vdwg.mxu0
      %1643 = vmatprep.subr.bf16.mxu0 0
      %1644 = vmatpush1.bf16.msra.mxu0 %v1361
      %1645 = vmatprep.subr.bf16.mxu0 0
      %1646 = vmatpush1.bf16.msra.mxu0 %v1360
      %1647 = vmatprep.subr.bf16.mxu0 0
      %1648 = vmatpush1.bf16.msra.mxu0 %v1359
      %1649 = vmatprep.subr.bf16.mxu0 0
      %1650 = vmatpush1.bf16.msra.mxu0 %v1358
      %1651 = vmatprep.subr.bf16.mxu0 0
      %1652 = vmatpush1.bf16.msra.mxu0 %v1357
      %1653 = vmatprep.subr.bf16.mxu0 0
      %1654 = vmatpush1.bf16.msra.mxu0 %v1356
      %1655 = vmatprep.subr.bf16.mxu0 0
      %1656 = vmatpush1.bf16.msra.mxu0 %v1355
      %1657 = vmatprep.subr.bf16.mxu0 0
      %1658 = vmatpush1.bf16.msra.mxu0 %v1354
      %1659 = vmatprep.subr.bf16.mxu0 0
      %1660 = vmatpush2.bf16.msra.mxu0 %v1369
      %1661 = vmatprep.subr.bf16.mxu0 0
      %1662 = vmatpush2.bf16.msra.mxu0 %v1368
      %1663 = vmatprep.subr.bf16.mxu0 0
      %1664 = vmatpush2.bf16.msra.mxu0 %v1367
      %1665 = vmatprep.subr.bf16.mxu0 0
      %1666 = vmatpush2.bf16.msra.mxu0 %v1366
      %1667 = vmatprep.subr.bf16.mxu0 0
      %1668 = vmatpush2.bf16.msra.mxu0 %v1365
      %1669 = vmatprep.subr.bf16.mxu0 0
      %1670 = vmatpush2.bf16.msra.mxu0 %v1364
      %1671 = vmatprep.subr.bf16.mxu0 0
      %1672 = vmatpush2.bf16.msra.mxu0 %v1363
      %1673 = vmatprep.subr.bf16.mxu0 0
      %1674 = vmatpush2.bf16.msra.mxu0 %v1362
      %1675 = vmatprep.mubr.bf16.mxu0 %v851
      %1676 = vmatmul.mubr.bf16.gmra.mxu0 %v850
      %v1677 = vpop.f32.mrf.mxu0
      %v1678 = vadd.f32 %v1517, %v1677
      %v1679 = vpop.f32.mrf.mxu0
      %v1680 = vpop.f32.mrf.mxu0
      %v1681 = vadd.f32 %v1520, %v1680
      %v1682 = vpop.f32.mrf.mxu0
      %1683 = vmatprep.mubr.bf16.mxu0 %v854
      %1684 = vmatmul.mubr.bf16.gmra.mxu0 %v853
      %v1685 = vpop.f32.mrf.mxu0
      %v1686 = vadd.f32 %v1525, %v1685
      %v1687 = vpop.f32.mrf.mxu0
      %v1688 = vpop.f32.mrf.mxu0
      %v1689 = vadd.f32 %v1528, %v1688
      %v1690 = vpop.f32.mrf.mxu0
      %1691 = vmatprep.mubr.bf16.mxu0 %v857
      %1692 = vmatmul.mubr.bf16.gmra.mxu0 %v856
      %v1693 = vpop.f32.mrf.mxu0
      %v1694 = vadd.f32 %v1533, %v1693
      %v1695 = vpop.f32.mrf.mxu0
      %v1696 = vpop.f32.mrf.mxu0
      %v1697 = vadd.f32 %v1536, %v1696
      %v1698 = vpop.f32.mrf.mxu0
      %1699 = vmatprep.mubr.bf16.mxu0 %v860
      %1700 = vmatmul.mubr.bf16.gmra.mxu0 %v859
      %v1701 = vpop.f32.mrf.mxu0
      %v1702 = vadd.f32 %v1541, %v1701
      %v1703 = vpop.f32.mrf.mxu0
      %v1704 = vpop.f32.mrf.mxu0
      %v1705 = vadd.f32 %v1544, %v1704
      %v1706 = vpop.f32.mrf.mxu0
      %1707 = vmatprep.mubr.bf16.mxu0 %v863
      %1708 = vmatmul.mubr.bf16.gmra.mxu0 %v862
      %v1709 = vpop.f32.mrf.mxu0
      %v1710 = vadd.f32 %v1549, %v1709
      %v1711 = vpop.f32.mrf.mxu0
      %v1712 = vpop.f32.mrf.mxu0
      %v1713 = vadd.f32 %v1552, %v1712
      %v1714 = vpop.f32.mrf.mxu0
      %1715 = vmatprep.mubr.bf16.mxu0 %v866
      %1716 = vmatmul.mubr.bf16.gmra.mxu0 %v865
      %v1717 = vpop.f32.mrf.mxu0
      %v1718 = vadd.f32 %v1557, %v1717
      %v1719 = vpop.f32.mrf.mxu0
      %v1720 = vpop.f32.mrf.mxu0
      %v1721 = vadd.f32 %v1560, %v1720
      %v1722 = vpop.f32.mrf.mxu0
      %1723 = vmatprep.mubr.bf16.mxu0 %v869
      %1724 = vmatmul.mubr.bf16.gmra.mxu0 %v868
      %v1725 = vpop.f32.mrf.mxu0
      %v1726 = vadd.f32 %v1565, %v1725
      %v1727 = vpop.f32.mrf.mxu0
      %v1728 = vpop.f32.mrf.mxu0
      %v1729 = vadd.f32 %v1568, %v1728
      %v1730 = vpop.f32.mrf.mxu0
      %1731 = vmatprep.mubr.bf16.mxu0 %v872
      %1732 = vmatmul.mubr.bf16.gmra.mxu0 %v871
      %v1733 = vpop.f32.mrf.mxu0
      %v1734 = vadd.f32 %v1573, %v1733
      %v1735 = vpop.f32.mrf.mxu0
      %v1736 = vpop.f32.mrf.mxu0
      %v1737 = vadd.f32 %v1576, %v1736
      %v1738 = vpop.f32.mrf.mxu0
      %1739 = vmatprep.mubr.bf16.mxu0 %v875
      %1740 = vmatmul.mubr.bf16.gmra.mxu0 %v874
      %v1741 = vpop.f32.mrf.mxu0
      %v1742 = vadd.f32 %v1581, %v1741
      %v1743 = vpop.f32.mrf.mxu0
      %v1744 = vpop.f32.mrf.mxu0
      %v1745 = vadd.f32 %v1584, %v1744
      %v1746 = vpop.f32.mrf.mxu0
      %1747 = vmatprep.mubr.bf16.mxu0 %v878
      %1748 = vmatmul.mubr.bf16.gmra.mxu0 %v877
      %v1749 = vpop.f32.mrf.mxu0
      %v1750 = vadd.f32 %v1589, %v1749
      %v1751 = vpop.f32.mrf.mxu0
      %v1752 = vpop.f32.mrf.mxu0
      %v1753 = vadd.f32 %v1592, %v1752
      %v1754 = vpop.f32.mrf.mxu0
      %1755 = vmatprep.mubr.bf16.mxu0 %v881
      %1756 = vmatmul.mubr.bf16.gmra.mxu0 %v880
      %v1757 = vpop.f32.mrf.mxu0
      %v1758 = vadd.f32 %v1597, %v1757
      %v1759 = vpop.f32.mrf.mxu0
      %v1760 = vpop.f32.mrf.mxu0
      %v1761 = vadd.f32 %v1600, %v1760
      %v1762 = vpop.f32.mrf.mxu0
      %1763 = vmatprep.mubr.bf16.mxu0 %v884
      %1764 = vmatmul.mubr.bf16.gmra.mxu0 %v883
      %v1765 = vpop.f32.mrf.mxu0
      %v1766 = vadd.f32 %v1605, %v1765
      %v1767 = vpop.f32.mrf.mxu0
      %v1768 = vpop.f32.mrf.mxu0
      %v1769 = vadd.f32 %v1608, %v1768
      %v1770 = vpop.f32.mrf.mxu0
      %1771 = vmatprep.mubr.bf16.mxu0 %v887
      %1772 = vmatmul.mubr.bf16.gmra.mxu0 %v886
      %v1773 = vpop.f32.mrf.mxu0
      %v1774 = vadd.f32 %v1613, %v1773
      %v1775 = vpop.f32.mrf.mxu0
      %v1776 = vpop.f32.mrf.mxu0
      %v1777 = vadd.f32 %v1616, %v1776
      %v1778 = vpop.f32.mrf.mxu0
      %1779 = vmatprep.mubr.bf16.mxu0 %v890
      %1780 = vmatmul.mubr.bf16.gmra.mxu0 %v889
      %v1781 = vpop.f32.mrf.mxu0
      %v1782 = vadd.f32 %v1621, %v1781
      %v1783 = vpop.f32.mrf.mxu0
      %v1784 = vpop.f32.mrf.mxu0
      %v1785 = vadd.f32 %v1624, %v1784
      %v1786 = vpop.f32.mrf.mxu0
      %1787 = vmatprep.mubr.bf16.mxu0 %v893
      %1788 = vmatmul.mubr.bf16.gmra.mxu0 %v892
      %v1789 = vpop.f32.mrf.mxu0
      %v1790 = vadd.f32 %v1629, %v1789
      %v1791 = vpop.f32.mrf.mxu0
      %v1792 = vpop.f32.mrf.mxu0
      %v1793 = vadd.f32 %v1632, %v1792
      %v1794 = vpop.f32.mrf.mxu0
      %1795 = vmatprep.mubr.bf16.mxu0 %v896
      %1796 = vmatmul.mubr.bf16.gmra.mxu0 %v895
      %v1797 = vpop.f32.mrf.mxu0
      %v1798 = vadd.f32 %v1637, %v1797
      %v1799 = vpop.f32.mrf.mxu0
      %v1800 = vpop.f32.mrf.mxu0
      %v1801 = vadd.f32 %v1640, %v1800
      %v1802 = vpop.f32.mrf.mxu0
      %1803 = vdwg.mxu0
      %1804 = vmatprep.subr.bf16.mxu0 0
      %1805 = vmatpush1.bf16.msra.mxu0 %v1377
      %1806 = vmatprep.subr.bf16.mxu0 0
      %1807 = vmatpush1.bf16.msra.mxu0 %v1376
      %1808 = vmatprep.subr.bf16.mxu0 0
      %1809 = vmatpush1.bf16.msra.mxu0 %v1375
      %1810 = vmatprep.subr.bf16.mxu0 0
      %1811 = vmatpush1.bf16.msra.mxu0 %v1374
      %1812 = vmatprep.subr.bf16.mxu0 0
      %1813 = vmatpush1.bf16.msra.mxu0 %v1373
      %1814 = vmatprep.subr.bf16.mxu0 0
      %1815 = vmatpush1.bf16.msra.mxu0 %v1372
      %1816 = vmatprep.subr.bf16.mxu0 0
      %1817 = vmatpush1.bf16.msra.mxu0 %v1371
      %1818 = vmatprep.subr.bf16.mxu0 0
      %1819 = vmatpush1.bf16.msra.mxu0 %v1370
      %1820 = vmatprep.subr.bf16.mxu0 0
      %1821 = vmatpush2.bf16.msra.mxu0 %v1385
      %1822 = vmatprep.subr.bf16.mxu0 0
      %1823 = vmatpush2.bf16.msra.mxu0 %v1384
      %1824 = vmatprep.subr.bf16.mxu0 0
      %1825 = vmatpush2.bf16.msra.mxu0 %v1383
      %1826 = vmatprep.subr.bf16.mxu0 0
      %1827 = vmatpush2.bf16.msra.mxu0 %v1382
      %1828 = vmatprep.subr.bf16.mxu0 0
      %1829 = vmatpush2.bf16.msra.mxu0 %v1381
      %1830 = vmatprep.subr.bf16.mxu0 0
      %1831 = vmatpush2.bf16.msra.mxu0 %v1380
      %1832 = vmatprep.subr.bf16.mxu0 0
      %1833 = vmatpush2.bf16.msra.mxu0 %v1379
      %1834 = vmatprep.subr.bf16.mxu0 0
      %1835 = vmatpush2.bf16.msra.mxu0 %v1378
      %1836 = vmatprep.mubr.bf16.mxu0 %v853
      %1837 = vmatmul.mubr.bf16.gmra.mxu0 %v852
      %v1838 = vpop.f32.mrf.mxu0
      %v1839 = vadd.f32 %v1678, %v1838
      %v1840 = vpop.f32.mrf.mxu0
      %v1841 = vpop.f32.mrf.mxu0
      %v1842 = vadd.f32 %v1681, %v1841
      %v1843 = vpop.f32.mrf.mxu0
      %1844 = vmatprep.mubr.bf16.mxu0 %v856
      %1845 = vmatmul.mubr.bf16.gmra.mxu0 %v855
      %v1846 = vpop.f32.mrf.mxu0
      %v1847 = vadd.f32 %v1686, %v1846
      %v1848 = vpop.f32.mrf.mxu0
      %v1849 = vpop.f32.mrf.mxu0
      %v1850 = vadd.f32 %v1689, %v1849
      %v1851 = vpop.f32.mrf.mxu0
      %1852 = vmatprep.mubr.bf16.mxu0 %v859
      %1853 = vmatmul.mubr.bf16.gmra.mxu0 %v858
      %v1854 = vpop.f32.mrf.mxu0
      %v1855 = vadd.f32 %v1694, %v1854
      %v1856 = vpop.f32.mrf.mxu0
      %v1857 = vpop.f32.mrf.mxu0
      %v1858 = vadd.f32 %v1697, %v1857
      %v1859 = vpop.f32.mrf.mxu0
      %1860 = vmatprep.mubr.bf16.mxu0 %v862
      %1861 = vmatmul.mubr.bf16.gmra.mxu0 %v861
      %v1862 = vpop.f32.mrf.mxu0
      %v1863 = vadd.f32 %v1702, %v1862
      %v1864 = vpop.f32.mrf.mxu0
      %v1865 = vpop.f32.mrf.mxu0
      %v1866 = vadd.f32 %v1705, %v1865
      %v1867 = vpop.f32.mrf.mxu0
      %1868 = vmatprep.mubr.bf16.mxu0 %v865
      %1869 = vmatmul.mubr.bf16.gmra.mxu0 %v864
      %v1870 = vpop.f32.mrf.mxu0
      %v1871 = vadd.f32 %v1710, %v1870
      %v1872 = vpop.f32.mrf.mxu0
      %v1873 = vpop.f32.mrf.mxu0
      %v1874 = vadd.f32 %v1713, %v1873
      %v1875 = vpop.f32.mrf.mxu0
      %1876 = vmatprep.mubr.bf16.mxu0 %v868
      %1877 = vmatmul.mubr.bf16.gmra.mxu0 %v867
      %v1878 = vpop.f32.mrf.mxu0
      %v1879 = vadd.f32 %v1718, %v1878
      %v1880 = vpop.f32.mrf.mxu0
      %v1881 = vpop.f32.mrf.mxu0
      %v1882 = vadd.f32 %v1721, %v1881
      %v1883 = vpop.f32.mrf.mxu0
      %1884 = vmatprep.mubr.bf16.mxu0 %v871
      %1885 = vmatmul.mubr.bf16.gmra.mxu0 %v870
      %v1886 = vpop.f32.mrf.mxu0
      %v1887 = vadd.f32 %v1726, %v1886
      %v1888 = vpop.f32.mrf.mxu0
      %v1889 = vpop.f32.mrf.mxu0
      %v1890 = vadd.f32 %v1729, %v1889
      %v1891 = vpop.f32.mrf.mxu0
      %1892 = vmatprep.mubr.bf16.mxu0 %v874
      %1893 = vmatmul.mubr.bf16.gmra.mxu0 %v873
      %v1894 = vpop.f32.mrf.mxu0
      %v1895 = vadd.f32 %v1734, %v1894
      %v1896 = vpop.f32.mrf.mxu0
      %v1897 = vpop.f32.mrf.mxu0
      %v1898 = vadd.f32 %v1737, %v1897
      %v1899 = vpop.f32.mrf.mxu0
      %1900 = vmatprep.mubr.bf16.mxu0 %v877
      %1901 = vmatmul.mubr.bf16.gmra.mxu0 %v876
      %v1902 = vpop.f32.mrf.mxu0
      %v1903 = vadd.f32 %v1742, %v1902
      %v1904 = vpop.f32.mrf.mxu0
      %v1905 = vpop.f32.mrf.mxu0
      %v1906 = vadd.f32 %v1745, %v1905
      %v1907 = vpop.f32.mrf.mxu0
      %1908 = vmatprep.mubr.bf16.mxu0 %v880
      %1909 = vmatmul.mubr.bf16.gmra.mxu0 %v879
      %v1910 = vpop.f32.mrf.mxu0
      %v1911 = vadd.f32 %v1750, %v1910
      %v1912 = vpop.f32.mrf.mxu0
      %v1913 = vpop.f32.mrf.mxu0
      %v1914 = vadd.f32 %v1753, %v1913
      %v1915 = vpop.f32.mrf.mxu0
      %1916 = vmatprep.mubr.bf16.mxu0 %v883
      %1917 = vmatmul.mubr.bf16.gmra.mxu0 %v882
      %v1918 = vpop.f32.mrf.mxu0
      %v1919 = vadd.f32 %v1758, %v1918
      %v1920 = vpop.f32.mrf.mxu0
      %v1921 = vpop.f32.mrf.mxu0
      %v1922 = vadd.f32 %v1761, %v1921
      %v1923 = vpop.f32.mrf.mxu0
      %1924 = vmatprep.mubr.bf16.mxu0 %v886
      %1925 = vmatmul.mubr.bf16.gmra.mxu0 %v885
      %v1926 = vpop.f32.mrf.mxu0
      %v1927 = vadd.f32 %v1766, %v1926
      %v1928 = vpop.f32.mrf.mxu0
      %v1929 = vpop.f32.mrf.mxu0
      %v1930 = vadd.f32 %v1769, %v1929
      %v1931 = vpop.f32.mrf.mxu0
      %1932 = vmatprep.mubr.bf16.mxu0 %v889
      %1933 = vmatmul.mubr.bf16.gmra.mxu0 %v888
      %v1934 = vpop.f32.mrf.mxu0
      %v1935 = vadd.f32 %v1774, %v1934
      %v1936 = vpop.f32.mrf.mxu0
      %v1937 = vpop.f32.mrf.mxu0
      %v1938 = vadd.f32 %v1777, %v1937
      %v1939 = vpop.f32.mrf.mxu0
      %1940 = vmatprep.mubr.bf16.mxu0 %v892
      %1941 = vmatmul.mubr.bf16.gmra.mxu0 %v891
      %v1942 = vpop.f32.mrf.mxu0
      %v1943 = vadd.f32 %v1782, %v1942
      %v1944 = vpop.f32.mrf.mxu0
      %v1945 = vpop.f32.mrf.mxu0
      %v1946 = vadd.f32 %v1785, %v1945
      %v1947 = vpop.f32.mrf.mxu0
      %1948 = vmatprep.mubr.bf16.mxu0 %v895
      %1949 = vmatmul.mubr.bf16.gmra.mxu0 %v894
      %v1950 = vpop.f32.mrf.mxu0
      %v1951 = vadd.f32 %v1790, %v1950
      %v1952 = vpop.f32.mrf.mxu0
      %v1953 = vpop.f32.mrf.mxu0
      %v1954 = vadd.f32 %v1793, %v1953
      %v1955 = vpop.f32.mrf.mxu0
      %1956 = vmatprep.mubr.bf16.mxu0 %v898
      %1957 = vmatmul.mubr.bf16.gmra.mxu0 %v897
      %v1958 = vpop.f32.mrf.mxu0
      %v1959 = vadd.f32 %v1798, %v1958
      %v1960 = vpop.f32.mrf.mxu0
      %v1961 = vpop.f32.mrf.mxu0
      %v1962 = vadd.f32 %v1801, %v1961
      %v1963 = vpop.f32.mrf.mxu0
      %1964 = vdwg.mxu0
      %1965 = vmatprep.subr.bf16.mxu0 0
      %1966 = vmatpush1.bf16.msra.mxu0 %v1393
      %1967 = vmatprep.subr.bf16.mxu0 0
      %1968 = vmatpush1.bf16.msra.mxu0 %v1392
      %1969 = vmatprep.subr.bf16.mxu0 0
      %1970 = vmatpush1.bf16.msra.mxu0 %v1391
      %1971 = vmatprep.subr.bf16.mxu0 0
      %1972 = vmatpush1.bf16.msra.mxu0 %v1390
      %1973 = vmatprep.subr.bf16.mxu0 0
      %1974 = vmatpush1.bf16.msra.mxu0 %v1389
      %1975 = vmatprep.subr.bf16.mxu0 0
      %1976 = vmatpush1.bf16.msra.mxu0 %v1388
      %1977 = vmatprep.subr.bf16.mxu0 0
      %1978 = vmatpush1.bf16.msra.mxu0 %v1387
      %1979 = vmatprep.subr.bf16.mxu0 0
      %1980 = vmatpush1.bf16.msra.mxu0 %v1386
      %1981 = vmatprep.subr.bf16.mxu0 0
      %1982 = vmatpush2.bf16.msra.mxu0 %v1401
      %1983 = vmatprep.subr.bf16.mxu0 0
      %1984 = vmatpush2.bf16.msra.mxu0 %v1400
      %1985 = vmatprep.subr.bf16.mxu0 0
      %1986 = vmatpush2.bf16.msra.mxu0 %v1399
      %1987 = vmatprep.subr.bf16.mxu0 0
      %1988 = vmatpush2.bf16.msra.mxu0 %v1398
      %1989 = vmatprep.subr.bf16.mxu0 0
      %1990 = vmatpush2.bf16.msra.mxu0 %v1397
      %1991 = vmatprep.subr.bf16.mxu0 0
      %1992 = vmatpush2.bf16.msra.mxu0 %v1396
      %1993 = vmatprep.subr.bf16.mxu0 0
      %1994 = vmatpush2.bf16.msra.mxu0 %v1395
      %1995 = vmatprep.subr.bf16.mxu0 0
      %1996 = vmatpush2.bf16.msra.mxu0 %v1394
      %1997 = vmatprep.mubr.bf16.mxu0 %v855
      %1998 = vmatmul.mubr.bf16.gmra.mxu0 %v854
      %v1999 = vpop.f32.mrf.mxu0
      %v2000 = vadd.f32 %v1839, %v1999
      %v2001 = vpop.f32.mrf.mxu0
      %v2002 = vpop.f32.mrf.mxu0
      %v2003 = vadd.f32 %v1842, %v2002
      %v2004 = vpop.f32.mrf.mxu0
      %2005 = vmatprep.mubr.bf16.mxu0 %v858
      %2006 = vmatmul.mubr.bf16.gmra.mxu0 %v857
      %v2007 = vpop.f32.mrf.mxu0
      %v2008 = vadd.f32 %v1847, %v2007
      %v2009 = vpop.f32.mrf.mxu0
      %v2010 = vpop.f32.mrf.mxu0
      %v2011 = vadd.f32 %v1850, %v2010
      %v2012 = vpop.f32.mrf.mxu0
      %2013 = vmatprep.mubr.bf16.mxu0 %v861
      %2014 = vmatmul.mubr.bf16.gmra.mxu0 %v860
      %v2015 = vpop.f32.mrf.mxu0
      %v2016 = vadd.f32 %v1855, %v2015
      %v2017 = vpop.f32.mrf.mxu0
      %v2018 = vpop.f32.mrf.mxu0
      %v2019 = vadd.f32 %v1858, %v2018
      %v2020 = vpop.f32.mrf.mxu0
      %2021 = vmatprep.mubr.bf16.mxu0 %v864
      %2022 = vmatmul.mubr.bf16.gmra.mxu0 %v863
      %v2023 = vpop.f32.mrf.mxu0
      %v2024 = vadd.f32 %v1863, %v2023
      %v2025 = vpop.f32.mrf.mxu0
      %v2026 = vpop.f32.mrf.mxu0
      %v2027 = vadd.f32 %v1866, %v2026
      %v2028 = vpop.f32.mrf.mxu0
      %2029 = vmatprep.mubr.bf16.mxu0 %v867
      %2030 = vmatmul.mubr.bf16.gmra.mxu0 %v866
      %v2031 = vpop.f32.mrf.mxu0
      %v2032 = vadd.f32 %v1871, %v2031
      %v2033 = vpop.f32.mrf.mxu0
      %v2034 = vpop.f32.mrf.mxu0
      %v2035 = vadd.f32 %v1874, %v2034
      %v2036 = vpop.f32.mrf.mxu0
      %2037 = vmatprep.mubr.bf16.mxu0 %v870
      %2038 = vmatmul.mubr.bf16.gmra.mxu0 %v869
      %v2039 = vpop.f32.mrf.mxu0
      %v2040 = vadd.f32 %v1879, %v2039
      %v2041 = vpop.f32.mrf.mxu0
      %v2042 = vpop.f32.mrf.mxu0
      %v2043 = vadd.f32 %v1882, %v2042
      %v2044 = vpop.f32.mrf.mxu0
      %2045 = vmatprep.mubr.bf16.mxu0 %v873
      %2046 = vmatmul.mubr.bf16.gmra.mxu0 %v872
      %v2047 = vpop.f32.mrf.mxu0
      %v2048 = vadd.f32 %v1887, %v2047
      %v2049 = vpop.f32.mrf.mxu0
      %v2050 = vpop.f32.mrf.mxu0
      %v2051 = vadd.f32 %v1890, %v2050
      %v2052 = vpop.f32.mrf.mxu0
      %2053 = vmatprep.mubr.bf16.mxu0 %v876
      %2054 = vmatmul.mubr.bf16.gmra.mxu0 %v875
      %v2055 = vpop.f32.mrf.mxu0
      %v2056 = vadd.f32 %v1895, %v2055
      %v2057 = vpop.f32.mrf.mxu0
      %v2058 = vpop.f32.mrf.mxu0
      %v2059 = vadd.f32 %v1898, %v2058
      %v2060 = vpop.f32.mrf.mxu0
      %2061 = vmatprep.mubr.bf16.mxu0 %v879
      %2062 = vmatmul.mubr.bf16.gmra.mxu0 %v878
      %v2063 = vpop.f32.mrf.mxu0
      %v2064 = vadd.f32 %v1903, %v2063
      %v2065 = vpop.f32.mrf.mxu0
      %v2066 = vpop.f32.mrf.mxu0
      %v2067 = vadd.f32 %v1906, %v2066
      %v2068 = vpop.f32.mrf.mxu0
      %2069 = vmatprep.mubr.bf16.mxu0 %v882
      %2070 = vmatmul.mubr.bf16.gmra.mxu0 %v881
      %v2071 = vpop.f32.mrf.mxu0
      %v2072 = vadd.f32 %v1911, %v2071
      %v2073 = vpop.f32.mrf.mxu0
      %v2074 = vpop.f32.mrf.mxu0
      %v2075 = vadd.f32 %v1914, %v2074
      %v2076 = vpop.f32.mrf.mxu0
      %2077 = vmatprep.mubr.bf16.mxu0 %v885
      %2078 = vmatmul.mubr.bf16.gmra.mxu0 %v884
      %v2079 = vpop.f32.mrf.mxu0
      %v2080 = vadd.f32 %v1919, %v2079
      %v2081 = vpop.f32.mrf.mxu0
      %v2082 = vpop.f32.mrf.mxu0
      %v2083 = vadd.f32 %v1922, %v2082
      %v2084 = vpop.f32.mrf.mxu0
      %2085 = vmatprep.mubr.bf16.mxu0 %v888
      %2086 = vmatmul.mubr.bf16.gmra.mxu0 %v887
      %v2087 = vpop.f32.mrf.mxu0
      %v2088 = vadd.f32 %v1927, %v2087
      %v2089 = vpop.f32.mrf.mxu0
      %v2090 = vpop.f32.mrf.mxu0
      %v2091 = vadd.f32 %v1930, %v2090
      %v2092 = vpop.f32.mrf.mxu0
      %2093 = vmatprep.mubr.bf16.mxu0 %v891
      %2094 = vmatmul.mubr.bf16.gmra.mxu0 %v890
      %v2095 = vpop.f32.mrf.mxu0
      %v2096 = vadd.f32 %v1935, %v2095
      %v2097 = vpop.f32.mrf.mxu0
      %v2098 = vpop.f32.mrf.mxu0
      %v2099 = vadd.f32 %v1938, %v2098
      %v2100 = vpop.f32.mrf.mxu0
      %2101 = vmatprep.mubr.bf16.mxu0 %v894
      %2102 = vmatmul.mubr.bf16.gmra.mxu0 %v893
      %v2103 = vpop.f32.mrf.mxu0
      %v2104 = vadd.f32 %v1943, %v2103
      %v2105 = vpop.f32.mrf.mxu0
      %v2106 = vpop.f32.mrf.mxu0
      %v2107 = vadd.f32 %v1946, %v2106
      %v2108 = vpop.f32.mrf.mxu0
      %2109 = vmatprep.mubr.bf16.mxu0 %v897
      %2110 = vmatmul.mubr.bf16.gmra.mxu0 %v896
      %v2111 = vpop.f32.mrf.mxu0
      %v2112 = vadd.f32 %v1951, %v2111
      %v2113 = vpop.f32.mrf.mxu0
      %v2114 = vpop.f32.mrf.mxu0
      %v2115 = vadd.f32 %v1954, %v2114
      %v2116 = vpop.f32.mrf.mxu0
      %2117 = vmatprep.mubr.bf16.mxu0 %v849
      %2118 = vmatmul.mubr.bf16.gmra.mxu0 %v848
      %v2119 = vpop.f32.mrf.mxu0
      %v2120 = vadd.f32 %v1959, %v2119
      %v2121 = vpop.f32.mrf.mxu0
      %v2122 = vpop.f32.mrf.mxu0
      %v2123 = vadd.f32 %v1962, %v2122
      %v2124 = vpop.f32.mrf.mxu0
      %2125 = vdwg.mxu0
      %2126 = vmatprep.subr.bf16.mxu0 0
      %2127 = vmatpush1.bf16.msra.mxu0 %v1409
      %2128 = vmatprep.subr.bf16.mxu0 0
      %2129 = vmatpush1.bf16.msra.mxu0 %v1408
      %2130 = vmatprep.subr.bf16.mxu0 0
      %2131 = vmatpush1.bf16.msra.mxu0 %v1407
      %2132 = vmatprep.subr.bf16.mxu0 0
      %2133 = vmatpush1.bf16.msra.mxu0 %v1406
      %2134 = vmatprep.subr.bf16.mxu0 0
      %2135 = vmatpush1.bf16.msra.mxu0 %v1405
      %2136 = vmatprep.subr.bf16.mxu0 0
      %2137 = vmatpush1.bf16.msra.mxu0 %v1404
      %2138 = vmatprep.subr.bf16.mxu0 0
      %2139 = vmatpush1.bf16.msra.mxu0 %v1403
      %2140 = vmatprep.subr.bf16.mxu0 0
      %2141 = vmatpush1.bf16.msra.mxu0 %v1402
      %2142 = vmatprep.subr.bf16.mxu0 0
      %2143 = vmatpush2.bf16.msra.mxu0 0
      %2144 = vmatprep.subr.bf16.mxu0 0
      %2145 = vmatpush2.bf16.msra.mxu0 0
      %2146 = vmatprep.subr.bf16.mxu0 0
      %2147 = vmatpush2.bf16.msra.mxu0 0
      %2148 = vmatprep.subr.bf16.mxu0 0
      %2149 = vmatpush2.bf16.msra.mxu0 0
      %2150 = vmatprep.subr.bf16.mxu0 0
      %2151 = vmatpush2.bf16.msra.mxu0 0
      %2152 = vmatprep.subr.bf16.mxu0 0
      %2153 = vmatpush2.bf16.msra.mxu0 0
      %2154 = vmatprep.subr.bf16.mxu0 0
      %2155 = vmatpush2.bf16.msra.mxu0 0
      %2156 = vmatprep.subr.bf16.mxu0 0
      %2157 = vmatpush2.bf16.msra.mxu0 0
      %2158 = vmatprep.mubr.bf16.mxu0 0
      %2159 = vmatmul.mubr.bf16.gmra.mxu0 %v856
      %v2160 = vpop.f32.mrf.mxu0
      %v2161 = vadd.f32 %v2000, %v2160
      %v2162 = vpop.f32.mrf.mxu0
      %v2163 = vpop.f32.mrf.mxu0
      %v2164 = vadd.f32 %v2003, %v2163
      %v2165 = vpop.f32.mrf.mxu0
      %2166 = vmatprep.mubr.bf16.mxu0 0
      %2167 = vmatmul.mubr.bf16.gmra.mxu0 %v859
      %v2168 = vpop.f32.mrf.mxu0
      %v2169 = vadd.f32 %v2008, %v2168
      %v2170 = vpop.f32.mrf.mxu0
      %v2171 = vpop.f32.mrf.mxu0
      %v2172 = vadd.f32 %v2011, %v2171
      %v2173 = vpop.f32.mrf.mxu0
      %2174 = vmatprep.mubr.bf16.mxu0 0
      %2175 = vmatmul.mubr.bf16.gmra.mxu0 %v862
      %v2176 = vpop.f32.mrf.mxu0
      %v2177 = vadd.f32 %v2016, %v2176
      %v2178 = vpop.f32.mrf.mxu0
      %v2179 = vpop.f32.mrf.mxu0
      %v2180 = vadd.f32 %v2019, %v2179
      %v2181 = vpop.f32.mrf.mxu0
      %2182 = vmatprep.mubr.bf16.mxu0 0
      %2183 = vmatmul.mubr.bf16.gmra.mxu0 %v865
      %v2184 = vpop.f32.mrf.mxu0
      %v2185 = vadd.f32 %v2024, %v2184
      %v2186 = vpop.f32.mrf.mxu0
      %v2187 = vpop.f32.mrf.mxu0
      %v2188 = vadd.f32 %v2027, %v2187
      %v2189 = vpop.f32.mrf.mxu0
      %2190 = vmatprep.mubr.bf16.mxu0 0
      %2191 = vmatmul.mubr.bf16.gmra.mxu0 %v868
      %v2192 = vpop.f32.mrf.mxu0
      %v2193 = vadd.f32 %v2032, %v2192
      %v2194 = vpop.f32.mrf.mxu0
      %v2195 = vpop.f32.mrf.mxu0
      %v2196 = vadd.f32 %v2035, %v2195
      %v2197 = vpop.f32.mrf.mxu0
      %2198 = vmatprep.mubr.bf16.mxu0 0
      %2199 = vmatmul.mubr.bf16.gmra.mxu0 %v871
      %v2200 = vpop.f32.mrf.mxu0
      %v2201 = vadd.f32 %v2040, %v2200
      %v2202 = vpop.f32.mrf.mxu0
      %v2203 = vpop.f32.mrf.mxu0
      %v2204 = vadd.f32 %v2043, %v2203
      %v2205 = vpop.f32.mrf.mxu0
      %2206 = vmatprep.mubr.bf16.mxu0 0
      %2207 = vmatmul.mubr.bf16.gmra.mxu0 %v874
      %v2208 = vpop.f32.mrf.mxu0
      %v2209 = vadd.f32 %v2048, %v2208
      %v2210 = vpop.f32.mrf.mxu0
      %v2211 = vpop.f32.mrf.mxu0
      %v2212 = vadd.f32 %v2051, %v2211
      %v2213 = vpop.f32.mrf.mxu0
      %2214 = vmatprep.mubr.bf16.mxu0 0
      %2215 = vmatmul.mubr.bf16.gmra.mxu0 %v877
      %v2216 = vpop.f32.mrf.mxu0
      %v2217 = vadd.f32 %v2056, %v2216
      %v2218 = vpop.f32.mrf.mxu0
      %v2219 = vpop.f32.mrf.mxu0
      %v2220 = vadd.f32 %v2059, %v2219
      %v2221 = vpop.f32.mrf.mxu0
      %2222 = vmatprep.mubr.bf16.mxu0 0
      %2223 = vmatmul.mubr.bf16.gmra.mxu0 %v880
      %v2224 = vpop.f32.mrf.mxu0
      %v2225 = vadd.f32 %v2064, %v2224
      %v2226 = vpop.f32.mrf.mxu0
      %v2227 = vpop.f32.mrf.mxu0
      %v2228 = vadd.f32 %v2067, %v2227
      %v2229 = vpop.f32.mrf.mxu0
      %2230 = vmatprep.mubr.bf16.mxu0 0
      %2231 = vmatmul.mubr.bf16.gmra.mxu0 %v883
      %v2232 = vpop.f32.mrf.mxu0
      %v2233 = vadd.f32 %v2072, %v2232
      %v2234 = vpop.f32.mrf.mxu0
      %v2235 = vpop.f32.mrf.mxu0
      %v2236 = vadd.f32 %v2075, %v2235
      %v2237 = vpop.f32.mrf.mxu0
      %2238 = vmatprep.mubr.bf16.mxu0 0
      %2239 = vmatmul.mubr.bf16.gmra.mxu0 %v886
      %v2240 = vpop.f32.mrf.mxu0
      %v2241 = vadd.f32 %v2080, %v2240
      %v2242 = vpop.f32.mrf.mxu0
      %v2243 = vpop.f32.mrf.mxu0
      %v2244 = vadd.f32 %v2083, %v2243
      %v2245 = vpop.f32.mrf.mxu0
      %2246 = vmatprep.mubr.bf16.mxu0 0
      %2247 = vmatmul.mubr.bf16.gmra.mxu0 %v889
      %v2248 = vpop.f32.mrf.mxu0
      %v2249 = vadd.f32 %v2088, %v2248
      %v2250 = vpop.f32.mrf.mxu0
      %v2251 = vpop.f32.mrf.mxu0
      %v2252 = vadd.f32 %v2091, %v2251
      %v2253 = vpop.f32.mrf.mxu0
      %2254 = vmatprep.mubr.bf16.mxu0 0
      %2255 = vmatmul.mubr.bf16.gmra.mxu0 %v892
      %v2256 = vpop.f32.mrf.mxu0
      %v2257 = vadd.f32 %v2096, %v2256
      %v2258 = vpop.f32.mrf.mxu0
      %v2259 = vpop.f32.mrf.mxu0
      %v2260 = vadd.f32 %v2099, %v2259
      %v2261 = vpop.f32.mrf.mxu0
      %2262 = vmatprep.mubr.bf16.mxu0 0
      %2263 = vmatmul.mubr.bf16.gmra.mxu0 %v895
      %v2264 = vpop.f32.mrf.mxu0
      %v2265 = vadd.f32 %v2104, %v2264
      %v2266 = vpop.f32.mrf.mxu0
      %v2267 = vpop.f32.mrf.mxu0
      %v2268 = vadd.f32 %v2107, %v2267
      %v2269 = vpop.f32.mrf.mxu0
      %2270 = vmatprep.mubr.bf16.mxu0 0
      %2271 = vmatmul.mubr.bf16.gmra.mxu0 %v898
      %v2272 = vpop.f32.mrf.mxu0
      %v2273 = vadd.f32 %v2112, %v2272
      %v2274 = vpop.f32.mrf.mxu0
      %v2275 = vpop.f32.mrf.mxu0
      %v2276 = vadd.f32 %v2115, %v2275
      %v2277 = vpop.f32.mrf.mxu0
      %2278 = vmatprep.mubr.bf16.mxu0 0
      %2279 = vmatmul.mubr.bf16.gmra.mxu0 %v850
      %v2280 = vpop.f32.mrf.mxu0
      %v2281 = vadd.f32 %v2120, %v2280
      %v2282 = vpop.f32.mrf.mxu0
      %v2283 = vpop.f32.mrf.mxu0
      %v2284 = vadd.f32 %v2123, %v2283
      %v2285 = vpop.f32.mrf.mxu0
      %2286 = vdwg.mxu0
      %2287 = vst [vmem:[%s258] sm:$0xff] %v2161
      %2288 = vst [vmem:[%s258 + $0x8] sm:$0xff] %v2164
      %2289 = vst [vmem:[%s258 + $0x10] sm:$0xff] %v2169
      %2290 = vst [vmem:[%s258 + $0x18] sm:$0xff] %v2172
      %2291 = vst [vmem:[%s258 + $0x20] sm:$0xff] %v2177
      %2292 = vst [vmem:[%s258 + $0x28] sm:$0xff] %v2180
      %2293 = vst [vmem:[%s258 + $0x30] sm:$0xff] %v2185
      %2294 = vst [vmem:[%s258 + $0x38] sm:$0xff] %v2188
      %2295 = vst [vmem:[%s258 + $0x40] sm:$0xff] %v2193
      %2296 = vst [vmem:[%s258 + $0x48] sm:$0xff] %v2196
      %2297 = vst [vmem:[%s258 + $0x50] sm:$0xff] %v2201
      %2298 = vst [vmem:[%s258 + $0x58] sm:$0xff] %v2204
      %2299 = vst [vmem:[%s258 + $0x60] sm:$0xff] %v2209
      %2300 = vst [vmem:[%s258 + $0x68] sm:$0xff] %v2212
      %2301 = vst [vmem:[%s258 + $0x70] sm:$0xff] %v2217
      %2302 = vst [vmem:[%s258 + $0x78] sm:$0xff] %v2220
      %2303 = vst [vmem:[%s258 + $0x80] sm:$0xff] %v2225
      %2304 = vst [vmem:[%s258 + $0x88] sm:$0xff] %v2228
      %2305 = vst [vmem:[%s258 + $0x90] sm:$0xff] %v2233
      %2306 = vst [vmem:[%s258 + $0x98] sm:$0xff] %v2236
      %2307 = vst [vmem:[%s258 + $0xa0] sm:$0xff] %v2241
      %2308 = vst [vmem:[%s258 + $0xa8] sm:$0xff] %v2244
      %2309 = vst [vmem:[%s258 + $0xb0] sm:$0xff] %v2249
      %2310 = vst [vmem:[%s258 + $0xb8] sm:$0xff] %v2252
      %2311 = vst [vmem:[%s258 + $0xc0] sm:$0xff] %v2257
      %2312 = vst [vmem:[%s258 + $0xc8] sm:$0xff] %v2260
      %2313 = vst [vmem:[%s258 + $0xd0] sm:$0xff] %v2265
      %2314 = vst [vmem:[%s258 + $0xd8] sm:$0xff] %v2268
      %2315 = vst [vmem:[%s258 + $0xe0] sm:$0xff] %v2273
      %2316 = vst [vmem:[%s258 + $0xe8] sm:$0xff] %v2276
      %2317 = vst [vmem:[%s258 + $0xf0] sm:$0xff] %v2281
      %2318 = vst [vmem:[%s258 + $0xf8] sm:$0xff] %v2284
      %v2319 = vadd.f32 %v2161, %v2164
      %v2320 = vadd.f32 %v2319, %v2169
      %v2321 = vadd.f32 %v2320, %v2172
      %v2322 = vadd.f32 %v2321, %v2177
      %v2323 = vadd.f32 %v2322, %v2180
      %v2324 = vadd.f32 %v2323, %v2185
      %v2325 = vadd.f32 %v2324, %v2188
      %v2326 = vadd.f32 %v2325, %v2193
      %v2327 = vadd.f32 %v2326, %v2196
      %v2328 = vadd.f32 %v2327, %v2201
      %v2329 = vadd.f32 %v2328, %v2204
      %v2330 = vadd.f32 %v2329, %v2209
      %v2331 = vadd.f32 %v2330, %v2212
      %v2332 = vadd.f32 %v2331, %v2217
      %v2333 = vadd.f32 %v2332, %v2220
      %v2334 = vadd.f32 %v2333, %v2225
      %v2335 = vadd.f32 %v2334, %v2228
      %v2336 = vadd.f32 %v2335, %v2233
      %v2337 = vadd.f32 %v2336, %v2236
      %v2338 = vadd.f32 %v2337, %v2241
      %v2339 = vadd.f32 %v2338, %v2244
      %v2340 = vadd.f32 %v2339, %v2249
      %v2341 = vadd.f32 %v2340, %v2252
      %v2342 = vadd.f32 %v2341, %v2257
      %v2343 = vadd.f32 %v2342, %v2260
      %v2344 = vadd.f32 %v2343, %v2265
      %v2345 = vadd.f32 %v2344, %v2268
      %v2346 = vadd.f32 %v2345, %v2273
      %v2347 = vadd.f32 %v2346, %v2276
      %v2348 = vadd.f32 %v2347, %v2281
      %v2349 = vadd.f32 %v2348, %v2284
      %v2350 = vrot.slane %v2349, 4
      %v2351 = vadd.f32 %v2349, %v2350
      %v2352 = vrot.slane %v2351, 2
      %v2353 = vadd.f32 %v2351, %v2352
      %v2354 = vrot.slane %v2353, 1
      %v2355 = vadd.f32 %v2353, %v2354
      %v2356 = vmul.f32 %v2161, %v2161
      %v2357 = vmul.f32 %v2164, %v2164
      %v2358 = vmul.f32 %v2169, %v2169
      %v2359 = vmul.f32 %v2172, %v2172
      %v2360 = vmul.f32 %v2177, %v2177
      %v2361 = vmul.f32 %v2180, %v2180
      %v2362 = vmul.f32 %v2185, %v2185
      %v2363 = vmul.f32 %v2188, %v2188
      %v2364 = vmul.f32 %v2193, %v2193
      %v2365 = vmul.f32 %v2196, %v2196
      %v2366 = vmul.f32 %v2201, %v2201
      %v2367 = vmul.f32 %v2204, %v2204
      %v2368 = vmul.f32 %v2209, %v2209
      %v2369 = vmul.f32 %v2212, %v2212
      %v2370 = vmul.f32 %v2217, %v2217
      %v2371 = vmul.f32 %v2220, %v2220
      %v2372 = vmul.f32 %v2225, %v2225
      %v2373 = vmul.f32 %v2228, %v2228
      %v2374 = vmul.f32 %v2233, %v2233
      %v2375 = vmul.f32 %v2236, %v2236
      %v2376 = vmul.f32 %v2241, %v2241
      %v2377 = vmul.f32 %v2244, %v2244
      %v2378 = vmul.f32 %v2249, %v2249
      %v2379 = vmul.f32 %v2252, %v2252
      %v2380 = vmul.f32 %v2257, %v2257
      %v2381 = vmul.f32 %v2260, %v2260
      %v2382 = vmul.f32 %v2265, %v2265
      %v2383 = vmul.f32 %v2268, %v2268
      %v2384 = vmul.f32 %v2273, %v2273
      %v2385 = vmul.f32 %v2276, %v2276
      %v2386 = vmul.f32 %v2281, %v2281
      %v2387 = vmul.f32 %v2284, %v2284
      %v2388 = vadd.f32 %v2356, %v2357
      %v2389 = vadd.f32 %v2388, %v2358
      %v2390 = vadd.f32 %v2389, %v2359
      %v2391 = vadd.f32 %v2390, %v2360
      %v2392 = vadd.f32 %v2391, %v2361
      %v2393 = vadd.f32 %v2392, %v2362
      %v2394 = vadd.f32 %v2393, %v2363
      %v2395 = vadd.f32 %v2394, %v2364
      %v2396 = vadd.f32 %v2395, %v2365
      %v2397 = vadd.f32 %v2396, %v2366
      %v2398 = vadd.f32 %v2397, %v2367
      %v2399 = vadd.f32 %v2398, %v2368
      %v2400 = vadd.f32 %v2399, %v2369
      %v2401 = vadd.f32 %v2400, %v2370
      %v2402 = vadd.f32 %v2401, %v2371
      %v2403 = vadd.f32 %v2402, %v2372
      %v2404 = vadd.f32 %v2403, %v2373
      %v2405 = vadd.f32 %v2404, %v2374
      %v2406 = vadd.f32 %v2405, %v2375
      %v2407 = vadd.f32 %v2406, %v2376
      %v2408 = vadd.f32 %v2407, %v2377
      %v2409 = vadd.f32 %v2408, %v2378
      %v2410 = vadd.f32 %v2409, %v2379
      %v2411 = vadd.f32 %v2410, %v2380
      %v2412 = vadd.f32 %v2411, %v2381
      %v2413 = vadd.f32 %v2412, %v2382
      %v2414 = vadd.f32 %v2413, %v2383
      %v2415 = vadd.f32 %v2414, %v2384
      %v2416 = vadd.f32 %v2415, %v2385
      %v2417 = vadd.f32 %v2416, %v2386
      %v2418 = vadd.f32 %v2417, %v2387
      %v2419 = vrot.slane %v2418, 4
      %v2420 = vadd.f32 %v2418, %v2419
      %v2421 = vrot.slane %v2420, 2
      %v2422 = vadd.f32 %v2420, %v2421
      %v2423 = vrot.slane %v2422, 1
      %v2424 = vadd.f32 %v2422, %v2423
      %v2425 = vsel %vm439, %v2355, %v2424
      %2426 = vst [vmem:[%s262] sm:$0x3] %v2425
      %p2427 = scmp.lt.s32.totalorder %s18, 1
      %s2428 = scalar_select %p2427, %s18, 1
      %s2429 = smul.addr %s2428, 32
      %s2430 = smul.addr %s2429, 8
      %s2431 = scalar_lea.vmem %s5, %s2430
      %p2432 = scmp.lt.s32.totalorder %s18, 1
      %s2433 = scalar_select %p2432, %s18, 1
      %s2434 = smul.addr %s2433, 2
      %s2435 = scalar_lea.vmem %s6, %s2434
      // Predicated region
      $region41: #{block_forward.4} parent=39 // pred_check
        %p2436 = pneg %p146
      $region42: #{block_forward.4} parent=39 // pred_check_branch
        %2438 = sbr.rel (%p2436) target = $region44
      $region43: #{block_forward.4} parent=39 // pred_region
        _
      $region44: #{block_forward.4} parent=39 // pred_fallthru
        _
      // Predicated region
      $region45: #{block_forward.4} parent=39 // pred_check
        %p2439 = pneg %p172
      $region46: #{block_forward.4} parent=39 // pred_check_branch
        %2441 = sbr.rel (%p2439) target = $region48
      $region47: #{block_forward.4} parent=39 // pred_region
        _
      $region48: #{block_forward.4} parent=39 // pred_fallthru
        _
    $region40: #{block_forward.4} parent=5 // pred_fallthru
      _
    %p2442 = scmp.le.s32.totalorder 2, %s13
    // Predicated region
    $region49: #{block_forward.4} parent=5 // pred_check
      %p2443 = pneg %p2442
    $region50: #{block_forward.4} parent=5 // pred_check_branch
      %2445 = sbr.rel (%p2443) target = $region52
    $region51: #{block_forward.4} parent=5 // pred_region
      %s2446 = ssub.s32 %s13, 2
      // Predicated region
      $region53: #{block_forward.4} parent=51 // pred_check
        %p2447 = pneg %p152
      $region54: #{block_forward.4} parent=51 // pred_check_branch
        %2449 = sbr.rel (%p2447) target = $region56
      $region55: #{block_forward.4} parent=51 // pred_region
        %p2450 = scmp.lt.s32.totalorder %s19, 1
        %s2451 = scalar_select %p2450, %s19, 1
        %s2452 = smul.addr %s2451, 32
        %s2453 = smul.addr %s2452, 8
        %s2454 = scalar_lea.vmem %s5, %s2453
      $region56: #{block_forward.4} parent=51 // pred_fallthru
        _
      // Predicated region
      $region57: #{block_forward.4} parent=51 // pred_check
        %p2455 = pneg %p178
      $region58: #{block_forward.4} parent=51 // pred_check_branch
        %2457 = sbr.rel (%p2455) target = $region60
      $region59: #{block_forward.4} parent=51 // pred_region
        %p2458 = scmp.lt.s32.totalorder %s19, 1
        %s2459 = scalar_select %p2458, %s19, 1
        %s2460 = smul.addr %s2459, 2
        %s2461 = scalar_lea.vmem %s6, %s2460
      $region60: #{block_forward.4} parent=51 // pred_fallthru
        _
    $region52: #{block_forward.4} parent=5 // pred_fallthru
      _
  $region6: #{block_forward.4} parent=0 // loop_footer
    %s17 = sadd.s32 1, %s13
  $region7: #{block_forward.4} parent=0 // loop_footer_branch
    %12 = sbr.rel target = $region3
  $region8: #{block_forward.4} parent=0 // loop_exit
    _

</llo_original>
